<compile_context>
chip_gen: v5e
topology: v5e:2x2
jax: 0.10.0
libtpu: 0.0.40
codegen_flags: <defaults>
</compile_context>

<pallas_src>
import jax
import jax.numpy as jnp
import numpy as np
from jax import lax
from jax.experimental import pallas as pl
from jax.experimental.pallas import tpu as pltpu

_F32 = jnp.float32
_BF16 = jnp.bfloat16


def _silu(v):
    return v * jax.nn.sigmoid(v)


def _layernorm(v, g, b, eps=1e-5):
    mu = jnp.mean(v, axis=-1, keepdims=True)
    var = jnp.mean((v - mu) ** 2, axis=-1, keepdims=True)
    return (v - mu) / jnp.sqrt(var + eps) * g + b


def _mm_bf16(a, b):
    # Fast MXU path: bf16 inputs, f32 accumulation (no multi-pass f32 decomposition).
    return jnp.dot(a.astype(_BF16), b.astype(_BF16), preferred_element_type=_F32)


def _mm_f32(a, b):
    # Exact f32 path: reserved for the small, numerically sensitive invariant-branch dots.
    return jnp.dot(a, b, preferred_element_type=_F32, precision=lax.Precision.HIGHEST)


def _equivariant_block_kernel(
    # batched (one batch element per grid step)
    h_ref, x_ref, xt_ref, adj_ref, row_ref, col_ref, rowt_ref, ea_ref, nm_ref, em_ref,
    # per-layer GCL weights (stacked on leading L axis)
    eW1st_ref, eW1ea_ref, eb1_ref, eW2_ref, eb2_ref, aW_ref, ab_ref,
    nW1_ref, nb1_ref, nW2_ref, nb2_ref, lng_ref, lnb_ref,
    # shared message projection / norm weights
    mW1_ref, mb1_ref, mW2_ref, mb2_ref, mng_ref, mnb_ref,
    # outputs
    h_out_ref, x_out_ref,
):
    h0 = h_ref[0]            # (N, H) f32
    x0 = x_ref[0]            # (N, 3) f32
    xt = xt_ref[0]           # (3, N) f32
    adj = adj_ref[0]         # (N, N) f32 edge counts (precomputed in wrapper)
    row_i = row_ref[0]       # (E, 1) int32
    col_i = col_ref[0]       # (E, 1) int32
    row_t = rowt_ref[0]      # (1, E) int32
    ea = ea_ref[0]           # (E, H) bf16 (cast in wrapper, only feeds the MXU)
    nm = nm_ref[0]           # (N, 1) f32
    em = em_ref[0]           # (E, 1) f32

    N, H = h0.shape
    E = ea.shape[0]
    L = eW1st_ref.shape[0]

    # ---- 0/1 gather / scatter operators, built on-chip, stored as bf16 (exact) ----
    lane_n = lax.broadcasted_iota(jnp.int32, (E, N), 1)
    row_oh = jnp.where(lane_n == row_i, 1.0, 0.0).astype(_BF16)       # (E, N)
    col_oh = jnp.where(lane_n == col_i, 1.0, 0.0).astype(_BF16)       # (E, N)
    row_oh_t = jnp.where(
        lax.broadcasted_iota(jnp.int32, (N, E), 0) == row_t, 1.0, 0.0
    ).astype(_BF16)                                                   # (N, E) scatter-add

    # ---- loop-invariant pairwise geometry (hoisted, f32 VPU) ----
    d2 = jnp.zeros((N, N), _F32)
    for k in range(3):                                                # static (3 coords)
        dk = xt[k:k + 1, :] - x0[:, k:k + 1]                          # (N,N): x[j,k]-x[i,k]
        d2 = d2 + dk * dk
    dist = jnp.sqrt(d2)
    dist = dist / (jnp.sum(dist, axis=-1, keepdims=True) + 1.0)
    dist_m = dist * nm                                                # row mask folded in once

    mW1 = mW1_ref[...]; mb1 = mb1_ref[...]
    mW2 = mW2_ref[...]; mb2 = mb2_ref[...]
    mng = mng_ref[...]; mnb = mnb_ref[...]

    def layer(l, h_prev):
        eW1st = eW1st_ref[l]                      # (H, 2H) bf16: [W_src | W_tgt]
        eW1ea = eW1ea_ref[l]                      # (H, H)  bf16
        eb1 = eb1_ref[l]; eW2 = eW2_ref[l]; eb2 = eb2_ref[l]
        aW = aW_ref[l];   ab = ab_ref[l]          # aW pre-transposed to (1, H), f32
        nW1 = nW1_ref[l]; nb1 = nb1_ref[l]        # (2H, H) bf16
        nW2 = nW2_ref[l]; nb2 = nb2_ref[l]
        lng = lng_ref[l]; lnb = lnb_ref[l]

        # ---------- GCL edge model: one fused projection on nodes, then gathers ----------
        hW = _mm_bf16(h_prev, eW1st)                                  # (N, 2H)
        hWs = hW[:, 0:H]
        hWt = hW[:, H:2 * H]
        gathered = _mm_bf16(row_oh, hWs) + _mm_bf16(col_oh, hWt)      # (E, H)
        pre1 = em * gathered + _mm_bf16(ea, eW1ea) + eb1              # (E, H)
        mij = _silu(_mm_bf16(_silu(pre1), eW2) + eb2)
        # attention head (H -> 1) as a VPU/XLU reduction, not a 1-wide MXU matmul
        att = jax.nn.sigmoid(jnp.sum(mij * aW, axis=-1, keepdims=True) + ab)
        ef = mij * att * em                                           # (E, H)

        # ---------- GCL node model: scatter-add + single fused (N,2H)@(2H,H) dot ----------
        agg = _mm_bf16(row_oh_t, ef)                                  # (N, H)
        pre2 = _mm_bf16(jnp.concatenate([h_prev, agg], axis=-1), nW1) + nb1
        nout = _mm_bf16(_silu(pre2), nW2) + nb2
        h_gcl = (h_prev + nout) * nm

        # ---------- invariant update (exact f32: feeds a low-variance LayerNorm) ----------
        hm = h_prev * nm
        proj = _mm_f32(_silu(_mm_f32(hm, mW1) + mb1), mW2) + mb2
        msg = _mm_f32(dist_m, proj * nm)          # == nm_i * dist_ij * nm_j * proj_j
        inv = hm + _layernorm(msg, mng, mnb)

        return _layernorm(h_gcl + inv, lng, lnb) * nm

    # layer() already applies node_mask, so no extra `* nm` on the output.
    h_out_ref[0] = lax.fori_loop(0, L, layer, h0)

    # ---------- equivariant coordinate update: pure VPU/XLU, f32-exact ----------
    # x_i += sum_j adj_ij * (x_i - x_j) / ((sqrt(d2_ij+eps)+1) * (d2_ij+eps)), eps=1e-8
    w = adj / ((jnp.sqrt(d2 + 1e-8) + 1.0) * (d2 + 1e-8))             # (N, N)
    for k in range(3):                                                # static (3 coords)
        dk = xt[k:k + 1, :] - x0[:, k:k + 1]                          # x[j,k]-x[i,k]
        upd = jnp.sum(w * dk, axis=-1, keepdims=True)                 # (N, 1)
        x_out_ref[0, :, k:k + 1] = (x0[:, k:k + 1] - upd) * nm


def _vmem_limit_bytes():
    # Raise the scoped-VMEM default (16 MiB v5e / 32 MiB v6e+v7x) while staying well
    # below physical capacity (128 MiB v5e/v6e, 64 MiB v7x).
    try:
        cap = getattr(pltpu.get_tpu_info(), "vmem_capacity_bytes", None)
    except Exception:
        cap = None
    if not cap:
        return 48 * 1024 * 1024                   # safe on every generation
    return int(min(cap * 3 // 4, 100 * 1024 * 1024))


def equivariant_block_forward(h, x, edge_index, node_mask, edge_mask, edge_attr, params):
    B, N, H = h.shape
    E = edge_index.shape[1]

    ei = edge_index.astype(jnp.int32)
    row = ei[..., 0]                              # (B, E)
    col = ei[..., 1]                              # (B, E)
    row_idx = row[..., None]                      # (B, E, 1)
    col_idx = col[..., None]                      # (B, E, 1)
    row_idx_t = row[:, None, :]                   # (B, 1, E)
    xt = jnp.swapaxes(x, 1, 2)                    # (B, 3, N)

    # adjacency (edge-count) matrix via an XLA scatter-add: replaces the O(E*N^2)
    # in-kernel one-hot matmul for the coordinate update.
    bidx = jnp.arange(B)[:, None]
    adj = jnp.zeros((B, N, N), jnp.float32).at[bidx, row, col].add(1.0)

    # weight prep: fuse source/target halves of eW1, ship MXU-fed weights as bf16.
    eW1 = params["eW1"]                           # (L, 3H, H)
    eW1_st = jnp.concatenate([eW1[:, 0:H, :], eW1[:, H:2 * H, :]], axis=-1).astype(_BF16)
    eW1_ea = eW1[:, 2 * H:3 * H, :].astype(_BF16)
    eW2 = params["eW2"].astype(_BF16)
    nW1 = params["nW1"].astype(_BF16)             # (L, 2H, H)
    nW2 = params["nW2"].astype(_BF16)
    aW_row = jnp.swapaxes(params["aW"], 1, 2)     # (L, 1, H) f32 (VPU reduction)
    ea_bf = edge_attr.astype(_BF16)               # only feeds the MXU -> half the DMA bytes

    def batched(shape):
        nd = len(shape)
        return pl.BlockSpec((1,) + tuple(shape[1:]),
                            lambda b, nd=nd: (b,) + (0,) * (nd - 1))

    def shared(shape):
        nd = len(shape)
        return pl.BlockSpec(tuple(shape), lambda b, nd=nd: (0,) * nd)

    inputs = [
        # batched per-grid-step inputs
        h, x, xt, adj, row_idx, col_idx, row_idx_t, ea_bf, node_mask, edge_mask,
        # stacked per-layer GCL weights
        eW1_st, eW1_ea, params["eb1"], eW2, params["eb2"], aW_row, params["ab"],
        nW1, params["nb1"], nW2, params["nb2"], params["lng"], params["lnb"],
        # shared message projection / norm weights (kept f32: exact path)
        params["mW1"], params["mb1"], params["mW2"], params["mb2"],
        params["mng"], params["mnb"],
    ]
    n_batched = 10
    in_specs = ([batched(a.shape) for a in inputs[:n_batched]]
                + [shared(a.shape) for a in inputs[n_batched:]])

    out_shape = (jax.ShapeDtypeStruct((B, N, H), jnp.float32),
                 jax.ShapeDtypeStruct((B, N, 3), jnp.float32))
    out_specs = [batched((B, N, H)), batched((B, N, 3))]

    h_out, x_out = pl.pallas_call(
        _equivariant_block_kernel,
        out_shape=out_shape,
        grid_spec=pltpu.PrefetchScalarGridSpec(
            num_scalar_prefetch=0,
            grid=(B,),                            # keep B >= 2 so v7x's 2nd TC is used
            in_specs=in_specs,
            out_specs=out_specs,
        ),
        compiler_params=pltpu.CompilerParams(
            dimension_semantics=("parallel",),
            vmem_limit_bytes=_vmem_limit_bytes(),
        ),
    )(*inputs)
    return h_out, x_out


# ---------------------- pure-JAX reference (torch semantics, full f32) ----------------------
def reference_forward(h, x, edge_index, node_mask, edge_mask, edge_attr, params):
    B, N, H = h.shape
    row = edge_index[..., 0]
    col = edge_index[..., 1]
    bidx = jnp.arange(B)[:, None]

    def silu(v):
        return v * jax.nn.sigmoid(v)

    def ln(v, g, b, eps=1e-5):
        mu = v.mean(-1, keepdims=True)
        var = ((v - mu) ** 2).mean(-1, keepdims=True)
        return (v - mu) / jnp.sqrt(var + eps) * g + b

    delta = x[:, None, :, :] - x[:, :, None, :]
    dist = jnp.sqrt(jnp.sum(delta ** 2, -1))
    dist = dist / (jnp.sum(dist, -1, keepdims=True) + 1.0)

    L = params["eW1"].shape[0]
    h_prev = h
    for l in range(L):
        src = h_prev[bidx, row] * edge_mask
        tgt = h_prev[bidx, col] * edge_mask
        eij = jnp.concatenate([src, tgt, edge_attr], axis=-1)
        m1 = silu(eij @ params["eW1"][l] + params["eb1"][l])
        mij = silu(m1 @ params["eW2"][l] + params["eb2"][l])
        att = jax.nn.sigmoid(mij @ params["aW"][l] + params["ab"][l])
        ef = mij * att * edge_mask
        agg = jnp.zeros((B, N, H), h.dtype).at[bidx, row].add(ef)
        nin = jnp.concatenate([h_prev, agg], axis=-1)
        nout = silu(nin @ params["nW1"][l] + params["nb1"][l]) @ params["nW2"][l] + params["nb2"][l]
        h_gcl = (h_prev + nout) * node_mask

        hm = h_prev * node_mask
        dmask = node_mask * jnp.swapaxes(node_mask, 1, 2)
        dm = dist * dmask
        proj = silu(hm @ params["mW1"] + params["mb1"]) @ params["mW2"] + params["mb2"]
        msg = jnp.einsum("bij,bjh->bih", dm, proj)
        inv = hm + ln(msg, params["mng"], params["mnb"])

        h_prev = ln(h_gcl + inv, params["lng"][l], params["lnb"][l]) * node_mask
    h_out = h_prev * node_mask

    xr = x[bidx, row]
    xc = x[bidx, col]
    cd = xr - xc
    radial = jnp.sum(cd ** 2, -1, keepdims=True)
    cd = cd / (jnp.sqrt(radial + 1e-8) + 1.0)
    ncd = cd / (radial + 1e-8)
    x_out = x.at[bidx, row].add(ncd) * node_mask
    return h_out, x_out


def init_params(key, H, L):
    ks = iter(jax.random.split(key, 20))

    def W(shape):
        return jax.random.normal(next(ks), shape, jnp.float32) * 0.1

    return {
        "eW1": W((L, 3 * H, H)), "eb1": W((L, 1, H)) * 0.1,
        "eW2": W((L, H, H)),     "eb2": W((L, 1, H)) * 0.1,
        "aW":  W((L, H, 1)),     "ab":  W((L, 1, 1)) * 0.1,
        "nW1": W((L, 2 * H, H)), "nb1": W((L, 1, H)) * 0.1,
        "nW2": W((L, H, H)),     "nb2": W((L, 1, H)) * 0.1,
        "lng": jnp.ones((L, 1, H), jnp.float32),
        "lnb": jnp.zeros((L, 1, H), jnp.float32),
        "mW1": W((H, H)), "mb1": W((1, H)) * 0.1,
        "mW2": W((H, H)), "mb2": W((1, H)) * 0.1,
        "mng": jnp.ones((1, H), jnp.float32),
        "mnb": jnp.zeros((1, H), jnp.float32),
    }


if __name__ == "__main__":
    B, N, H, L = 2, 8, 32, 2
    key = jax.random.PRNGKey(0)
    k_h, k_x, k_e, k_p = jax.random.split(key, 4)

    h = jax.random.normal(k_h, (B, N, H), jnp.float32)
    x = jax.random.normal(k_x, (B, N, 3), jnp.float32)

    pairs = np.array([(i, j) for i in range(N) for j in range(N) if i != j], np.int32)
    E = pairs.shape[0]                       # fully-connected, no self-loops -> 56
    edge_index = jnp.asarray(np.broadcast_to(pairs[None], (B, E, 2)))
    edge_attr = jax.random.normal(k_e, (B, E, H), jnp.float32)

    node_mask = jnp.ones((B, N, 1), jnp.float32).at[1, N - 1, 0].set(0.0)
    bidx = jnp.arange(B)[:, None]
    row = edge_index[..., 0]
    col = edge_index[..., 1]
    edge_mask = node_mask[bidx, row] * node_mask[bidx, col]   # (B, E, 1)

    params = init_params(k_p, H, L)

    h_out, x_out = jax.block_until_ready(
        equivariant_block_forward(h, x, edge_index, node_mask, edge_mask, edge_attr, params))

    # Reference at full f32 matmul precision (torch semantics).
    with jax.default_matmul_precision("highest"):
        h_ref, x_ref = reference_forward(h, x, edge_index, node_mask, edge_mask, edge_attr, params)
        h_ref, x_ref = jax.block_until_ready((h_ref, x_ref))

    # h goes through bf16-input MXU matmuls (expected worst-case deviation vs the f32
    # reference is ~1e-2 at these scales); x is computed entirely in f32 on the VPU.
    np.testing.assert_allclose(np.asarray(h_out), np.asarray(h_ref), rtol=2e-2, atol=2e-2)
    np.testing.assert_allclose(np.asarray(x_out), np.asarray(x_ref), rtol=2e-3, atol=2e-3)

    print("KERNEL_OK")
</pallas_src>

<mosaic_0001>
module attributes {stable_mosaic.version = 11 : i64} {
  func.func @_equivariant_block_kernel(%arg0: i32, %arg1: memref<1x8x32xf32, #tpu.memory_space<vmem>>, %arg2: memref<1x8x3xf32, #tpu.memory_space<vmem>>, %arg3: memref<1x3x8xf32, #tpu.memory_space<vmem>>, %arg4: memref<1x8x8xf32, #tpu.memory_space<vmem>>, %arg5: memref<1x56x1xi32, #tpu.memory_space<vmem>>, %arg6: memref<1x56x1xi32, #tpu.memory_space<vmem>>, %arg7: memref<1x1x56xi32, #tpu.memory_space<vmem>>, %arg8: memref<1x56x32xbf16, #tpu.memory_space<vmem>>, %arg9: memref<1x8x1xf32, #tpu.memory_space<vmem>>, %arg10: memref<1x56x1xf32, #tpu.memory_space<vmem>>, %arg11: memref<2x32x64xbf16, #tpu.memory_space<vmem>>, %arg12: memref<2x32x32xbf16, #tpu.memory_space<vmem>>, %arg13: memref<2x1x32xf32, #tpu.memory_space<vmem>>, %arg14: memref<2x32x32xbf16, #tpu.memory_space<vmem>>, %arg15: memref<2x1x32xf32, #tpu.memory_space<vmem>>, %arg16: memref<2x1x32xf32, #tpu.memory_space<vmem>>, %arg17: memref<2x1x1xf32, #tpu.memory_space<vmem>>, %arg18: memref<2x64x32xbf16, #tpu.memory_space<vmem>>, %arg19: memref<2x1x32xf32, #tpu.memory_space<vmem>>, %arg20: memref<2x32x32xbf16, #tpu.memory_space<vmem>>, %arg21: memref<2x1x32xf32, #tpu.memory_space<vmem>>, %arg22: memref<2x1x32xf32, #tpu.memory_space<vmem>>, %arg23: memref<2x1x32xf32, #tpu.memory_space<vmem>>, %arg24: memref<32x32xf32, #tpu.memory_space<vmem>>, %arg25: memref<1x32xf32, #tpu.memory_space<vmem>>, %arg26: memref<32x32xf32, #tpu.memory_space<vmem>>, %arg27: memref<1x32xf32, #tpu.memory_space<vmem>>, %arg28: memref<1x32xf32, #tpu.memory_space<vmem>>, %arg29: memref<1x32xf32, #tpu.memory_space<vmem>>, %arg30: memref<1x8x32xf32, #tpu.memory_space<vmem>>, %arg31: memref<1x8x3xf32, #tpu.memory_space<vmem>>) attributes {dimension_semantics = [#tpu.dimension_semantics<parallel>], iteration_bounds = array<i64: 2>, scalar_prefetch = 0 : i64, scratch_operands = 0 : i64, tpu.core_type = #tpu.core_type<tc>, window_params = [{transform_indices = @transform_0, window_bounds = array<i64: 1, 8, 32>}, {transform_indices = @transform_1, window_bounds = array<i64: 1, 8, 3>}, {transform_indices = @transform_2, window_bounds = array<i64: 1, 3, 8>}, {transform_indices = @transform_3, window_bounds = array<i64: 1, 8, 8>}, {transform_indices = @transform_4, window_bounds = array<i64: 1, 56, 1>}, {transform_indices = @transform_5, window_bounds = array<i64: 1, 56, 1>}, {transform_indices = @transform_6, window_bounds = array<i64: 1, 1, 56>}, {transform_indices = @transform_7, window_bounds = array<i64: 1, 56, 32>}, {transform_indices = @transform_8, window_bounds = array<i64: 1, 8, 1>}, {transform_indices = @transform_9, window_bounds = array<i64: 1, 56, 1>}, {pipeline_mode = #tpu.pipeline_mode<synchronous>, transform_indices = @transform_10, window_bounds = array<i64: 2, 32, 64>}, {pipeline_mode = #tpu.pipeline_mode<synchronous>, transform_indices = @transform_11, window_bounds = array<i64: 2, 32, 32>}, {pipeline_mode = #tpu.pipeline_mode<synchronous>, transform_indices = @transform_12, window_bounds = array<i64: 2, 1, 32>}, {pipeline_mode = #tpu.pipeline_mode<synchronous>, transform_indices = @transform_13, window_bounds = array<i64: 2, 32, 32>}, {pipeline_mode = #tpu.pipeline_mode<synchronous>, transform_indices = @transform_14, window_bounds = array<i64: 2, 1, 32>}, {pipeline_mode = #tpu.pipeline_mode<synchronous>, transform_indices = @transform_15, window_bounds = array<i64: 2, 1, 32>}, {pipeline_mode = #tpu.pipeline_mode<synchronous>, transform_indices = @transform_16, window_bounds = array<i64: 2, 1, 1>}, {pipeline_mode = #tpu.pipeline_mode<synchronous>, transform_indices = @transform_17, window_bounds = array<i64: 2, 64, 32>}, {pipeline_mode = #tpu.pipeline_mode<synchronous>, transform_indices = @transform_18, window_bounds = array<i64: 2, 1, 32>}, {pipeline_mode = #tpu.pipeline_mode<synchronous>, transform_indices = @transform_19, window_bounds = array<i64: 2, 32, 32>}, {pipeline_mode = #tpu.pipeline_mode<synchronous>, transform_indices = @transform_20, window_bounds = array<i64: 2, 1, 32>}, {pipeline_mode = #tpu.pipeline_mode<synchronous>, transform_indices = @transform_21, window_bounds = array<i64: 2, 1, 32>}, {pipeline_mode = #tpu.pipeline_mode<synchronous>, transform_indices = @transform_22, window_bounds = array<i64: 2, 1, 32>}, {pipeline_mode = #tpu.pipeline_mode<synchronous>, transform_indices = @transform_23, window_bounds = array<i64: 32, 32>}, {pipeline_mode = #tpu.pipeline_mode<synchronous>, transform_indices = @transform_24, window_bounds = array<i64: 1, 32>}, {pipeline_mode = #tpu.pipeline_mode<synchronous>, transform_indices = @transform_25, window_bounds = array<i64: 32, 32>}, {pipeline_mode = #tpu.pipeline_mode<synchronous>, transform_indices = @transform_26, window_bounds = array<i64: 1, 32>}, {pipeline_mode = #tpu.pipeline_mode<synchronous>, transform_indices = @transform_27, window_bounds = array<i64: 1, 32>}, {pipeline_mode = #tpu.pipeline_mode<synchronous>, transform_indices = @transform_28, window_bounds = array<i64: 1, 32>}, {transform_indices = @transform_29, window_bounds = array<i64: 1, 8, 32>}, {transform_indices = @transform_30, window_bounds = array<i64: 1, 8, 3>}]} {
    %c0 = arith.constant 0 : index
    %c0_0 = arith.constant 0 : index
    %c0_1 = arith.constant 0 : index
    %0 = vector.load %arg1[%c0, %c0_0, %c0_1] : memref<1x8x32xf32, #tpu.memory_space<vmem>>, vector<1x8x32xf32>
    %1 = vector.shape_cast %0 : vector<1x8x32xf32> to vector<8x32xf32>
    %c0_2 = arith.constant 0 : index
    %c0_3 = arith.constant 0 : index
    %c0_4 = arith.constant 0 : index
    %2 = vector.load %arg2[%c0_2, %c0_3, %c0_4] : memref<1x8x3xf32, #tpu.memory_space<vmem>>, vector<1x8x3xf32>
    %3 = vector.shape_cast %2 : vector<1x8x3xf32> to vector<8x3xf32>
    %c0_5 = arith.constant 0 : index
    %c0_6 = arith.constant 0 : index
    %c0_7 = arith.constant 0 : index
    %4 = vector.load %arg3[%c0_5, %c0_6, %c0_7] : memref<1x3x8xf32, #tpu.memory_space<vmem>>, vector<1x3x8xf32>
    %5 = vector.shape_cast %4 : vector<1x3x8xf32> to vector<3x8xf32>
    %c0_8 = arith.constant 0 : index
    %c0_9 = arith.constant 0 : index
    %c0_10 = arith.constant 0 : index
    %6 = vector.load %arg4[%c0_8, %c0_9, %c0_10] : memref<1x8x8xf32, #tpu.memory_space<vmem>>, vector<1x8x8xf32>
    %7 = vector.shape_cast %6 : vector<1x8x8xf32> to vector<8x8xf32>
    %c0_11 = arith.constant 0 : index
    %c0_12 = arith.constant 0 : index
    %c0_13 = arith.constant 0 : index
    %8 = vector.load %arg5[%c0_11, %c0_12, %c0_13] : memref<1x56x1xi32, #tpu.memory_space<vmem>>, vector<1x56x1xi32>
    %9 = vector.shape_cast %8 : vector<1x56x1xi32> to vector<56x1xi32>
    %c0_14 = arith.constant 0 : index
    %c0_15 = arith.constant 0 : index
    %c0_16 = arith.constant 0 : index
    %10 = vector.load %arg6[%c0_14, %c0_15, %c0_16] : memref<1x56x1xi32, #tpu.memory_space<vmem>>, vector<1x56x1xi32>
    %11 = vector.shape_cast %10 : vector<1x56x1xi32> to vector<56x1xi32>
    %c0_17 = arith.constant 0 : index
    %c0_18 = arith.constant 0 : index
    %c0_19 = arith.constant 0 : index
    %12 = vector.load %arg7[%c0_17, %c0_18, %c0_19] : memref<1x1x56xi32, #tpu.memory_space<vmem>>, vector<1x1x56xi32>
    %13 = vector.shape_cast %12 : vector<1x1x56xi32> to vector<1x56xi32>
    %c0_20 = arith.constant 0 : index
    %c0_21 = arith.constant 0 : index
    %c0_22 = arith.constant 0 : index
    %14 = vector.load %arg8[%c0_20, %c0_21, %c0_22] : memref<1x56x32xbf16, #tpu.memory_space<vmem>>, vector<1x56x32xbf16>
    %15 = vector.shape_cast %14 : vector<1x56x32xbf16> to vector<56x32xbf16>
    %c0_23 = arith.constant 0 : index
    %c0_24 = arith.constant 0 : index
    %c0_25 = arith.constant 0 : index
    %16 = vector.load %arg9[%c0_23, %c0_24, %c0_25] : memref<1x8x1xf32, #tpu.memory_space<vmem>>, vector<1x8x1xf32>
    %17 = vector.shape_cast %16 : vector<1x8x1xf32> to vector<8x1xf32>
    %c0_26 = arith.constant 0 : index
    %c0_27 = arith.constant 0 : index
    %c0_28 = arith.constant 0 : index
    %18 = vector.load %arg10[%c0_26, %c0_27, %c0_28] : memref<1x56x1xf32, #tpu.memory_space<vmem>>, vector<1x56x1xf32>
    %19 = vector.shape_cast %18 : vector<1x56x1xf32> to vector<56x1xf32>
    %20 = tpu.iota {dimensions = array<i32: 1>} : vector<56x8xi32>
    %21 = vector.broadcast %9 : vector<56x1xi32> to vector<56x8xi32>
    %22 = arith.cmpi eq, %20, %21 : vector<56x8xi32>
    %cst = arith.constant 1.000000e+00 : f32
    %cst_29 = arith.constant 0.000000e+00 : f32
    %23 = vector.broadcast %cst : f32 to vector<56x8xf32>
    %24 = vector.broadcast %cst_29 : f32 to vector<56x8xf32>
    %25 = arith.select %22, %23, %24 : vector<56x8xi1>, vector<56x8xf32>
    %26 = arith.truncf %25 : vector<56x8xf32> to vector<56x8xbf16>
    %27 = vector.broadcast %11 : vector<56x1xi32> to vector<56x8xi32>
    %28 = arith.cmpi eq, %20, %27 : vector<56x8xi32>
    %cst_30 = arith.constant 1.000000e+00 : f32
    %cst_31 = arith.constant 0.000000e+00 : f32
    %29 = vector.broadcast %cst_30 : f32 to vector<56x8xf32>
    %30 = vector.broadcast %cst_31 : f32 to vector<56x8xf32>
    %31 = arith.select %28, %29, %30 : vector<56x8xi1>, vector<56x8xf32>
    %32 = arith.truncf %31 : vector<56x8xf32> to vector<56x8xbf16>
    %33 = tpu.iota {dimensions = array<i32: 0>} : vector<8x56xi32>
    %34 = vector.broadcast %13 : vector<1x56xi32> to vector<8x56xi32>
    %35 = arith.cmpi eq, %33, %34 : vector<8x56xi32>
    %cst_32 = arith.constant 1.000000e+00 : f32
    %cst_33 = arith.constant 0.000000e+00 : f32
    %36 = vector.broadcast %cst_32 : f32 to vector<8x56xf32>
    %37 = vector.broadcast %cst_33 : f32 to vector<8x56xf32>
    %38 = arith.select %35, %36, %37 : vector<8x56xi1>, vector<8x56xf32>
    %39 = arith.truncf %38 : vector<8x56xf32> to vector<8x56xbf16>
    %cst_34 = arith.constant 0.000000e+00 : f32
    %40 = vector.broadcast %cst_34 : f32 to vector<8x8xf32>
    %41 = vector.extract_strided_slice %5 {offsets = [0, 0], sizes = [1, 8], strides = [1, 1]} : vector<3x8xf32> to vector<1x8xf32>
    %42 = vector.extract_strided_slice %3 {offsets = [0, 0], sizes = [8, 1], strides = [1, 1]} : vector<8x3xf32> to vector<8x1xf32>
    %43 = vector.broadcast %41 : vector<1x8xf32> to vector<8x8xf32>
    %44 = vector.broadcast %42 : vector<8x1xf32> to vector<8x8xf32>
    %45 = arith.subf %43, %44 : vector<8x8xf32>
    %46 = arith.mulf %45, %45 : vector<8x8xf32>
    %47 = arith.addf %40, %46 : vector<8x8xf32>
    %48 = vector.extract_strided_slice %5 {offsets = [1, 0], sizes = [1, 8], strides = [1, 1]} : vector<3x8xf32> to vector<1x8xf32>
    %49 = vector.extract_strided_slice %3 {offsets = [0, 1], sizes = [8, 1], strides = [1, 1]} : vector<8x3xf32> to vector<8x1xf32>
    %50 = vector.broadcast %48 : vector<1x8xf32> to vector<8x8xf32>
    %51 = vector.broadcast %49 : vector<8x1xf32> to vector<8x8xf32>
    %52 = arith.subf %50, %51 : vector<8x8xf32>
    %53 = arith.mulf %52, %52 : vector<8x8xf32>
    %54 = arith.addf %47, %53 : vector<8x8xf32>
    %55 = vector.extract_strided_slice %5 {offsets = [2, 0], sizes = [1, 8], strides = [1, 1]} : vector<3x8xf32> to vector<1x8xf32>
    %56 = vector.extract_strided_slice %3 {offsets = [0, 2], sizes = [8, 1], strides = [1, 1]} : vector<8x3xf32> to vector<8x1xf32>
    %57 = vector.broadcast %55 : vector<1x8xf32> to vector<8x8xf32>
    %58 = vector.broadcast %56 : vector<8x1xf32> to vector<8x8xf32>
    %59 = arith.subf %57, %58 : vector<8x8xf32>
    %60 = arith.mulf %59, %59 : vector<8x8xf32>
    %61 = arith.addf %54, %60 : vector<8x8xf32>
    %62 = math.sqrt %61 : vector<8x8xf32>
    %cst_35 = arith.constant dense<0.000000e+00> : vector<8xf32>
    %63 = vector.multi_reduction <add>, %62, %cst_35 [1] : vector<8x8xf32> to vector<8xf32>
    %64 = vector.shape_cast %63 : vector<8xf32> to vector<8x1xf32>
    %cst_36 = arith.constant 1.000000e+00 : f32
    %65 = vector.broadcast %cst_36 : f32 to vector<8x1xf32>
    %66 = arith.addf %64, %65 : vector<8x1xf32>
    %67 = vector.broadcast %66 : vector<8x1xf32> to vector<8x8xf32>
    %68 = arith.divf %62, %67 : vector<8x8xf32>
    %69 = vector.broadcast %17 : vector<8x1xf32> to vector<8x8xf32>
    %70 = arith.mulf %68, %69 : vector<8x8xf32>
    %c0_37 = arith.constant 0 : index
    %c0_38 = arith.constant 0 : index
    %71 = vector.load %arg24[%c0_37, %c0_38] : memref<32x32xf32, #tpu.memory_space<vmem>>, vector<32x32xf32>
    %c0_39 = arith.constant 0 : index
    %c0_40 = arith.constant 0 : index
    %72 = vector.load %arg25[%c0_39, %c0_40] : memref<1x32xf32, #tpu.memory_space<vmem>>, vector<1x32xf32>
    %c0_41 = arith.constant 0 : index
    %c0_42 = arith.constant 0 : index
    %73 = vector.load %arg26[%c0_41, %c0_42] : memref<32x32xf32, #tpu.memory_space<vmem>>, vector<32x32xf32>
    %c0_43 = arith.constant 0 : index
    %c0_44 = arith.constant 0 : index
    %74 = vector.load %arg27[%c0_43, %c0_44] : memref<1x32xf32, #tpu.memory_space<vmem>>, vector<1x32xf32>
    %c0_45 = arith.constant 0 : index
    %c0_46 = arith.constant 0 : index
    %75 = vector.load %arg28[%c0_45, %c0_46] : memref<1x32xf32, #tpu.memory_space<vmem>>, vector<1x32xf32>
    %c0_47 = arith.constant 0 : index
    %c0_48 = arith.constant 0 : index
    %76 = vector.load %arg29[%c0_47, %c0_48] : memref<1x32xf32, #tpu.memory_space<vmem>>, vector<1x32xf32>
    %c0_i32 = arith.constant 0 : i32
    %c2_i32 = arith.constant 2 : i32
    %77 = arith.addi %c0_i32, %c2_i32 : i32
    %c1_i32 = arith.constant 1 : i32
    %78 = scf.for %arg32 = %c0_i32 to %77 step %c1_i32 iter_args(%arg33 = %1) -> (vector<8x32xf32>)  : i32 {
      %133 = arith.index_cast %arg32 : i32 to index
      %c0_66 = arith.constant 0 : index
      %c0_67 = arith.constant 0 : index
      %134 = vector.load %arg11[%133, %c0_66, %c0_67] : memref<2x32x64xbf16, #tpu.memory_space<vmem>>, vector<1x32x64xbf16>
      %135 = vector.shape_cast %134 : vector<1x32x64xbf16> to vector<32x64xbf16>
      %136 = arith.index_cast %arg32 : i32 to index
      %c0_68 = arith.constant 0 : index
      %c0_69 = arith.constant 0 : index
      %137 = vector.load %arg12[%136, %c0_68, %c0_69] : memref<2x32x32xbf16, #tpu.memory_space<vmem>>, vector<1x32x32xbf16>
      %138 = vector.shape_cast %137 : vector<1x32x32xbf16> to vector<32x32xbf16>
      %139 = arith.index_cast %arg32 : i32 to index
      %c0_70 = arith.constant 0 : index
      %c0_71 = arith.constant 0 : index
      %140 = vector.load %arg13[%139, %c0_70, %c0_71] : memref<2x1x32xf32, #tpu.memory_space<vmem>>, vector<1x1x32xf32>
      %141 = vector.shape_cast %140 : vector<1x1x32xf32> to vector<1x32xf32>
      %142 = arith.index_cast %arg32 : i32 to index
      %c0_72 = arith.constant 0 : index
      %c0_73 = arith.constant 0 : index
      %143 = vector.load %arg14[%142, %c0_72, %c0_73] : memref<2x32x32xbf16, #tpu.memory_space<vmem>>, vector<1x32x32xbf16>
      %144 = vector.shape_cast %143 : vector<1x32x32xbf16> to vector<32x32xbf16>
      %145 = arith.index_cast %arg32 : i32 to index
      %c0_74 = arith.constant 0 : index
      %c0_75 = arith.constant 0 : index
      %146 = vector.load %arg15[%145, %c0_74, %c0_75] : memref<2x1x32xf32, #tpu.memory_space<vmem>>, vector<1x1x32xf32>
      %147 = vector.shape_cast %146 : vector<1x1x32xf32> to vector<1x32xf32>
      %148 = arith.index_cast %arg32 : i32 to index
      %c0_76 = arith.constant 0 : index
      %c0_77 = arith.constant 0 : index
      %149 = vector.load %arg16[%148, %c0_76, %c0_77] : memref<2x1x32xf32, #tpu.memory_space<vmem>>, vector<1x1x32xf32>
      %150 = vector.shape_cast %149 : vector<1x1x32xf32> to vector<1x32xf32>
      %151 = arith.index_cast %arg32 : i32 to index
      %c0_78 = arith.constant 0 : index
      %c0_79 = arith.constant 0 : index
      %152 = vector.load %arg17[%151, %c0_78, %c0_79] : memref<2x1x1xf32, #tpu.memory_space<vmem>>, vector<1x1x1xf32>
      %153 = vector.shape_cast %152 : vector<1x1x1xf32> to vector<1x1xf32>
      %154 = arith.index_cast %arg32 : i32 to index
      %c0_80 = arith.constant 0 : index
      %c0_81 = arith.constant 0 : index
      %155 = vector.load %arg18[%154, %c0_80, %c0_81] : memref<2x64x32xbf16, #tpu.memory_space<vmem>>, vector<1x64x32xbf16>
      %156 = vector.shape_cast %155 : vector<1x64x32xbf16> to vector<64x32xbf16>
      %157 = arith.index_cast %arg32 : i32 to index
      %c0_82 = arith.constant 0 : index
      %c0_83 = arith.constant 0 : index
      %158 = vector.load %arg19[%157, %c0_82, %c0_83] : memref<2x1x32xf32, #tpu.memory_space<vmem>>, vector<1x1x32xf32>
      %159 = vector.shape_cast %158 : vector<1x1x32xf32> to vector<1x32xf32>
      %160 = arith.index_cast %arg32 : i32 to index
      %c0_84 = arith.constant 0 : index
      %c0_85 = arith.constant 0 : index
      %161 = vector.load %arg20[%160, %c0_84, %c0_85] : memref<2x32x32xbf16, #tpu.memory_space<vmem>>, vector<1x32x32xbf16>
      %162 = vector.shape_cast %161 : vector<1x32x32xbf16> to vector<32x32xbf16>
      %163 = arith.index_cast %arg32 : i32 to index
      %c0_86 = arith.constant 0 : index
      %c0_87 = arith.constant 0 : index
      %164 = vector.load %arg21[%163, %c0_86, %c0_87] : memref<2x1x32xf32, #tpu.memory_space<vmem>>, vector<1x1x32xf32>
      %165 = vector.shape_cast %164 : vector<1x1x32xf32> to vector<1x32xf32>
      %166 = arith.index_cast %arg32 : i32 to index
      %c0_88 = arith.constant 0 : index
      %c0_89 = arith.constant 0 : index
      %167 = vector.load %arg22[%166, %c0_88, %c0_89] : memref<2x1x32xf32, #tpu.memory_space<vmem>>, vector<1x1x32xf32>
      %168 = vector.shape_cast %167 : vector<1x1x32xf32> to vector<1x32xf32>
      %169 = arith.index_cast %arg32 : i32 to index
      %c0_90 = arith.constant 0 : index
      %c0_91 = arith.constant 0 : index
      %170 = vector.load %arg23[%169, %c0_90, %c0_91] : memref<2x1x32xf32, #tpu.memory_space<vmem>>, vector<1x1x32xf32>
      %171 = vector.shape_cast %170 : vector<1x1x32xf32> to vector<1x32xf32>
      %172 = arith.truncf %arg33 : vector<8x32xf32> to vector<8x32xbf16>
      %cst_92 = arith.constant dense<0.000000e+00> : vector<8x64xf32>
      %173 = tpu.matmul %172, %135, %cst_92 {dimension_numbers = #tpu.dot_dimension_numbers<[1], [0], [0], [1], [0, 0, 1, 1], [], []>} : vector<8x32xbf16>, vector<32x64xbf16>, vector<8x64xf32> -> vector<8x64xf32>
      %174 = vector.extract_strided_slice %173 {offsets = [0, 0], sizes = [8, 32], strides = [1, 1]} : vector<8x64xf32> to vector<8x32xf32>
      %175 = vector.extract_strided_slice %173 {offsets = [0, 32], sizes = [8, 32], strides = [1, 1]} : vector<8x64xf32> to vector<8x32xf32>
      %176 = arith.truncf %174 : vector<8x32xf32> to vector<8x32xbf16>
      %cst_93 = arith.constant dense<0.000000e+00> : vector<56x32xf32>
      %177 = tpu.matmul %26, %176, %cst_93 {dimension_numbers = #tpu.dot_dimension_numbers<[1], [0], [0], [1], [0, 0, 1, 1], [], []>} : vector<56x8xbf16>, vector<8x32xbf16>, vector<56x32xf32> -> vector<56x32xf32>
      %178 = arith.truncf %175 : vector<8x32xf32> to vector<8x32xbf16>
      %cst_94 = arith.constant dense<0.000000e+00> : vector<56x32xf32>
      %179 = tpu.matmul %32, %178, %cst_94 {dimension_numbers = #tpu.dot_dimension_numbers<[1], [0], [0], [1], [0, 0, 1, 1], [], []>} : vector<56x8xbf16>, vector<8x32xbf16>, vector<56x32xf32> -> vector<56x32xf32>
      %180 = arith.addf %177, %179 : vector<56x32xf32>
      %181 = vector.broadcast %19 : vector<56x1xf32> to vector<56x32xf32>
      %182 = arith.mulf %181, %180 : vector<56x32xf32>
      %cst_95 = arith.constant dense<0.000000e+00> : vector<56x32xf32>
      %183 = tpu.matmul %15, %138, %cst_95 {dimension_numbers = #tpu.dot_dimension_numbers<[1], [0], [0], [1], [0, 0, 1, 1], [], []>} : vector<56x32xbf16>, vector<32x32xbf16>, vector<56x32xf32> -> vector<56x32xf32>
      %184 = arith.addf %182, %183 : vector<56x32xf32>
      %185 = vector.broadcast %141 : vector<1x32xf32> to vector<56x32xf32>
      %186 = arith.addf %184, %185 : vector<56x32xf32>
      %187 = arith.negf %186 : vector<56x32xf32>
      %188 = math.exp %187 : vector<56x32xf32>
      %cst_96 = arith.constant 1.000000e+00 : f32
      %189 = vector.broadcast %cst_96 : f32 to vector<56x32xf32>
      %190 = arith.addf %189, %188 : vector<56x32xf32>
      %191 = arith.divf %189, %190 : vector<56x32xf32>
      %192 = arith.mulf %186, %191 : vector<56x32xf32>
      %193 = arith.truncf %192 : vector<56x32xf32> to vector<56x32xbf16>
      %cst_97 = arith.constant dense<0.000000e+00> : vector<56x32xf32>
      %194 = tpu.matmul %193, %144, %cst_97 {dimension_numbers = #tpu.dot_dimension_numbers<[1], [0], [0], [1], [0, 0, 1, 1], [], []>} : vector<56x32xbf16>, vector<32x32xbf16>, vector<56x32xf32> -> vector<56x32xf32>
      %195 = vector.broadcast %147 : vector<1x32xf32> to vector<56x32xf32>
      %196 = arith.addf %194, %195 : vector<56x32xf32>
      %197 = arith.negf %196 : vector<56x32xf32>
      %198 = math.exp %197 : vector<56x32xf32>
      %cst_98 = arith.constant 1.000000e+00 : f32
      %199 = vector.broadcast %cst_98 : f32 to vector<56x32xf32>
      %200 = arith.addf %199, %198 : vector<56x32xf32>
      %201 = arith.divf %199, %200 : vector<56x32xf32>
      %202 = arith.mulf %196, %201 : vector<56x32xf32>
      %203 = vector.broadcast %150 : vector<1x32xf32> to vector<56x32xf32>
      %204 = arith.mulf %202, %203 : vector<56x32xf32>
      %cst_99 = arith.constant dense<0.000000e+00> : vector<56xf32>
      %205 = vector.multi_reduction <add>, %204, %cst_99 [1] : vector<56x32xf32> to vector<56xf32>
      %206 = vector.shape_cast %205 : vector<56xf32> to vector<56x1xf32>
      %207 = vector.broadcast %153 : vector<1x1xf32> to vector<56x1xf32>
      %208 = arith.addf %206, %207 : vector<56x1xf32>
      %209 = arith.negf %208 : vector<56x1xf32>
      %210 = math.exp %209 : vector<56x1xf32>
      %cst_100 = arith.constant 1.000000e+00 : f32
      %211 = vector.broadcast %cst_100 : f32 to vector<56x1xf32>
      %212 = arith.addf %211, %210 : vector<56x1xf32>
      %213 = arith.divf %211, %212 : vector<56x1xf32>
      %214 = vector.broadcast %213 : vector<56x1xf32> to vector<56x32xf32>
      %215 = arith.mulf %202, %214 : vector<56x32xf32>
      %216 = vector.broadcast %19 : vector<56x1xf32> to vector<56x32xf32>
      %217 = arith.mulf %215, %216 : vector<56x32xf32>
      %218 = arith.truncf %217 : vector<56x32xf32> to vector<56x32xbf16>
      %cst_101 = arith.constant dense<0.000000e+00> : vector<8x32xf32>
      %219 = tpu.matmul %39, %218, %cst_101 {dimension_numbers = #tpu.dot_dimension_numbers<[1], [0], [0], [1], [0, 0, 1, 1], [], []>} : vector<8x56xbf16>, vector<56x32xbf16>, vector<8x32xf32> -> vector<8x32xf32>
      %220 = tpu.concatenate %arg33, %219 in 1 : vector<8x32xf32>, vector<8x32xf32> -> vector<8x64xf32>
      %221 = arith.truncf %220 : vector<8x64xf32> to vector<8x64xbf16>
      %cst_102 = arith.constant dense<0.000000e+00> : vector<8x32xf32>
      %222 = tpu.matmul %221, %156, %cst_102 {dimension_numbers = #tpu.dot_dimension_numbers<[1], [0], [0], [1], [0, 0, 1, 1], [], []>} : vector<8x64xbf16>, vector<64x32xbf16>, vector<8x32xf32> -> vector<8x32xf32>
      %223 = vector.broadcast %159 : vector<1x32xf32> to vector<8x32xf32>
      %224 = arith.addf %222, %223 : vector<8x32xf32>
      %225 = arith.negf %224 : vector<8x32xf32>
      %226 = math.exp %225 : vector<8x32xf32>
      %cst_103 = arith.constant 1.000000e+00 : f32
      %227 = vector.broadcast %cst_103 : f32 to vector<8x32xf32>
      %228 = arith.addf %227, %226 : vector<8x32xf32>
      %229 = arith.divf %227, %228 : vector<8x32xf32>
      %230 = arith.mulf %224, %229 : vector<8x32xf32>
      %231 = arith.truncf %230 : vector<8x32xf32> to vector<8x32xbf16>
      %cst_104 = arith.constant dense<0.000000e+00> : vector<8x32xf32>
      %232 = tpu.matmul %231, %162, %cst_104 {dimension_numbers = #tpu.dot_dimension_numbers<[1], [0], [0], [1], [0, 0, 1, 1], [], []>} : vector<8x32xbf16>, vector<32x32xbf16>, vector<8x32xf32> -> vector<8x32xf32>
      %233 = vector.broadcast %165 : vector<1x32xf32> to vector<8x32xf32>
      %234 = arith.addf %232, %233 : vector<8x32xf32>
      %235 = arith.addf %arg33, %234 : vector<8x32xf32>
      %236 = vector.broadcast %17 : vector<8x1xf32> to vector<8x32xf32>
      %237 = arith.mulf %235, %236 : vector<8x32xf32>
      %238 = vector.broadcast %17 : vector<8x1xf32> to vector<8x32xf32>
      %239 = arith.mulf %arg33, %238 : vector<8x32xf32>
      %cst_105 = arith.constant dense<0.000000e+00> : vector<8x32xf32>
      %240 = tpu.matmul %239, %71, %cst_105 {dimension_numbers = #tpu.dot_dimension_numbers<[1], [0], [0], [1], [0, 0, 1, 1], [], []>, precision = #tpu.contract_precision<fp32>} : vector<8x32xf32>, vector<32x32xf32>, vector<8x32xf32> -> vector<8x32xf32>
      %241 = vector.broadcast %72 : vector<1x32xf32> to vector<8x32xf32>
      %242 = arith.addf %240, %241 : vector<8x32xf32>
      %243 = arith.negf %242 : vector<8x32xf32>
      %244 = math.exp %243 : vector<8x32xf32>
      %cst_106 = arith.constant 1.000000e+00 : f32
      %245 = vector.broadcast %cst_106 : f32 to vector<8x32xf32>
      %246 = arith.addf %245, %244 : vector<8x32xf32>
      %247 = arith.divf %245, %246 : vector<8x32xf32>
      %248 = arith.mulf %242, %247 : vector<8x32xf32>
      %cst_107 = arith.constant dense<0.000000e+00> : vector<8x32xf32>
      %249 = tpu.matmul %248, %73, %cst_107 {dimension_numbers = #tpu.dot_dimension_numbers<[1], [0], [0], [1], [0, 0, 1, 1], [], []>, precision = #tpu.contract_precision<fp32>} : vector<8x32xf32>, vector<32x32xf32>, vector<8x32xf32> -> vector<8x32xf32>
      %250 = vector.broadcast %74 : vector<1x32xf32> to vector<8x32xf32>
      %251 = arith.addf %249, %250 : vector<8x32xf32>
      %252 = vector.broadcast %17 : vector<8x1xf32> to vector<8x32xf32>
      %253 = arith.mulf %251, %252 : vector<8x32xf32>
      %cst_108 = arith.constant dense<0.000000e+00> : vector<8x32xf32>
      %254 = tpu.matmul %70, %253, %cst_108 {dimension_numbers = #tpu.dot_dimension_numbers<[1], [0], [0], [1], [0, 0, 1, 1], [], []>, precision = #tpu.contract_precision<fp32>} : vector<8x8xf32>, vector<8x32xf32>, vector<8x32xf32> -> vector<8x32xf32>
      %cst_109 = arith.constant dense<0.000000e+00> : vector<8xf32>
      %255 = vector.multi_reduction <add>, %254, %cst_109 [1] : vector<8x32xf32> to vector<8xf32>
      %256 = vector.shape_cast %255 : vector<8xf32> to vector<8x1xf32>
      %cst_110 = arith.constant 3.200000e+01 : f32
      %257 = vector.broadcast %cst_110 : f32 to vector<8x1xf32>
      %258 = arith.divf %256, %257 : vector<8x1xf32>
      %259 = vector.broadcast %258 : vector<8x1xf32> to vector<8x32xf32>
      %260 = arith.subf %254, %259 : vector<8x32xf32>
      %261 = arith.mulf %260, %260 : vector<8x32xf32>
      %cst_111 = arith.constant dense<0.000000e+00> : vector<8xf32>
      %262 = vector.multi_reduction <add>, %261, %cst_111 [1] : vector<8x32xf32> to vector<8xf32>
      %263 = vector.shape_cast %262 : vector<8xf32> to vector<8x1xf32>
      %cst_112 = arith.constant 3.200000e+01 : f32
      %264 = vector.broadcast %cst_112 : f32 to vector<8x1xf32>
      %265 = arith.divf %263, %264 : vector<8x1xf32>
      %266 = vector.broadcast %258 : vector<8x1xf32> to vector<8x32xf32>
      %267 = arith.subf %254, %266 : vector<8x32xf32>
      %cst_113 = arith.constant 9.99999974E-6 : f32
      %268 = vector.broadcast %cst_113 : f32 to vector<8x1xf32>
      %269 = arith.addf %265, %268 : vector<8x1xf32>
      %270 = math.sqrt %269 : vector<8x1xf32>
      %271 = vector.broadcast %270 : vector<8x1xf32> to vector<8x32xf32>
      %272 = arith.divf %267, %271 : vector<8x32xf32>
      %273 = vector.broadcast %75 : vector<1x32xf32> to vector<8x32xf32>
      %274 = arith.mulf %272, %273 : vector<8x32xf32>
      %275 = vector.broadcast %76 : vector<1x32xf32> to vector<8x32xf32>
      %276 = arith.addf %274, %275 : vector<8x32xf32>
      %277 = arith.addf %239, %276 : vector<8x32xf32>
      %278 = arith.addf %237, %277 : vector<8x32xf32>
      %cst_114 = arith.constant dense<0.000000e+00> : vector<8xf32>
      %279 = vector.multi_reduction <add>, %278, %cst_114 [1] : vector<8x32xf32> to vector<8xf32>
      %280 = vector.shape_cast %279 : vector<8xf32> to vector<8x1xf32>
      %cst_115 = arith.constant 3.200000e+01 : f32
      %281 = vector.broadcast %cst_115 : f32 to vector<8x1xf32>
      %282 = arith.divf %280, %281 : vector<8x1xf32>
      %283 = vector.broadcast %282 : vector<8x1xf32> to vector<8x32xf32>
      %284 = arith.subf %278, %283 : vector<8x32xf32>
      %285 = arith.mulf %284, %284 : vector<8x32xf32>
      %cst_116 = arith.constant dense<0.000000e+00> : vector<8xf32>
      %286 = vector.multi_reduction <add>, %285, %cst_116 [1] : vector<8x32xf32> to vector<8xf32>
      %287 = vector.shape_cast %286 : vector<8xf32> to vector<8x1xf32>
      %cst_117 = arith.constant 3.200000e+01 : f32
      %288 = vector.broadcast %cst_117 : f32 to vector<8x1xf32>
      %289 = arith.divf %287, %288 : vector<8x1xf32>
      %290 = vector.broadcast %282 : vector<8x1xf32> to vector<8x32xf32>
      %291 = arith.subf %278, %290 : vector<8x32xf32>
      %cst_118 = arith.constant 9.99999974E-6 : f32
      %292 = vector.broadcast %cst_118 : f32 to vector<8x1xf32>
      %293 = arith.addf %289, %292 : vector<8x1xf32>
      %294 = math.sqrt %293 : vector<8x1xf32>
      %295 = vector.broadcast %294 : vector<8x1xf32> to vector<8x32xf32>
      %296 = arith.divf %291, %295 : vector<8x32xf32>
      %297 = vector.broadcast %168 : vector<1x32xf32> to vector<8x32xf32>
      %298 = arith.mulf %296, %297 : vector<8x32xf32>
      %299 = vector.broadcast %171 : vector<1x32xf32> to vector<8x32xf32>
      %300 = arith.addf %298, %299 : vector<8x32xf32>
      %301 = vector.broadcast %17 : vector<8x1xf32> to vector<8x32xf32>
      %302 = arith.mulf %300, %301 : vector<8x32xf32>
      scf.yield %302 : vector<8x32xf32>
    }
    %c2_i32_49 = arith.constant 2 : i32
    %c0_50 = arith.constant 0 : index
    %c0_51 = arith.constant 0 : index
    %c0_52 = arith.constant 0 : index
    %79 = vector.load %arg30[%c0_50, %c0_51, %c0_52] : memref<1x8x32xf32, #tpu.memory_space<vmem>>, vector<1x8x32xf32>
    %80 = vector.shape_cast %79 : vector<1x8x32xf32> to vector<8x32xf32>
    %81 = vector.shape_cast %78 : vector<8x32xf32> to vector<1x8x32xf32>
    tpu.vector_store %arg30[%c0_50, %c0_51, %c0_52], %81 {strides = array<i32>} : memref<1x8x32xf32, #tpu.memory_space<vmem>>, vector<1x8x32xf32>,
    %cst_53 = arith.constant 9.99999993E-9 : f32
    %82 = vector.broadcast %cst_53 : f32 to vector<8x8xf32>
    %83 = arith.addf %61, %82 : vector<8x8xf32>
    %84 = math.sqrt %83 : vector<8x8xf32>
    %cst_54 = arith.constant 1.000000e+00 : f32
    %85 = vector.broadcast %cst_54 : f32 to vector<8x8xf32>
    %86 = arith.addf %84, %85 : vector<8x8xf32>
    %cst_55 = arith.constant 9.99999993E-9 : f32
    %87 = vector.broadcast %cst_55 : f32 to vector<8x8xf32>
    %88 = arith.addf %61, %87 : vector<8x8xf32>
    %89 = arith.mulf %86, %88 : vector<8x8xf32>
    %90 = arith.divf %7, %89 : vector<8x8xf32>
    %91 = vector.extract_strided_slice %5 {offsets = [0, 0], sizes = [1, 8], strides = [1, 1]} : vector<3x8xf32> to vector<1x8xf32>
    %92 = vector.extract_strided_slice %3 {offsets = [0, 0], sizes = [8, 1], strides = [1, 1]} : vector<8x3xf32> to vector<8x1xf32>
    %93 = vector.broadcast %91 : vector<1x8xf32> to vector<8x8xf32>
    %94 = vector.broadcast %92 : vector<8x1xf32> to vector<8x8xf32>
    %95 = arith.subf %93, %94 : vector<8x8xf32>
    %96 = arith.mulf %90, %95 : vector<8x8xf32>
    %cst_56 = arith.constant dense<0.000000e+00> : vector<8xf32>
    %97 = vector.multi_reduction <add>, %96, %cst_56 [1] : vector<8x8xf32> to vector<8xf32>
    %98 = vector.shape_cast %97 : vector<8xf32> to vector<8x1xf32>
    %99 = vector.extract_strided_slice %3 {offsets = [0, 0], sizes = [8, 1], strides = [1, 1]} : vector<8x3xf32> to vector<8x1xf32>
    %100 = arith.subf %99, %98 : vector<8x1xf32>
    %101 = arith.mulf %100, %17 : vector<8x1xf32>
    %c0_57 = arith.constant 0 : index
    %c0_58 = arith.constant 0 : index
    %c0_59 = arith.constant 0 : index
    %102 = vector.load %arg31[%c0_57, %c0_58, %c0_59] : memref<1x8x3xf32, #tpu.memory_space<vmem>>, vector<1x8x1xf32>
    %103 = vector.shape_cast %102 : vector<1x8x1xf32> to vector<8x1xf32>
    %104 = vector.shape_cast %101 : vector<8x1xf32> to vector<1x8x1xf32>
    tpu.vector_store %arg31[%c0_57, %c0_58, %c0_59], %104 {strides = array<i32>} : memref<1x8x3xf32, #tpu.memory_space<vmem>>, vector<1x8x1xf32>,
    %105 = vector.extract_strided_slice %5 {offsets = [1, 0], sizes = [1, 8], strides = [1, 1]} : vector<3x8xf32> to vector<1x8xf32>
    %106 = vector.extract_strided_slice %3 {offsets = [0, 1], sizes = [8, 1], strides = [1, 1]} : vector<8x3xf32> to vector<8x1xf32>
    %107 = vector.broadcast %105 : vector<1x8xf32> to vector<8x8xf32>
    %108 = vector.broadcast %106 : vector<8x1xf32> to vector<8x8xf32>
    %109 = arith.subf %107, %108 : vector<8x8xf32>
    %110 = arith.mulf %90, %109 : vector<8x8xf32>
    %cst_60 = arith.constant dense<0.000000e+00> : vector<8xf32>
    %111 = vector.multi_reduction <add>, %110, %cst_60 [1] : vector<8x8xf32> to vector<8xf32>
    %112 = vector.shape_cast %111 : vector<8xf32> to vector<8x1xf32>
    %113 = vector.extract_strided_slice %3 {offsets = [0, 1], sizes = [8, 1], strides = [1, 1]} : vector<8x3xf32> to vector<8x1xf32>
    %114 = arith.subf %113, %112 : vector<8x1xf32>
    %115 = arith.mulf %114, %17 : vector<8x1xf32>
    %c0_61 = arith.constant 0 : index
    %c0_62 = arith.constant 0 : index
    %c1 = arith.constant 1 : index
    %116 = vector.load %arg31[%c0_61, %c0_62, %c1] : memref<1x8x3xf32, #tpu.memory_space<vmem>>, vector<1x8x1xf32>
    %117 = vector.shape_cast %116 : vector<1x8x1xf32> to vector<8x1xf32>
    %118 = vector.shape_cast %115 : vector<8x1xf32> to vector<1x8x1xf32>
    tpu.vector_store %arg31[%c0_61, %c0_62, %c1], %118 {strides = array<i32>} : memref<1x8x3xf32, #tpu.memory_space<vmem>>, vector<1x8x1xf32>,
    %119 = vector.extract_strided_slice %5 {offsets = [2, 0], sizes = [1, 8], strides = [1, 1]} : vector<3x8xf32> to vector<1x8xf32>
    %120 = vector.extract_strided_slice %3 {offsets = [0, 2], sizes = [8, 1], strides = [1, 1]} : vector<8x3xf32> to vector<8x1xf32>
    %121 = vector.broadcast %119 : vector<1x8xf32> to vector<8x8xf32>
    %122 = vector.broadcast %120 : vector<8x1xf32> to vector<8x8xf32>
    %123 = arith.subf %121, %122 : vector<8x8xf32>
    %124 = arith.mulf %90, %123 : vector<8x8xf32>
    %cst_63 = arith.constant dense<0.000000e+00> : vector<8xf32>
    %125 = vector.multi_reduction <add>, %124, %cst_63 [1] : vector<8x8xf32> to vector<8xf32>
    %126 = vector.shape_cast %125 : vector<8xf32> to vector<8x1xf32>
    %127 = vector.extract_strided_slice %3 {offsets = [0, 2], sizes = [8, 1], strides = [1, 1]} : vector<8x3xf32> to vector<8x1xf32>
    %128 = arith.subf %127, %126 : vector<8x1xf32>
    %129 = arith.mulf %128, %17 : vector<8x1xf32>
    %c0_64 = arith.constant 0 : index
    %c0_65 = arith.constant 0 : index
    %c2 = arith.constant 2 : index
    %130 = vector.load %arg31[%c0_64, %c0_65, %c2] : memref<1x8x3xf32, #tpu.memory_space<vmem>>, vector<1x8x1xf32>
    %131 = vector.shape_cast %130 : vector<1x8x1xf32> to vector<8x1xf32>
    %132 = vector.shape_cast %129 : vector<8x1xf32> to vector<1x8x1xf32>
    tpu.vector_store %arg31[%c0_64, %c0_65, %c2], %132 {strides = array<i32>} : memref<1x8x3xf32, #tpu.memory_space<vmem>>, vector<1x8x1xf32>,
    return
  }
  func.func @transform_0(%arg0: i32) -> (i32, i32, i32) {
    %c0_i32 = arith.constant 0 : i32
    %c0_i32_0 = arith.constant 0 : i32
    %c0_i32_1 = arith.constant 0 : i32
    return %arg0, %c0_i32, %c0_i32_0 : i32, i32, i32
  }
  func.func @transform_1(%arg0: i32) -> (i32, i32, i32) {
    %c0_i32 = arith.constant 0 : i32
    %c0_i32_0 = arith.constant 0 : i32
    %c0_i32_1 = arith.constant 0 : i32
    return %arg0, %c0_i32, %c0_i32_0 : i32, i32, i32
  }
  func.func @transform_2(%arg0: i32) -> (i32, i32, i32) {
    %c0_i32 = arith.constant 0 : i32
    %c0_i32_0 = arith.constant 0 : i32
    %c0_i32_1 = arith.constant 0 : i32
    return %arg0, %c0_i32, %c0_i32_0 : i32, i32, i32
  }
  func.func @transform_3(%arg0: i32) -> (i32, i32, i32) {
    %c0_i32 = arith.constant 0 : i32
    %c0_i32_0 = arith.constant 0 : i32
    %c0_i32_1 = arith.constant 0 : i32
    return %arg0, %c0_i32, %c0_i32_0 : i32, i32, i32
  }
  func.func @transform_4(%arg0: i32) -> (i32, i32, i32) {
    %c0_i32 = arith.constant 0 : i32
    %c0_i32_0 = arith.constant 0 : i32
    %c0_i32_1 = arith.constant 0 : i32
    return %arg0, %c0_i32, %c0_i32_0 : i32, i32, i32
  }
  func.func @transform_5(%arg0: i32) -> (i32, i32, i32) {
    %c0_i32 = arith.constant 0 : i32
    %c0_i32_0 = arith.constant 0 : i32
    %c0_i32_1 = arith.constant 0 : i32
    return %arg0, %c0_i32, %c0_i32_0 : i32, i32, i32
  }
  func.func @transform_6(%arg0: i32) -> (i32, i32, i32) {
    %c0_i32 = arith.constant 0 : i32
    %c0_i32_0 = arith.constant 0 : i32
    %c0_i32_1 = arith.constant 0 : i32
    return %arg0, %c0_i32, %c0_i32_0 : i32, i32, i32
  }
  func.func @transform_7(%arg0: i32) -> (i32, i32, i32) {
    %c0_i32 = arith.constant 0 : i32
    %c0_i32_0 = arith.constant 0 : i32
    %c0_i32_1 = arith.constant 0 : i32
    return %arg0, %c0_i32, %c0_i32_0 : i32, i32, i32
  }
  func.func @transform_8(%arg0: i32) -> (i32, i32, i32) {
    %c0_i32 = arith.constant 0 : i32
    %c0_i32_0 = arith.constant 0 : i32
    %c0_i32_1 = arith.constant 0 : i32
    return %arg0, %c0_i32, %c0_i32_0 : i32, i32, i32
  }
  func.func @transform_9(%arg0: i32) -> (i32, i32, i32) {
    %c0_i32 = arith.constant 0 : i32
    %c0_i32_0 = arith.constant 0 : i32
    %c0_i32_1 = arith.constant 0 : i32
    return %arg0, %c0_i32, %c0_i32_0 : i32, i32, i32
  }
  func.func @transform_10(%arg0: i32) -> (i32, i32, i32) {
    %c0_i32 = arith.constant 0 : i32
    %c0_i32_0 = arith.constant 0 : i32
    %c0_i32_1 = arith.constant 0 : i32
    %c0_i32_2 = arith.constant 0 : i32
    return %c0_i32, %c0_i32_0, %c0_i32_1 : i32, i32, i32
  }
  func.func @transform_11(%arg0: i32) -> (i32, i32, i32) {
    %c0_i32 = arith.constant 0 : i32
    %c0_i32_0 = arith.constant 0 : i32
    %c0_i32_1 = arith.constant 0 : i32
    %c0_i32_2 = arith.constant 0 : i32
    return %c0_i32, %c0_i32_0, %c0_i32_1 : i32, i32, i32
  }
  func.func @transform_12(%arg0: i32) -> (i32, i32, i32) {
    %c0_i32 = arith.constant 0 : i32
    %c0_i32_0 = arith.constant 0 : i32
    %c0_i32_1 = arith.constant 0 : i32
    %c0_i32_2 = arith.constant 0 : i32
    return %c0_i32, %c0_i32_0, %c0_i32_1 : i32, i32, i32
  }
  func.func @transform_13(%arg0: i32) -> (i32, i32, i32) {
    %c0_i32 = arith.constant 0 : i32
    %c0_i32_0 = arith.constant 0 : i32
    %c0_i32_1 = arith.constant 0 : i32
    %c0_i32_2 = arith.constant 0 : i32
    return %c0_i32, %c0_i32_0, %c0_i32_1 : i32, i32, i32
  }
  func.func @transform_14(%arg0: i32) -> (i32, i32, i32) {
    %c0_i32 = arith.constant 0 : i32
    %c0_i32_0 = arith.constant 0 : i32
    %c0_i32_1 = arith.constant 0 : i32
    %c0_i32_2 = arith.constant 0 : i32
    return %c0_i32, %c0_i32_0, %c0_i32_1 : i32, i32, i32
  }
  func.func @transform_15(%arg0: i32) -> (i32, i32, i32) {
    %c0_i32 = arith.constant 0 : i32
    %c0_i32_0 = arith.constant 0 : i32
    %c0_i32_1 = arith.constant 0 : i32
    %c0_i32_2 = arith.constant 0 : i32
    return %c0_i32, %c0_i32_0, %c0_i32_1 : i32, i32, i32
  }
  func.func @transform_16(%arg0: i32) -> (i32, i32, i32) {
    %c0_i32 = arith.constant 0 : i32
    %c0_i32_0 = arith.constant 0 : i32
    %c0_i32_1 = arith.constant 0 : i32
    %c0_i32_2 = arith.constant 0 : i32
    return %c0_i32, %c0_i32_0, %c0_i32_1 : i32, i32, i32
  }
  func.func @transform_17(%arg0: i32) -> (i32, i32, i32) {
    %c0_i32 = arith.constant 0 : i32
    %c0_i32_0 = arith.constant 0 : i32
    %c0_i32_1 = arith.constant 0 : i32
    %c0_i32_2 = arith.constant 0 : i32
    return %c0_i32, %c0_i32_0, %c0_i32_1 : i32, i32, i32
  }
  func.func @transform_18(%arg0: i32) -> (i32, i32, i32) {
    %c0_i32 = arith.constant 0 : i32
    %c0_i32_0 = arith.constant 0 : i32
    %c0_i32_1 = arith.constant 0 : i32
    %c0_i32_2 = arith.constant 0 : i32
    return %c0_i32, %c0_i32_0, %c0_i32_1 : i32, i32, i32
  }
  func.func @transform_19(%arg0: i32) -> (i32, i32, i32) {
    %c0_i32 = arith.constant 0 : i32
    %c0_i32_0 = arith.constant 0 : i32
    %c0_i32_1 = arith.constant 0 : i32
    %c0_i32_2 = arith.constant 0 : i32
    return %c0_i32, %c0_i32_0, %c0_i32_1 : i32, i32, i32
  }
  func.func @transform_20(%arg0: i32) -> (i32, i32, i32) {
    %c0_i32 = arith.constant 0 : i32
    %c0_i32_0 = arith.constant 0 : i32
    %c0_i32_1 = arith.constant 0 : i32
    %c0_i32_2 = arith.constant 0 : i32
    return %c0_i32, %c0_i32_0, %c0_i32_1 : i32, i32, i32
  }
  func.func @transform_21(%arg0: i32) -> (i32, i32, i32) {
    %c0_i32 = arith.constant 0 : i32
    %c0_i32_0 = arith.constant 0 : i32
    %c0_i32_1 = arith.constant 0 : i32
    %c0_i32_2 = arith.constant 0 : i32
    return %c0_i32, %c0_i32_0, %c0_i32_1 : i32, i32, i32
  }
  func.func @transform_22(%arg0: i32) -> (i32, i32, i32) {
    %c0_i32 = arith.constant 0 : i32
    %c0_i32_0 = arith.constant 0 : i32
    %c0_i32_1 = arith.constant 0 : i32
    %c0_i32_2 = arith.constant 0 : i32
    return %c0_i32, %c0_i32_0, %c0_i32_1 : i32, i32, i32
  }
  func.func @transform_23(%arg0: i32) -> (i32, i32) {
    %c0_i32 = arith.constant 0 : i32
    %c0_i32_0 = arith.constant 0 : i32
    %c0_i32_1 = arith.constant 0 : i32
    return %c0_i32, %c0_i32_0 : i32, i32
  }
  func.func @transform_24(%arg0: i32) -> (i32, i32) {
    %c0_i32 = arith.constant 0 : i32
    %c0_i32_0 = arith.constant 0 : i32
    %c0_i32_1 = arith.constant 0 : i32
    return %c0_i32, %c0_i32_0 : i32, i32
  }
  func.func @transform_25(%arg0: i32) -> (i32, i32) {
    %c0_i32 = arith.constant 0 : i32
    %c0_i32_0 = arith.constant 0 : i32
    %c0_i32_1 = arith.constant 0 : i32
    return %c0_i32, %c0_i32_0 : i32, i32
  }
  func.func @transform_26(%arg0: i32) -> (i32, i32) {
    %c0_i32 = arith.constant 0 : i32
    %c0_i32_0 = arith.constant 0 : i32
    %c0_i32_1 = arith.constant 0 : i32
    return %c0_i32, %c0_i32_0 : i32, i32
  }
  func.func @transform_27(%arg0: i32) -> (i32, i32) {
    %c0_i32 = arith.constant 0 : i32
    %c0_i32_0 = arith.constant 0 : i32
    %c0_i32_1 = arith.constant 0 : i32
    return %c0_i32, %c0_i32_0 : i32, i32
  }
  func.func @transform_28(%arg0: i32) -> (i32, i32) {
    %c0_i32 = arith.constant 0 : i32
    %c0_i32_0 = arith.constant 0 : i32
    %c0_i32_1 = arith.constant 0 : i32
    return %c0_i32, %c0_i32_0 : i32, i32
  }
  func.func @transform_29(%arg0: i32) -> (i32, i32, i32) {
    %c0_i32 = arith.constant 0 : i32
    %c0_i32_0 = arith.constant 0 : i32
    %c0_i32_1 = arith.constant 0 : i32
    return %arg0, %c0_i32, %c0_i32_0 : i32, i32, i32
  }
  func.func @transform_30(%arg0: i32) -> (i32, i32, i32) {
    %c0_i32 = arith.constant 0 : i32
    %c0_i32_0 = arith.constant 0 : i32
    %c0_i32_1 = arith.constant 0 : i32
    return %arg0, %c0_i32, %c0_i32_0 : i32, i32, i32
  }
}

</mosaic_0001>

<llo_original>
// kernel: tpu_custom_call.1
$region0: #{tpu_custom_call.1}
  #allocation0 [shape = 'u32[]', space=smem, size = 0x4, offset = 0x4, fixed_abs, tag = 'smem constant byte address 0x4 - core index']
  #allocation1 [shape = 'u32[72,128]{1,0:T(1,128)}', space=vmem, size = 0x9000, scoped, tag = 'internal scratch']
  %s0 = inlined_call_operand.smem [shape: u32[31], index: -1, kind: input, shape index: {}]
  %s1 = sld [smem:[%s0]]
  %s2 = scalar_lea.smem %s0, 1
  %s3 = sld [smem:[%s2]]
  %s4 = scalar_lea.smem %s0, 2
  %s5 = sld [smem:[%s4]]
  %s6 = scalar_lea.smem %s0, 3
  %s7 = sld [smem:[%s6]]
  %s8 = scalar_lea.smem %s0, 4
  %s9 = sld [smem:[%s8]]
  %s10 = scalar_lea.smem %s0, 5
  %s11 = sld [smem:[%s10]]
  %s12 = scalar_lea.smem %s0, 6
  %s13 = sld [smem:[%s12]]
  %s14 = scalar_lea.smem %s0, 7
  %s15 = sld [smem:[%s14]]
  %s16 = scalar_lea.smem %s0, 8
  %s17 = sld [smem:[%s16]]
  %s18 = scalar_lea.smem %s0, 9
  %s19 = sld [smem:[%s18]]
  %s20 = scalar_lea.smem %s0, 10
  %s21 = sld [smem:[%s20]]
  %s22 = scalar_lea.smem %s0, 11
  %s23 = sld [smem:[%s22]]
  %s24 = scalar_lea.smem %s0, 12
  %s25 = sld [smem:[%s24]]
  %s26 = scalar_lea.smem %s0, 13
  %s27 = sld [smem:[%s26]]
  %s28 = scalar_lea.smem %s0, 14
  %s29 = sld [smem:[%s28]]
  %s30 = scalar_lea.smem %s0, 15
  %s31 = sld [smem:[%s30]]
  %s32 = scalar_lea.smem %s0, 16
  %s33 = sld [smem:[%s32]]
  %s34 = scalar_lea.smem %s0, 17
  %s35 = sld [smem:[%s34]]
  %s36 = scalar_lea.smem %s0, 18
  %s37 = sld [smem:[%s36]]
  %s38 = scalar_lea.smem %s0, 19
  %s39 = sld [smem:[%s38]]
  %s40 = scalar_lea.smem %s0, 20
  %s41 = sld [smem:[%s40]]
  %s42 = scalar_lea.smem %s0, 21
  %s43 = sld [smem:[%s42]]
  %s44 = scalar_lea.smem %s0, 22
  %s45 = sld [smem:[%s44]]
  %s46 = scalar_lea.smem %s0, 23
  %s47 = sld [smem:[%s46]]
  %s48 = scalar_lea.smem %s0, 24
  %s49 = sld [smem:[%s48]]
  %s50 = scalar_lea.smem %s0, 25
  %s51 = sld [smem:[%s50]]
  %s52 = scalar_lea.smem %s0, 26
  %s53 = sld [smem:[%s52]]
  %s54 = scalar_lea.smem %s0, 27
  %s55 = sld [smem:[%s54]]
  %s56 = scalar_lea.smem %s0, 28
  %s57 = sld [smem:[%s56]]
  %s58 = scalar_lea.smem %s0, 29
  %s59 = sld [smem:[%s58]]
  %s60 = scalar_lea.smem %s0, 30
  %s61 = sld [smem:[%s60]]
  %62 = xla_tuple %s59, %s61
  %s63 = sld [smem:[#allocation0]]
  $region164: #{tpu_custom_call.1} parent=0
    _
  %s65 = ssub.s32 1, %s63
  %s66 = scalar_select 0, %s65, %s63
  $region1: #{tpu_custom_call.1} parent=0
    #allocation2 [shape = 'u8[8192]{0}', space=vmem, size = 0x2000, scoped, tag = 'output window, operand 0']
    #allocation3 [shape = 's32[2]{0}', space=sflag, size = 0x8, scoped, tag = 'scoped memory for tpu_custom_call.1']
    %67 = vsyncpa [#allocation3], 0
    %s68 = scalar_lea.sflag [#allocation3], 1
    %69 = vsyncpa %s68, 0
    loop: start=0, step=1, limit=4
    $region2: #{tpu_custom_call.1} parent=1 // loop_pre_header
      _
    $region3: #{tpu_custom_call.1} parent=1 // loop_header
      %s71 = sphi 0, %s75
      %p72 = scmp.ge.s32.totalorder %s71, 4
      %s81 = sphi 0, %s83
      %s84 = sphi 0, %s81
      %s85 = sphi 0, %s84
      %s101 = sphi 0, %s85
      %s107 = sphi 0, %s109
      %s110 = sphi 0, %s107
      %s111 = sphi 0, %s110
      %s127 = sphi 0, %s111
      %s133 = sphi 0, %s135
      %s136 = sphi 0, %s133
      %s137 = sphi 0, %s136
      %s153 = sphi 0, %s137
      %s159 = sphi 0, %s161
      %s162 = sphi 0, %s159
      %s163 = sphi 0, %s162
      %s179 = sphi 0, %s163
      %s185 = sphi 0, %s187
      %s188 = sphi 0, %s185
      %s189 = sphi 0, %s188
      %s205 = sphi 0, %s189
      %s211 = sphi 0, %s213
      %s214 = sphi 0, %s211
      %s215 = sphi 0, %s214
      %s231 = sphi 0, %s215
      %s237 = sphi 0, %s239
      %s240 = sphi 0, %s237
      %s241 = sphi 0, %s240
      %s257 = sphi 0, %s241
      %s263 = sphi 0, %s265
      %s266 = sphi 0, %s263
      %s267 = sphi 0, %s266
      %s283 = sphi 0, %s267
      %s289 = sphi 0, %s291
      %s292 = sphi 0, %s289
      %s293 = sphi 0, %s292
      %s309 = sphi 0, %s293
      %s315 = sphi 0, %s317
      %s318 = sphi 0, %s315
      %s319 = sphi 0, %s318
      %s335 = sphi 0, %s319
      %s339 = sphi 0, %s339
      %s341 = sphi 0, %s339
      %s342 = sphi 0, %s341
      %s356 = sphi 0, %s342
      %s360 = sphi 0, %s360
      %s362 = sphi 0, %s360
      %s363 = sphi 0, %s362
      %s377 = sphi 0, %s363
      %s381 = sphi 0, %s381
      %s383 = sphi 0, %s381
      %s384 = sphi 0, %s383
      %s398 = sphi 0, %s384
      %s402 = sphi 0, %s402
      %s404 = sphi 0, %s402
      %s405 = sphi 0, %s404
      %s419 = sphi 0, %s405
      %s423 = sphi 0, %s423
      %s425 = sphi 0, %s423
      %s426 = sphi 0, %s425
      %s440 = sphi 0, %s426
      %s444 = sphi 0, %s444
      %s446 = sphi 0, %s444
      %s447 = sphi 0, %s446
      %s461 = sphi 0, %s447
      %s465 = sphi 0, %s465
      %s467 = sphi 0, %s465
      %s468 = sphi 0, %s467
      %s482 = sphi 0, %s468
      %s486 = sphi 0, %s486
      %s488 = sphi 0, %s486
      %s489 = sphi 0, %s488
      %s503 = sphi 0, %s489
      %s507 = sphi 0, %s507
      %s509 = sphi 0, %s507
      %s510 = sphi 0, %s509
      %s524 = sphi 0, %s510
      %s528 = sphi 0, %s528
      %s530 = sphi 0, %s528
      %s531 = sphi 0, %s530
      %s545 = sphi 0, %s531
      %s549 = sphi 0, %s549
      %s551 = sphi 0, %s549
      %s552 = sphi 0, %s551
      %s566 = sphi 0, %s552
      %s570 = sphi 0, %s570
      %s572 = sphi 0, %s570
      %s573 = sphi 0, %s572
      %s587 = sphi 0, %s573
      %s591 = sphi 0, %s591
      %s593 = sphi 0, %s591
      %s594 = sphi 0, %s593
      %s608 = sphi 0, %s594
      %s612 = sphi 0, %s612
      %s614 = sphi 0, %s612
      %s615 = sphi 0, %s614
      %s629 = sphi 0, %s615
      %s633 = sphi 0, %s633
      %s635 = sphi 0, %s633
      %s636 = sphi 0, %s635
      %s650 = sphi 0, %s636
      %s654 = sphi 0, %s654
      %s656 = sphi 0, %s654
      %s657 = sphi 0, %s656
      %s671 = sphi 0, %s657
      %s675 = sphi 0, %s675
      %s677 = sphi 0, %s675
      %s678 = sphi 0, %s677
      %s692 = sphi 0, %s678
      %s696 = sphi 0, %s696
      %s698 = sphi 0, %s696
      %s699 = sphi 0, %s698
      %s713 = sphi 0, %s699
      %s717 = sphi 0, %s717
      %s719 = sphi 0, %s717
      %s720 = sphi 0, %s719
      %s734 = sphi 0, %s720
      %s740 = sphi 0, %s742
      %s743 = sphi 0, %s740
      %s744 = sphi 0, %s743
      %s760 = sphi 0, %s744
      %s766 = sphi 0, %s768
      %s769 = sphi 0, %s766
      %s770 = sphi 0, %s769
      %s786 = sphi 0, %s770
    $region4: #{tpu_custom_call.1} parent=1 // loop_header_branch
      %74 = sbr.rel (%p72) target = $region8
    $region5: #{tpu_custom_call.1} parent=1 // loop_body
      %s76 = ssub.s32 %s71, 1
      %s77 = ssub.s32 %s71, 2
      %s78 = sadd.s32 %s71, 1
      %s79 = ssub.s32 %s71, %s78
      %p80 = scmp.eq.s32.totalorder %s79, 0
      %s82 = sadd.s32 %s81, 1
      %s83 = scalar_select %p80, %s81, %s82
      %p86 = pneg %p80
      %p87 = scmp.eq.s32.totalorder %s71, 1
      %p88 = por %p86, %p87
      %p89 = scmp.ne.s32.totalorder %s81, %s84
      %p90 = scmp.eq.s32.totalorder %s71, 0
      %p91 = por %p89, %p90
      %p92 = scmp.ne.s32.totalorder %s81, %s84
      %p93 = scmp.eq.s32.totalorder %s76, 1
      %p94 = por %p92, %p93
      %p95 = scmp.ne.s32.totalorder %s84, %s85
      %p96 = scmp.eq.s32.totalorder %s76, 0
      %p97 = por %p95, %p96
      %p98 = scmp.ne.s32.totalorder %s84, %s85
      %p99 = scmp.eq.s32.totalorder %s77, 1
      %p100 = por %p98, %p99
      %p102 = scmp.ne.s32.totalorder %s85, %s101
      %p103 = scmp.eq.s32.totalorder %s77, 0
      %p104 = por %p102, %p103
      %s105 = ssub.s32 %s71, %s78
      %p106 = scmp.eq.s32.totalorder %s105, 0
      %s108 = sadd.s32 %s107, 1
      %s109 = scalar_select %p106, %s107, %s108
      %p112 = pneg %p106
      %p113 = scmp.eq.s32.totalorder %s71, 1
      %p114 = por %p112, %p113
      %p115 = scmp.ne.s32.totalorder %s107, %s110
      %p116 = scmp.eq.s32.totalorder %s71, 0
      %p117 = por %p115, %p116
      %p118 = scmp.ne.s32.totalorder %s107, %s110
      %p119 = scmp.eq.s32.totalorder %s76, 1
      %p120 = por %p118, %p119
      %p121 = scmp.ne.s32.totalorder %s110, %s111
      %p122 = scmp.eq.s32.totalorder %s76, 0
      %p123 = por %p121, %p122
      %p124 = scmp.ne.s32.totalorder %s110, %s111
      %p125 = scmp.eq.s32.totalorder %s77, 1
      %p126 = por %p124, %p125
      %p128 = scmp.ne.s32.totalorder %s111, %s127
      %p129 = scmp.eq.s32.totalorder %s77, 0
      %p130 = por %p128, %p129
      %s131 = ssub.s32 %s71, %s78
      %p132 = scmp.eq.s32.totalorder %s131, 0
      %s134 = sadd.s32 %s133, 1
      %s135 = scalar_select %p132, %s133, %s134
      %p138 = pneg %p132
      %p139 = scmp.eq.s32.totalorder %s71, 1
      %p140 = por %p138, %p139
      %p141 = scmp.ne.s32.totalorder %s133, %s136
      %p142 = scmp.eq.s32.totalorder %s71, 0
      %p143 = por %p141, %p142
      %p144 = scmp.ne.s32.totalorder %s133, %s136
      %p145 = scmp.eq.s32.totalorder %s76, 1
      %p146 = por %p144, %p145
      %p147 = scmp.ne.s32.totalorder %s136, %s137
      %p148 = scmp.eq.s32.totalorder %s76, 0
      %p149 = por %p147, %p148
      %p150 = scmp.ne.s32.totalorder %s136, %s137
      %p151 = scmp.eq.s32.totalorder %s77, 1
      %p152 = por %p150, %p151
      %p154 = scmp.ne.s32.totalorder %s137, %s153
      %p155 = scmp.eq.s32.totalorder %s77, 0
      %p156 = por %p154, %p155
      %s157 = ssub.s32 %s71, %s78
      %p158 = scmp.eq.s32.totalorder %s157, 0
      %s160 = sadd.s32 %s159, 1
      %s161 = scalar_select %p158, %s159, %s160
      %p164 = pneg %p158
      %p165 = scmp.eq.s32.totalorder %s71, 1
      %p166 = por %p164, %p165
      %p167 = scmp.ne.s32.totalorder %s159, %s162
      %p168 = scmp.eq.s32.totalorder %s71, 0
      %p169 = por %p167, %p168
      %p170 = scmp.ne.s32.totalorder %s159, %s162
      %p171 = scmp.eq.s32.totalorder %s76, 1
      %p172 = por %p170, %p171
      %p173 = scmp.ne.s32.totalorder %s162, %s163
      %p174 = scmp.eq.s32.totalorder %s76, 0
      %p175 = por %p173, %p174
      %p176 = scmp.ne.s32.totalorder %s162, %s163
      %p177 = scmp.eq.s32.totalorder %s77, 1
      %p178 = por %p176, %p177
      %p180 = scmp.ne.s32.totalorder %s163, %s179
      %p181 = scmp.eq.s32.totalorder %s77, 0
      %p182 = por %p180, %p181
      %s183 = ssub.s32 %s71, %s78
      %p184 = scmp.eq.s32.totalorder %s183, 0
      %s186 = sadd.s32 %s185, 1
      %s187 = scalar_select %p184, %s185, %s186
      %p190 = pneg %p184
      %p191 = scmp.eq.s32.totalorder %s71, 1
      %p192 = por %p190, %p191
      %p193 = scmp.ne.s32.totalorder %s185, %s188
      %p194 = scmp.eq.s32.totalorder %s71, 0
      %p195 = por %p193, %p194
      %p196 = scmp.ne.s32.totalorder %s185, %s188
      %p197 = scmp.eq.s32.totalorder %s76, 1
      %p198 = por %p196, %p197
      %p199 = scmp.ne.s32.totalorder %s188, %s189
      %p200 = scmp.eq.s32.totalorder %s76, 0
      %p201 = por %p199, %p200
      %p202 = scmp.ne.s32.totalorder %s188, %s189
      %p203 = scmp.eq.s32.totalorder %s77, 1
      %p204 = por %p202, %p203
      %p206 = scmp.ne.s32.totalorder %s189, %s205
      %p207 = scmp.eq.s32.totalorder %s77, 0
      %p208 = por %p206, %p207
      %s209 = ssub.s32 %s71, %s78
      %p210 = scmp.eq.s32.totalorder %s209, 0
      %s212 = sadd.s32 %s211, 1
      %s213 = scalar_select %p210, %s211, %s212
      %p216 = pneg %p210
      %p217 = scmp.eq.s32.totalorder %s71, 1
      %p218 = por %p216, %p217
      %p219 = scmp.ne.s32.totalorder %s211, %s214
      %p220 = scmp.eq.s32.totalorder %s71, 0
      %p221 = por %p219, %p220
      %p222 = scmp.ne.s32.totalorder %s211, %s214
      %p223 = scmp.eq.s32.totalorder %s76, 1
      %p224 = por %p222, %p223
      %p225 = scmp.ne.s32.totalorder %s214, %s215
      %p226 = scmp.eq.s32.totalorder %s76, 0
      %p227 = por %p225, %p226
      %p228 = scmp.ne.s32.totalorder %s214, %s215
      %p229 = scmp.eq.s32.totalorder %s77, 1
      %p230 = por %p228, %p229
      %p232 = scmp.ne.s32.totalorder %s215, %s231
      %p233 = scmp.eq.s32.totalorder %s77, 0
      %p234 = por %p232, %p233
      %s235 = ssub.s32 %s71, %s78
      %p236 = scmp.eq.s32.totalorder %s235, 0
      %s238 = sadd.s32 %s237, 1
      %s239 = scalar_select %p236, %s237, %s238
      %p242 = pneg %p236
      %p243 = scmp.eq.s32.totalorder %s71, 1
      %p244 = por %p242, %p243
      %p245 = scmp.ne.s32.totalorder %s237, %s240
      %p246 = scmp.eq.s32.totalorder %s71, 0
      %p247 = por %p245, %p246
      %p248 = scmp.ne.s32.totalorder %s237, %s240
      %p249 = scmp.eq.s32.totalorder %s76, 1
      %p250 = por %p248, %p249
      %p251 = scmp.ne.s32.totalorder %s240, %s241
      %p252 = scmp.eq.s32.totalorder %s76, 0
      %p253 = por %p251, %p252
      %p254 = scmp.ne.s32.totalorder %s240, %s241
      %p255 = scmp.eq.s32.totalorder %s77, 1
      %p256 = por %p254, %p255
      %p258 = scmp.ne.s32.totalorder %s241, %s257
      %p259 = scmp.eq.s32.totalorder %s77, 0
      %p260 = por %p258, %p259
      %s261 = ssub.s32 %s71, %s78
      %p262 = scmp.eq.s32.totalorder %s261, 0
      %s264 = sadd.s32 %s263, 1
      %s265 = scalar_select %p262, %s263, %s264
      %p268 = pneg %p262
      %p269 = scmp.eq.s32.totalorder %s71, 1
      %p270 = por %p268, %p269
      %p271 = scmp.ne.s32.totalorder %s263, %s266
      %p272 = scmp.eq.s32.totalorder %s71, 0
      %p273 = por %p271, %p272
      %p274 = scmp.ne.s32.totalorder %s263, %s266
      %p275 = scmp.eq.s32.totalorder %s76, 1
      %p276 = por %p274, %p275
      %p277 = scmp.ne.s32.totalorder %s266, %s267
      %p278 = scmp.eq.s32.totalorder %s76, 0
      %p279 = por %p277, %p278
      %p280 = scmp.ne.s32.totalorder %s266, %s267
      %p281 = scmp.eq.s32.totalorder %s77, 1
      %p282 = por %p280, %p281
      %p284 = scmp.ne.s32.totalorder %s267, %s283
      %p285 = scmp.eq.s32.totalorder %s77, 0
      %p286 = por %p284, %p285
      %s287 = ssub.s32 %s71, %s78
      %p288 = scmp.eq.s32.totalorder %s287, 0
      %s290 = sadd.s32 %s289, 1
      %s291 = scalar_select %p288, %s289, %s290
      %p294 = pneg %p288
      %p295 = scmp.eq.s32.totalorder %s71, 1
      %p296 = por %p294, %p295
      %p297 = scmp.ne.s32.totalorder %s289, %s292
      %p298 = scmp.eq.s32.totalorder %s71, 0
      %p299 = por %p297, %p298
      %p300 = scmp.ne.s32.totalorder %s289, %s292
      %p301 = scmp.eq.s32.totalorder %s76, 1
      %p302 = por %p300, %p301
      %p303 = scmp.ne.s32.totalorder %s292, %s293
      %p304 = scmp.eq.s32.totalorder %s76, 0
      %p305 = por %p303, %p304
      %p306 = scmp.ne.s32.totalorder %s292, %s293
      %p307 = scmp.eq.s32.totalorder %s77, 1
      %p308 = por %p306, %p307
      %p310 = scmp.ne.s32.totalorder %s293, %s309
      %p311 = scmp.eq.s32.totalorder %s77, 0
      %p312 = por %p310, %p311
      %s313 = ssub.s32 %s71, %s78
      %p314 = scmp.eq.s32.totalorder %s313, 0
      %s316 = sadd.s32 %s315, 1
      %s317 = scalar_select %p314, %s315, %s316
      %p320 = pneg %p314
      %p321 = scmp.eq.s32.totalorder %s71, 1
      %p322 = por %p320, %p321
      %p323 = scmp.ne.s32.totalorder %s315, %s318
      %p324 = scmp.eq.s32.totalorder %s71, 0
      %p325 = por %p323, %p324
      %p326 = scmp.ne.s32.totalorder %s315, %s318
      %p327 = scmp.eq.s32.totalorder %s76, 1
      %p328 = por %p326, %p327
      %p329 = scmp.ne.s32.totalorder %s318, %s319
      %p330 = scmp.eq.s32.totalorder %s76, 0
      %p331 = por %p329, %p330
      %p332 = scmp.ne.s32.totalorder %s318, %s319
      %p333 = scmp.eq.s32.totalorder %s77, 1
      %p334 = por %p332, %p333
      %p336 = scmp.ne.s32.totalorder %s319, %s335
      %p337 = scmp.eq.s32.totalorder %s77, 0
      %p338 = por %p336, %p337
      %s340 = sadd.s32 %s339, 1
      %p343 = scmp.eq.s32.totalorder %s71, 1
      %p344 = scmp.ne.s32.totalorder %s339, %s341
      %p345 = scmp.eq.s32.totalorder %s71, 0
      %p346 = por %p344, %p345
      %p347 = scmp.ne.s32.totalorder %s339, %s341
      %p348 = scmp.eq.s32.totalorder %s76, 1
      %p349 = por %p347, %p348
      %p350 = scmp.ne.s32.totalorder %s341, %s342
      %p351 = scmp.eq.s32.totalorder %s76, 0
      %p352 = por %p350, %p351
      %p353 = scmp.ne.s32.totalorder %s341, %s342
      %p354 = scmp.eq.s32.totalorder %s77, 1
      %p355 = por %p353, %p354
      %p357 = scmp.ne.s32.totalorder %s342, %s356
      %p358 = scmp.eq.s32.totalorder %s77, 0
      %p359 = por %p357, %p358
      %s361 = sadd.s32 %s360, 1
      %p364 = scmp.eq.s32.totalorder %s71, 1
      %p365 = scmp.ne.s32.totalorder %s360, %s362
      %p366 = scmp.eq.s32.totalorder %s71, 0
      %p367 = por %p365, %p366
      %p368 = scmp.ne.s32.totalorder %s360, %s362
      %p369 = scmp.eq.s32.totalorder %s76, 1
      %p370 = por %p368, %p369
      %p371 = scmp.ne.s32.totalorder %s362, %s363
      %p372 = scmp.eq.s32.totalorder %s76, 0
      %p373 = por %p371, %p372
      %p374 = scmp.ne.s32.totalorder %s362, %s363
      %p375 = scmp.eq.s32.totalorder %s77, 1
      %p376 = por %p374, %p375
      %p378 = scmp.ne.s32.totalorder %s363, %s377
      %p379 = scmp.eq.s32.totalorder %s77, 0
      %p380 = por %p378, %p379
      %s382 = sadd.s32 %s381, 1
      %p385 = scmp.eq.s32.totalorder %s71, 1
      %p386 = scmp.ne.s32.totalorder %s381, %s383
      %p387 = scmp.eq.s32.totalorder %s71, 0
      %p388 = por %p386, %p387
      %p389 = scmp.ne.s32.totalorder %s381, %s383
      %p390 = scmp.eq.s32.totalorder %s76, 1
      %p391 = por %p389, %p390
      %p392 = scmp.ne.s32.totalorder %s383, %s384
      %p393 = scmp.eq.s32.totalorder %s76, 0
      %p394 = por %p392, %p393
      %p395 = scmp.ne.s32.totalorder %s383, %s384
      %p396 = scmp.eq.s32.totalorder %s77, 1
      %p397 = por %p395, %p396
      %p399 = scmp.ne.s32.totalorder %s384, %s398
      %p400 = scmp.eq.s32.totalorder %s77, 0
      %p401 = por %p399, %p400
      %s403 = sadd.s32 %s402, 1
      %p406 = scmp.eq.s32.totalorder %s71, 1
      %p407 = scmp.ne.s32.totalorder %s402, %s404
      %p408 = scmp.eq.s32.totalorder %s71, 0
      %p409 = por %p407, %p408
      %p410 = scmp.ne.s32.totalorder %s402, %s404
      %p411 = scmp.eq.s32.totalorder %s76, 1
      %p412 = por %p410, %p411
      %p413 = scmp.ne.s32.totalorder %s404, %s405
      %p414 = scmp.eq.s32.totalorder %s76, 0
      %p415 = por %p413, %p414
      %p416 = scmp.ne.s32.totalorder %s404, %s405
      %p417 = scmp.eq.s32.totalorder %s77, 1
      %p418 = por %p416, %p417
      %p420 = scmp.ne.s32.totalorder %s405, %s419
      %p421 = scmp.eq.s32.totalorder %s77, 0
      %p422 = por %p420, %p421
      %s424 = sadd.s32 %s423, 1
      %p427 = scmp.eq.s32.totalorder %s71, 1
      %p428 = scmp.ne.s32.totalorder %s423, %s425
      %p429 = scmp.eq.s32.totalorder %s71, 0
      %p430 = por %p428, %p429
      %p431 = scmp.ne.s32.totalorder %s423, %s425
      %p432 = scmp.eq.s32.totalorder %s76, 1
      %p433 = por %p431, %p432
      %p434 = scmp.ne.s32.totalorder %s425, %s426
      %p435 = scmp.eq.s32.totalorder %s76, 0
      %p436 = por %p434, %p435
      %p437 = scmp.ne.s32.totalorder %s425, %s426
      %p438 = scmp.eq.s32.totalorder %s77, 1
      %p439 = por %p437, %p438
      %p441 = scmp.ne.s32.totalorder %s426, %s440
      %p442 = scmp.eq.s32.totalorder %s77, 0
      %p443 = por %p441, %p442
      %s445 = sadd.s32 %s444, 1
      %p448 = scmp.eq.s32.totalorder %s71, 1
      %p449 = scmp.ne.s32.totalorder %s444, %s446
      %p450 = scmp.eq.s32.totalorder %s71, 0
      %p451 = por %p449, %p450
      %p452 = scmp.ne.s32.totalorder %s444, %s446
      %p453 = scmp.eq.s32.totalorder %s76, 1
      %p454 = por %p452, %p453
      %p455 = scmp.ne.s32.totalorder %s446, %s447
      %p456 = scmp.eq.s32.totalorder %s76, 0
      %p457 = por %p455, %p456
      %p458 = scmp.ne.s32.totalorder %s446, %s447
      %p459 = scmp.eq.s32.totalorder %s77, 1
      %p460 = por %p458, %p459
      %p462 = scmp.ne.s32.totalorder %s447, %s461
      %p463 = scmp.eq.s32.totalorder %s77, 0
      %p464 = por %p462, %p463
      %s466 = sadd.s32 %s465, 1
      %p469 = scmp.eq.s32.totalorder %s71, 1
      %p470 = scmp.ne.s32.totalorder %s465, %s467
      %p471 = scmp.eq.s32.totalorder %s71, 0
      %p472 = por %p470, %p471
      %p473 = scmp.ne.s32.totalorder %s465, %s467
      %p474 = scmp.eq.s32.totalorder %s76, 1
      %p475 = por %p473, %p474
      %p476 = scmp.ne.s32.totalorder %s467, %s468
      %p477 = scmp.eq.s32.totalorder %s76, 0
      %p478 = por %p476, %p477
      %p479 = scmp.ne.s32.totalorder %s467, %s468
      %p480 = scmp.eq.s32.totalorder %s77, 1
      %p481 = por %p479, %p480
      %p483 = scmp.ne.s32.totalorder %s468, %s482
      %p484 = scmp.eq.s32.totalorder %s77, 0
      %p485 = por %p483, %p484
      %s487 = sadd.s32 %s486, 1
      %p490 = scmp.eq.s32.totalorder %s71, 1
      %p491 = scmp.ne.s32.totalorder %s486, %s488
      %p492 = scmp.eq.s32.totalorder %s71, 0
      %p493 = por %p491, %p492
      %p494 = scmp.ne.s32.totalorder %s486, %s488
      %p495 = scmp.eq.s32.totalorder %s76, 1
      %p496 = por %p494, %p495
      %p497 = scmp.ne.s32.totalorder %s488, %s489
      %p498 = scmp.eq.s32.totalorder %s76, 0
      %p499 = por %p497, %p498
      %p500 = scmp.ne.s32.totalorder %s488, %s489
      %p501 = scmp.eq.s32.totalorder %s77, 1
      %p502 = por %p500, %p501
      %p504 = scmp.ne.s32.totalorder %s489, %s503
      %p505 = scmp.eq.s32.totalorder %s77, 0
      %p506 = por %p504, %p505
      %s508 = sadd.s32 %s507, 1
      %p511 = scmp.eq.s32.totalorder %s71, 1
      %p512 = scmp.ne.s32.totalorder %s507, %s509
      %p513 = scmp.eq.s32.totalorder %s71, 0
      %p514 = por %p512, %p513
      %p515 = scmp.ne.s32.totalorder %s507, %s509
      %p516 = scmp.eq.s32.totalorder %s76, 1
      %p517 = por %p515, %p516
      %p518 = scmp.ne.s32.totalorder %s509, %s510
      %p519 = scmp.eq.s32.totalorder %s76, 0
      %p520 = por %p518, %p519
      %p521 = scmp.ne.s32.totalorder %s509, %s510
      %p522 = scmp.eq.s32.totalorder %s77, 1
      %p523 = por %p521, %p522
      %p525 = scmp.ne.s32.totalorder %s510, %s524
      %p526 = scmp.eq.s32.totalorder %s77, 0
      %p527 = por %p525, %p526
      %s529 = sadd.s32 %s528, 1
      %p532 = scmp.eq.s32.totalorder %s71, 1
      %p533 = scmp.ne.s32.totalorder %s528, %s530
      %p534 = scmp.eq.s32.totalorder %s71, 0
      %p535 = por %p533, %p534
      %p536 = scmp.ne.s32.totalorder %s528, %s530
      %p537 = scmp.eq.s32.totalorder %s76, 1
      %p538 = por %p536, %p537
      %p539 = scmp.ne.s32.totalorder %s530, %s531
      %p540 = scmp.eq.s32.totalorder %s76, 0
      %p541 = por %p539, %p540
      %p542 = scmp.ne.s32.totalorder %s530, %s531
      %p543 = scmp.eq.s32.totalorder %s77, 1
      %p544 = por %p542, %p543
      %p546 = scmp.ne.s32.totalorder %s531, %s545
      %p547 = scmp.eq.s32.totalorder %s77, 0
      %p548 = por %p546, %p547
      %s550 = sadd.s32 %s549, 1
      %p553 = scmp.eq.s32.totalorder %s71, 1
      %p554 = scmp.ne.s32.totalorder %s549, %s551
      %p555 = scmp.eq.s32.totalorder %s71, 0
      %p556 = por %p554, %p555
      %p557 = scmp.ne.s32.totalorder %s549, %s551
      %p558 = scmp.eq.s32.totalorder %s76, 1
      %p559 = por %p557, %p558
      %p560 = scmp.ne.s32.totalorder %s551, %s552
      %p561 = scmp.eq.s32.totalorder %s76, 0
      %p562 = por %p560, %p561
      %p563 = scmp.ne.s32.totalorder %s551, %s552
      %p564 = scmp.eq.s32.totalorder %s77, 1
      %p565 = por %p563, %p564
      %p567 = scmp.ne.s32.totalorder %s552, %s566
      %p568 = scmp.eq.s32.totalorder %s77, 0
      %p569 = por %p567, %p568
      %s571 = sadd.s32 %s570, 1
      %p574 = scmp.eq.s32.totalorder %s71, 1
      %p575 = scmp.ne.s32.totalorder %s570, %s572
      %p576 = scmp.eq.s32.totalorder %s71, 0
      %p577 = por %p575, %p576
      %p578 = scmp.ne.s32.totalorder %s570, %s572
      %p579 = scmp.eq.s32.totalorder %s76, 1
      %p580 = por %p578, %p579
      %p581 = scmp.ne.s32.totalorder %s572, %s573
      %p582 = scmp.eq.s32.totalorder %s76, 0
      %p583 = por %p581, %p582
      %p584 = scmp.ne.s32.totalorder %s572, %s573
      %p585 = scmp.eq.s32.totalorder %s77, 1
      %p586 = por %p584, %p585
      %p588 = scmp.ne.s32.totalorder %s573, %s587
      %p589 = scmp.eq.s32.totalorder %s77, 0
      %p590 = por %p588, %p589
      %s592 = sadd.s32 %s591, 1
      %p595 = scmp.eq.s32.totalorder %s71, 1
      %p596 = scmp.ne.s32.totalorder %s591, %s593
      %p597 = scmp.eq.s32.totalorder %s71, 0
      %p598 = por %p596, %p597
      %p599 = scmp.ne.s32.totalorder %s591, %s593
      %p600 = scmp.eq.s32.totalorder %s76, 1
      %p601 = por %p599, %p600
      %p602 = scmp.ne.s32.totalorder %s593, %s594
      %p603 = scmp.eq.s32.totalorder %s76, 0
      %p604 = por %p602, %p603
      %p605 = scmp.ne.s32.totalorder %s593, %s594
      %p606 = scmp.eq.s32.totalorder %s77, 1
      %p607 = por %p605, %p606
      %p609 = scmp.ne.s32.totalorder %s594, %s608
      %p610 = scmp.eq.s32.totalorder %s77, 0
      %p611 = por %p609, %p610
      %s613 = sadd.s32 %s612, 1
      %p616 = scmp.eq.s32.totalorder %s71, 1
      %p617 = scmp.ne.s32.totalorder %s612, %s614
      %p618 = scmp.eq.s32.totalorder %s71, 0
      %p619 = por %p617, %p618
      %p620 = scmp.ne.s32.totalorder %s612, %s614
      %p621 = scmp.eq.s32.totalorder %s76, 1
      %p622 = por %p620, %p621
      %p623 = scmp.ne.s32.totalorder %s614, %s615
      %p624 = scmp.eq.s32.totalorder %s76, 0
      %p625 = por %p623, %p624
      %p626 = scmp.ne.s32.totalorder %s614, %s615
      %p627 = scmp.eq.s32.totalorder %s77, 1
      %p628 = por %p626, %p627
      %p630 = scmp.ne.s32.totalorder %s615, %s629
      %p631 = scmp.eq.s32.totalorder %s77, 0
      %p632 = por %p630, %p631
      %s634 = sadd.s32 %s633, 1
      %p637 = scmp.eq.s32.totalorder %s71, 1
      %p638 = scmp.ne.s32.totalorder %s633, %s635
      %p639 = scmp.eq.s32.totalorder %s71, 0
      %p640 = por %p638, %p639
      %p641 = scmp.ne.s32.totalorder %s633, %s635
      %p642 = scmp.eq.s32.totalorder %s76, 1
      %p643 = por %p641, %p642
      %p644 = scmp.ne.s32.totalorder %s635, %s636
      %p645 = scmp.eq.s32.totalorder %s76, 0
      %p646 = por %p644, %p645
      %p647 = scmp.ne.s32.totalorder %s635, %s636
      %p648 = scmp.eq.s32.totalorder %s77, 1
      %p649 = por %p647, %p648
      %p651 = scmp.ne.s32.totalorder %s636, %s650
      %p652 = scmp.eq.s32.totalorder %s77, 0
      %p653 = por %p651, %p652
      %s655 = sadd.s32 %s654, 1
      %p658 = scmp.eq.s32.totalorder %s71, 1
      %p659 = scmp.ne.s32.totalorder %s654, %s656
      %p660 = scmp.eq.s32.totalorder %s71, 0
      %p661 = por %p659, %p660
      %p662 = scmp.ne.s32.totalorder %s654, %s656
      %p663 = scmp.eq.s32.totalorder %s76, 1
      %p664 = por %p662, %p663
      %p665 = scmp.ne.s32.totalorder %s656, %s657
      %p666 = scmp.eq.s32.totalorder %s76, 0
      %p667 = por %p665, %p666
      %p668 = scmp.ne.s32.totalorder %s656, %s657
      %p669 = scmp.eq.s32.totalorder %s77, 1
      %p670 = por %p668, %p669
      %p672 = scmp.ne.s32.totalorder %s657, %s671
      %p673 = scmp.eq.s32.totalorder %s77, 0
      %p674 = por %p672, %p673
      %s676 = sadd.s32 %s675, 1
      %p679 = scmp.eq.s32.totalorder %s71, 1
      %p680 = scmp.ne.s32.totalorder %s675, %s677
      %p681 = scmp.eq.s32.totalorder %s71, 0
      %p682 = por %p680, %p681
      %p683 = scmp.ne.s32.totalorder %s675, %s677
      %p684 = scmp.eq.s32.totalorder %s76, 1
      %p685 = por %p683, %p684
      %p686 = scmp.ne.s32.totalorder %s677, %s678
      %p687 = scmp.eq.s32.totalorder %s76, 0
      %p688 = por %p686, %p687
      %p689 = scmp.ne.s32.totalorder %s677, %s678
      %p690 = scmp.eq.s32.totalorder %s77, 1
      %p691 = por %p689, %p690
      %p693 = scmp.ne.s32.totalorder %s678, %s692
      %p694 = scmp.eq.s32.totalorder %s77, 0
      %p695 = por %p693, %p694
      %s697 = sadd.s32 %s696, 1
      %p700 = scmp.eq.s32.totalorder %s71, 1
      %p701 = scmp.ne.s32.totalorder %s696, %s698
      %p702 = scmp.eq.s32.totalorder %s71, 0
      %p703 = por %p701, %p702
      %p704 = scmp.ne.s32.totalorder %s696, %s698
      %p705 = scmp.eq.s32.totalorder %s76, 1
      %p706 = por %p704, %p705
      %p707 = scmp.ne.s32.totalorder %s698, %s699
      %p708 = scmp.eq.s32.totalorder %s76, 0
      %p709 = por %p707, %p708
      %p710 = scmp.ne.s32.totalorder %s698, %s699
      %p711 = scmp.eq.s32.totalorder %s77, 1
      %p712 = por %p710, %p711
      %p714 = scmp.ne.s32.totalorder %s699, %s713
      %p715 = scmp.eq.s32.totalorder %s77, 0
      %p716 = por %p714, %p715
      %s718 = sadd.s32 %s717, 1
      %p721 = scmp.eq.s32.totalorder %s71, 1
      %p722 = scmp.ne.s32.totalorder %s717, %s719
      %p723 = scmp.eq.s32.totalorder %s71, 0
      %p724 = por %p722, %p723
      %p725 = scmp.ne.s32.totalorder %s717, %s719
      %p726 = scmp.eq.s32.totalorder %s76, 1
      %p727 = por %p725, %p726
      %p728 = scmp.ne.s32.totalorder %s719, %s720
      %p729 = scmp.eq.s32.totalorder %s76, 0
      %p730 = por %p728, %p729
      %p731 = scmp.ne.s32.totalorder %s719, %s720
      %p732 = scmp.eq.s32.totalorder %s77, 1
      %p733 = por %p731, %p732
      %p735 = scmp.ne.s32.totalorder %s720, %s734
      %p736 = scmp.eq.s32.totalorder %s77, 0
      %p737 = por %p735, %p736
      %s738 = ssub.s32 %s71, %s78
      %p739 = scmp.eq.s32.totalorder %s738, 0
      %s741 = sadd.s32 %s740, 1
      %s742 = scalar_select %p739, %s740, %s741
      %p745 = pneg %p739
      %p746 = scmp.eq.s32.totalorder %s71, 1
      %p747 = por %p745, %p746
      %p748 = scmp.ne.s32.totalorder %s740, %s743
      %p749 = scmp.eq.s32.totalorder %s71, 0
      %p750 = por %p748, %p749
      %p751 = scmp.ne.s32.totalorder %s740, %s743
      %p752 = scmp.eq.s32.totalorder %s76, 1
      %p753 = por %p751, %p752
      %p754 = scmp.ne.s32.totalorder %s743, %s744
      %p755 = scmp.eq.s32.totalorder %s76, 0
      %p756 = por %p754, %p755
      %p757 = scmp.ne.s32.totalorder %s743, %s744
      %p758 = scmp.eq.s32.totalorder %s77, 1
      %p759 = por %p757, %p758
      %p761 = scmp.ne.s32.totalorder %s744, %s760
      %p762 = scmp.eq.s32.totalorder %s77, 0
      %p763 = por %p761, %p762
      %s764 = ssub.s32 %s71, %s78
      %p765 = scmp.eq.s32.totalorder %s764, 0
      %s767 = sadd.s32 %s766, 1
      %s768 = scalar_select %p765, %s766, %s767
      %p771 = pneg %p765
      %p772 = scmp.eq.s32.totalorder %s71, 1
      %p773 = por %p771, %p772
      %p774 = scmp.ne.s32.totalorder %s766, %s769
      %p775 = scmp.eq.s32.totalorder %s71, 0
      %p776 = por %p774, %p775
      %p777 = scmp.ne.s32.totalorder %s766, %s769
      %p778 = scmp.eq.s32.totalorder %s76, 1
      %p779 = por %p777, %p778
      %p780 = scmp.ne.s32.totalorder %s769, %s770
      %p781 = scmp.eq.s32.totalorder %s76, 0
      %p782 = por %p780, %p781
      %p783 = scmp.ne.s32.totalorder %s769, %s770
      %p784 = scmp.eq.s32.totalorder %s77, 1
      %p785 = por %p783, %p784
      %p787 = scmp.ne.s32.totalorder %s770, %s786
      %p788 = scmp.eq.s32.totalorder %s77, 0
      %p789 = por %p787, %p788
      %p790 = scmp.le.s32.totalorder 1, %s71
      %p791 = scmp.lt.s32.totalorder %s71, 3
      %p792 = pnand %p790, %p791
      %p793 = pneg %p792
      // Predicated region
      $region9: #{tpu_custom_call.1} parent=5 // pred_check
        _
      $region10: #{tpu_custom_call.1} parent=5 // pred_check_branch
        %795 = sbr.rel (%p792) target = $region12
      $region11: #{tpu_custom_call.1} parent=5 // pred_region
        %s796 = ssub.s32 %s71, 1
        // Predicated region
        $region13: #{tpu_custom_call.1} parent=11 // pred_check
          %p797 = pneg %p352
        $region14: #{tpu_custom_call.1} parent=11 // pred_check_branch
          %799 = sbr.rel (%p797) target = $region16
        $region15: #{tpu_custom_call.1} parent=11 // pred_region
          _
        $region16: #{tpu_custom_call.1} parent=11 // pred_fallthru
          _
        // Predicated region
        $region17: #{tpu_custom_call.1} parent=11 // pred_check
          %p800 = pneg %p373
        $region18: #{tpu_custom_call.1} parent=11 // pred_check_branch
          %802 = sbr.rel (%p800) target = $region20
        $region19: #{tpu_custom_call.1} parent=11 // pred_region
          _
        $region20: #{tpu_custom_call.1} parent=11 // pred_fallthru
          _
        // Predicated region
        $region21: #{tpu_custom_call.1} parent=11 // pred_check
          %p803 = pneg %p394
        $region22: #{tpu_custom_call.1} parent=11 // pred_check_branch
          %805 = sbr.rel (%p803) target = $region24
        $region23: #{tpu_custom_call.1} parent=11 // pred_region
          _
        $region24: #{tpu_custom_call.1} parent=11 // pred_fallthru
          _
        // Predicated region
        $region25: #{tpu_custom_call.1} parent=11 // pred_check
          %p806 = pneg %p415
        $region26: #{tpu_custom_call.1} parent=11 // pred_check_branch
          %808 = sbr.rel (%p806) target = $region28
        $region27: #{tpu_custom_call.1} parent=11 // pred_region
          _
        $region28: #{tpu_custom_call.1} parent=11 // pred_fallthru
          _
        // Predicated region
        $region29: #{tpu_custom_call.1} parent=11 // pred_check
          %p809 = pneg %p436
        $region30: #{tpu_custom_call.1} parent=11 // pred_check_branch
          %811 = sbr.rel (%p809) target = $region32
        $region31: #{tpu_custom_call.1} parent=11 // pred_region
          _
        $region32: #{tpu_custom_call.1} parent=11 // pred_fallthru
          _
        // Predicated region
        $region33: #{tpu_custom_call.1} parent=11 // pred_check
          %p812 = pneg %p457
        $region34: #{tpu_custom_call.1} parent=11 // pred_check_branch
          %814 = sbr.rel (%p812) target = $region36
        $region35: #{tpu_custom_call.1} parent=11 // pred_region
          _
        $region36: #{tpu_custom_call.1} parent=11 // pred_fallthru
          _
        // Predicated region
        $region37: #{tpu_custom_call.1} parent=11 // pred_check
          %p815 = pneg %p478
        $region38: #{tpu_custom_call.1} parent=11 // pred_check_branch
          %817 = sbr.rel (%p815) target = $region40
        $region39: #{tpu_custom_call.1} parent=11 // pred_region
          _
        $region40: #{tpu_custom_call.1} parent=11 // pred_fallthru
          _
        // Predicated region
        $region41: #{tpu_custom_call.1} parent=11 // pred_check
          %p818 = pneg %p499
        $region42: #{tpu_custom_call.1} parent=11 // pred_check_branch
          %820 = sbr.rel (%p818) target = $region44
        $region43: #{tpu_custom_call.1} parent=11 // pred_region
          _
        $region44: #{tpu_custom_call.1} parent=11 // pred_fallthru
          _
        // Predicated region
        $region45: #{tpu_custom_call.1} parent=11 // pred_check
          %p821 = pneg %p520
        $region46: #{tpu_custom_call.1} parent=11 // pred_check_branch
          %823 = sbr.rel (%p821) target = $region48
        $region47: #{tpu_custom_call.1} parent=11 // pred_region
          _
        $region48: #{tpu_custom_call.1} parent=11 // pred_fallthru
          _
        // Predicated region
        $region49: #{tpu_custom_call.1} parent=11 // pred_check
          %p824 = pneg %p541
        $region50: #{tpu_custom_call.1} parent=11 // pred_check_branch
          %826 = sbr.rel (%p824) target = $region52
        $region51: #{tpu_custom_call.1} parent=11 // pred_region
          _
        $region52: #{tpu_custom_call.1} parent=11 // pred_fallthru
          _
        // Predicated region
        $region53: #{tpu_custom_call.1} parent=11 // pred_check
          %p827 = pneg %p562
        $region54: #{tpu_custom_call.1} parent=11 // pred_check_branch
          %829 = sbr.rel (%p827) target = $region56
        $region55: #{tpu_custom_call.1} parent=11 // pred_region
          _
        $region56: #{tpu_custom_call.1} parent=11 // pred_fallthru
          _
        // Predicated region
        $region57: #{tpu_custom_call.1} parent=11 // pred_check
          %p830 = pneg %p583
        $region58: #{tpu_custom_call.1} parent=11 // pred_check_branch
          %832 = sbr.rel (%p830) target = $region60
        $region59: #{tpu_custom_call.1} parent=11 // pred_region
          _
        $region60: #{tpu_custom_call.1} parent=11 // pred_fallthru
          _
        // Predicated region
        $region61: #{tpu_custom_call.1} parent=11 // pred_check
          %p833 = pneg %p604
        $region62: #{tpu_custom_call.1} parent=11 // pred_check_branch
          %835 = sbr.rel (%p833) target = $region64
        $region63: #{tpu_custom_call.1} parent=11 // pred_region
          _
        $region64: #{tpu_custom_call.1} parent=11 // pred_fallthru
          _
        // Predicated region
        $region65: #{tpu_custom_call.1} parent=11 // pred_check
          %p836 = pneg %p625
        $region66: #{tpu_custom_call.1} parent=11 // pred_check_branch
          %838 = sbr.rel (%p836) target = $region68
        $region67: #{tpu_custom_call.1} parent=11 // pred_region
          _
        $region68: #{tpu_custom_call.1} parent=11 // pred_fallthru
          _
        // Predicated region
        $region69: #{tpu_custom_call.1} parent=11 // pred_check
          %p839 = pneg %p646
        $region70: #{tpu_custom_call.1} parent=11 // pred_check_branch
          %841 = sbr.rel (%p839) target = $region72
        $region71: #{tpu_custom_call.1} parent=11 // pred_region
          _
        $region72: #{tpu_custom_call.1} parent=11 // pred_fallthru
          _
        // Predicated region
        $region73: #{tpu_custom_call.1} parent=11 // pred_check
          %p842 = pneg %p667
        $region74: #{tpu_custom_call.1} parent=11 // pred_check_branch
          %844 = sbr.rel (%p842) target = $region76
        $region75: #{tpu_custom_call.1} parent=11 // pred_region
          _
        $region76: #{tpu_custom_call.1} parent=11 // pred_fallthru
          _
        // Predicated region
        $region77: #{tpu_custom_call.1} parent=11 // pred_check
          %p845 = pneg %p688
        $region78: #{tpu_custom_call.1} parent=11 // pred_check_branch
          %847 = sbr.rel (%p845) target = $region80
        $region79: #{tpu_custom_call.1} parent=11 // pred_region
          _
        $region80: #{tpu_custom_call.1} parent=11 // pred_fallthru
          _
        // Predicated region
        $region81: #{tpu_custom_call.1} parent=11 // pred_check
          %p848 = pneg %p709
        $region82: #{tpu_custom_call.1} parent=11 // pred_check_branch
          %850 = sbr.rel (%p848) target = $region84
        $region83: #{tpu_custom_call.1} parent=11 // pred_region
          _
        $region84: #{tpu_custom_call.1} parent=11 // pred_fallthru
          _
        // Predicated region
        $region85: #{tpu_custom_call.1} parent=11 // pred_check
          %p851 = pneg %p730
        $region86: #{tpu_custom_call.1} parent=11 // pred_check_branch
          %853 = sbr.rel (%p851) target = $region88
        $region87: #{tpu_custom_call.1} parent=11 // pred_region
          _
        $region88: #{tpu_custom_call.1} parent=11 // pred_fallthru
          _
      $region12: #{tpu_custom_call.1} parent=5 // pred_fallthru
        _
      %p854 = scmp.lt.s32.totalorder %s71, 2
      // Predicated region
      $region89: #{tpu_custom_call.1} parent=5 // pred_check
        %p855 = pneg %p854
      $region90: #{tpu_custom_call.1} parent=5 // pred_check_branch
        %857 = sbr.rel (%p855) target = $region92
      $region91: #{tpu_custom_call.1} parent=5 // pred_region
        // Predicated region
        $region93: #{tpu_custom_call.1} parent=91 // pred_check
          %p858 = pneg %p91
        $region94: #{tpu_custom_call.1} parent=91 // pred_check_branch
          %860 = sbr.rel (%p858) target = $region96
        $region95: #{tpu_custom_call.1} parent=91 // pred_region
          %p861 = scmp.lt.s32.totalorder %s71, 1
          %s862 = scalar_select %p861, %s71, 1
          %s863 = smul.addr %s862, 8
          %s864 = scalar_lea.vmem %s1, %s863
        $region96: #{tpu_custom_call.1} parent=91 // pred_fallthru
          _
        // Predicated region
        $region97: #{tpu_custom_call.1} parent=91 // pred_check
          %p865 = pneg %p117
        $region98: #{tpu_custom_call.1} parent=91 // pred_check_branch
          %867 = sbr.rel (%p865) target = $region100
        $region99: #{tpu_custom_call.1} parent=91 // pred_region
          %p868 = scmp.lt.s32.totalorder %s71, 1
          %s869 = scalar_select %p868, %s71, 1
          %s870 = smul.addr %s869, 8
          %s871 = scalar_lea.vmem %s3, %s870
        $region100: #{tpu_custom_call.1} parent=91 // pred_fallthru
          _
        // Predicated region
        $region101: #{tpu_custom_call.1} parent=91 // pred_check
          %p872 = pneg %p143
        $region102: #{tpu_custom_call.1} parent=91 // pred_check_branch
          %874 = sbr.rel (%p872) target = $region104
        $region103: #{tpu_custom_call.1} parent=91 // pred_region
          %p875 = scmp.lt.s32.totalorder %s71, 1
          %s876 = scalar_select %p875, %s71, 1
          %s877 = smul.addr %s876, 4
          %s878 = scalar_lea.vmem %s5, %s877
        $region104: #{tpu_custom_call.1} parent=91 // pred_fallthru
          _
        // Predicated region
        $region105: #{tpu_custom_call.1} parent=91 // pred_check
          %p879 = pneg %p169
        $region106: #{tpu_custom_call.1} parent=91 // pred_check_branch
          %881 = sbr.rel (%p879) target = $region108
        $region107: #{tpu_custom_call.1} parent=91 // pred_region
          %p882 = scmp.lt.s32.totalorder %s71, 1
          %s883 = scalar_select %p882, %s71, 1
          %s884 = smul.addr %s883, 8
          %s885 = scalar_lea.vmem %s7, %s884
        $region108: #{tpu_custom_call.1} parent=91 // pred_fallthru
          _
        // Predicated region
        $region109: #{tpu_custom_call.1} parent=91 // pred_check
          %p886 = pneg %p195
        $region110: #{tpu_custom_call.1} parent=91 // pred_check_branch
          %888 = sbr.rel (%p886) target = $region112
        $region111: #{tpu_custom_call.1} parent=91 // pred_region
          %p889 = scmp.lt.s32.totalorder %s71, 1
          %s890 = scalar_select %p889, %s71, 1
          %s891 = smul.addr %s890, 7
          %s892 = smul.addr %s891, 8
          %s893 = scalar_lea.vmem %s9, %s892
        $region112: #{tpu_custom_call.1} parent=91 // pred_fallthru
          _
        // Predicated region
        $region113: #{tpu_custom_call.1} parent=91 // pred_check
          %p894 = pneg %p221
        $region114: #{tpu_custom_call.1} parent=91 // pred_check_branch
          %896 = sbr.rel (%p894) target = $region116
        $region115: #{tpu_custom_call.1} parent=91 // pred_region
          %p897 = scmp.lt.s32.totalorder %s71, 1
          %s898 = scalar_select %p897, %s71, 1
          %s899 = smul.addr %s898, 7
          %s900 = smul.addr %s899, 8
          %s901 = scalar_lea.vmem %s11, %s900
        $region116: #{tpu_custom_call.1} parent=91 // pred_fallthru
          _
        // Predicated region
        $region117: #{tpu_custom_call.1} parent=91 // pred_check
          %p902 = pneg %p247
        $region118: #{tpu_custom_call.1} parent=91 // pred_check_branch
          %904 = sbr.rel (%p902) target = $region120
        $region119: #{tpu_custom_call.1} parent=91 // pred_region
          %p905 = scmp.lt.s32.totalorder %s71, 1
          %s906 = scalar_select %p905, %s71, 1
          %s907 = scalar_lea.vmem %s13, %s906
        $region120: #{tpu_custom_call.1} parent=91 // pred_fallthru
          _
        // Predicated region
        $region121: #{tpu_custom_call.1} parent=91 // pred_check
          %p908 = pneg %p273
        $region122: #{tpu_custom_call.1} parent=91 // pred_check_branch
          %910 = sbr.rel (%p908) target = $region124
        $region123: #{tpu_custom_call.1} parent=91 // pred_region
          %p911 = scmp.lt.s32.totalorder %s71, 1
          %s912 = scalar_select %p911, %s71, 1
          %s913 = smul.addr %s912, 7
          %s914 = smul.addr %s913, 4
          %s915 = scalar_lea.vmem %s15, %s914
        $region124: #{tpu_custom_call.1} parent=91 // pred_fallthru
          _
        // Predicated region
        $region125: #{tpu_custom_call.1} parent=91 // pred_check
          %p916 = pneg %p299
        $region126: #{tpu_custom_call.1} parent=91 // pred_check_branch
          %918 = sbr.rel (%p916) target = $region128
        $region127: #{tpu_custom_call.1} parent=91 // pred_region
          %p919 = scmp.lt.s32.totalorder %s71, 1
          %s920 = scalar_select %p919, %s71, 1
          %s921 = smul.addr %s920, 8
          %s922 = scalar_lea.vmem %s17, %s921
        $region128: #{tpu_custom_call.1} parent=91 // pred_fallthru
          _
        // Predicated region
        $region129: #{tpu_custom_call.1} parent=91 // pred_check
          %p923 = pneg %p325
        $region130: #{tpu_custom_call.1} parent=91 // pred_check_branch
          %925 = sbr.rel (%p923) target = $region132
        $region131: #{tpu_custom_call.1} parent=91 // pred_region
          %p926 = scmp.lt.s32.totalorder %s71, 1
          %s927 = scalar_select %p926, %s71, 1
          %s928 = smul.addr %s927, 7
          %s929 = smul.addr %s928, 8
          %s930 = scalar_lea.vmem %s19, %s929
        $region132: #{tpu_custom_call.1} parent=91 // pred_fallthru
          _
      $region92: #{tpu_custom_call.1} parent=5 // pred_fallthru
        _
      %p931 = scmp.le.s32.totalorder 1, %s71
      %p932 = scmp.lt.s32.totalorder %s71, 3
      %p933 = pnand %p931, %p932
      %p934 = pneg %p933
      // Predicated region
      $region133: #{tpu_custom_call.1} parent=5 // pred_check
        _
      $region134: #{tpu_custom_call.1} parent=5 // pred_check_branch
        %936 = sbr.rel (%p933) target = $region136
      $region135: #{tpu_custom_call.1} parent=5 // pred_region
        %s937 = ssub.s32 %s71, 1
        %p938 = scmp.lt.s32.totalorder %s76, 1
        %s939 = scalar_select %p938, %s76, 1
        %s940 = smul.addr %s939, 8
        %s941 = scalar_lea.vmem %s1, %s940
        %p942 = pneg %p97
        %p943 = pneg %p94
        %p944 = scmp.lt.s32.totalorder %s76, 1
        %s945 = scalar_select %p944, %s76, 1
        %s946 = smul.addr %s945, 8
        %s947 = scalar_lea.vmem %s3, %s946
        %p948 = pneg %p123
        %p949 = pneg %p120
        %p950 = scmp.lt.s32.totalorder %s76, 1
        %s951 = scalar_select %p950, %s76, 1
        %s952 = smul.addr %s951, 4
        %s953 = scalar_lea.vmem %s5, %s952
        %p954 = pneg %p149
        %p955 = pneg %p146
        %p956 = scmp.lt.s32.totalorder %s76, 1
        %s957 = scalar_select %p956, %s76, 1
        %s958 = smul.addr %s957, 8
        %s959 = scalar_lea.vmem %s7, %s958
        %p960 = pneg %p175
        %p961 = pneg %p172
        %p962 = scmp.lt.s32.totalorder %s76, 1
        %s963 = scalar_select %p962, %s76, 1
        %s964 = smul.addr %s963, 7
        %s965 = smul.addr %s964, 8
        %s966 = scalar_lea.vmem %s9, %s965
        %p967 = pneg %p201
        %p968 = pneg %p198
        %p969 = scmp.lt.s32.totalorder %s76, 1
        %s970 = scalar_select %p969, %s76, 1
        %s971 = smul.addr %s970, 7
        %s972 = smul.addr %s971, 8
        %s973 = scalar_lea.vmem %s11, %s972
        %p974 = pneg %p227
        %p975 = pneg %p224
        %p976 = scmp.lt.s32.totalorder %s76, 1
        %s977 = scalar_select %p976, %s76, 1
        %s978 = scalar_lea.vmem %s13, %s977
        %p979 = pneg %p253
        %p980 = pneg %p250
        %p981 = scmp.lt.s32.totalorder %s76, 1
        %s982 = scalar_select %p981, %s76, 1
        %s983 = smul.addr %s982, 7
        %s984 = smul.addr %s983, 4
        %s985 = scalar_lea.vmem %s15, %s984
        %p986 = pneg %p279
        %p987 = pneg %p276
        %p988 = scmp.lt.s32.totalorder %s76, 1
        %s989 = scalar_select %p988, %s76, 1
        %s990 = smul.addr %s989, 8
        %s991 = scalar_lea.vmem %s17, %s990
        %p992 = pneg %p305
        %p993 = pneg %p302
        %p994 = scmp.lt.s32.totalorder %s76, 1
        %s995 = scalar_select %p994, %s76, 1
        %s996 = smul.addr %s995, 7
        %s997 = smul.addr %s996, 8
        %s998 = scalar_lea.vmem %s19, %s997
        %p999 = pneg %p331
        %p1000 = pneg %p328
        %p1001 = pneg %p352
        %p1002 = pneg %p349
        %p1003 = pneg %p373
        %p1004 = pneg %p370
        %p1005 = pneg %p394
        %p1006 = pneg %p391
        %p1007 = pneg %p415
        %p1008 = pneg %p412
        %p1009 = pneg %p436
        %p1010 = pneg %p433
        %p1011 = pneg %p457
        %p1012 = pneg %p454
        %p1013 = pneg %p478
        %p1014 = pneg %p475
        %p1015 = pneg %p499
        %p1016 = pneg %p496
        %p1017 = pneg %p520
        %p1018 = pneg %p517
        %p1019 = pneg %p541
        %p1020 = pneg %p538
        %p1021 = pneg %p562
        %p1022 = pneg %p559
        %p1023 = pneg %p583
        %p1024 = pneg %p580
        %p1025 = pneg %p604
        %p1026 = pneg %p601
        %p1027 = pneg %p625
        %p1028 = pneg %p622
        %p1029 = pneg %p646
        %p1030 = pneg %p643
        %p1031 = pneg %p667
        %p1032 = pneg %p664
        %p1033 = pneg %p688
        %p1034 = pneg %p685
        %p1035 = pneg %p709
        %p1036 = pneg %p706
        %p1037 = pneg %p730
        %p1038 = pneg %p727
        %p1039 = pneg %p756
        %p1040 = pneg %p753
        %s1041 = sand.u32 %s743, 1
        %s1042 = scalar_lea.sflag [#allocation3], %s1041
        %s1043 = sand.u32 %s743, 1
        %s1044 = smul.addr %s1043, 8
        %s1045 = scalar_lea.vmem [#allocation2], %s1044
        %p1046 = pneg %p782
        %p1047 = pneg %p779
        %p1048 = scmp.lt.s32.totalorder %s76, 1
        %s1049 = scalar_select %p1048, %s76, 1
        %s1050 = smul.addr %s1049, 8
        %s1051 = scalar_lea.vmem %s61, %s1050
        %p1052 = scmp.lt.s32.totalorder %s76, 1
        %s1053 = scalar_select %p1052, %s76, 1
        %s1054 = smul.addr %s1053, 8
        %s1055 = scalar_lea.vmem %s1, %s1054
        %p1056 = scmp.lt.s32.totalorder %s76, 1
        %s1057 = scalar_select %p1056, %s76, 1
        %s1058 = smul.addr %s1057, 8
        %s1059 = scalar_lea.vmem %s3, %s1058
        %p1060 = scmp.lt.s32.totalorder %s76, 1
        %s1061 = scalar_select %p1060, %s76, 1
        %s1062 = smul.addr %s1061, 4
        %s1063 = scalar_lea.vmem %s5, %s1062
        %p1064 = scmp.lt.s32.totalorder %s76, 1
        %s1065 = scalar_select %p1064, %s76, 1
        %s1066 = smul.addr %s1065, 8
        %s1067 = scalar_lea.vmem %s7, %s1066
        %p1068 = scmp.lt.s32.totalorder %s76, 1
        %s1069 = scalar_select %p1068, %s76, 1
        %s1070 = smul.addr %s1069, 7
        %s1071 = smul.addr %s1070, 8
        %s1072 = scalar_lea.vmem %s9, %s1071
        %p1073 = scmp.lt.s32.totalorder %s76, 1
        %s1074 = scalar_select %p1073, %s76, 1
        %s1075 = smul.addr %s1074, 7
        %s1076 = smul.addr %s1075, 8
        %s1077 = scalar_lea.vmem %s11, %s1076
        %p1078 = scmp.lt.s32.totalorder %s76, 1
        %s1079 = scalar_select %p1078, %s76, 1
        %s1080 = scalar_lea.vmem %s13, %s1079
        %p1081 = scmp.lt.s32.totalorder %s76, 1
        %s1082 = scalar_select %p1081, %s76, 1
        %s1083 = smul.addr %s1082, 7
        %s1084 = smul.addr %s1083, 4
        %s1085 = scalar_lea.vmem %s15, %s1084
        %p1086 = scmp.lt.s32.totalorder %s76, 1
        %s1087 = scalar_select %p1086, %s76, 1
        %s1088 = smul.addr %s1087, 8
        %s1089 = scalar_lea.vmem %s17, %s1088
        %p1090 = scmp.lt.s32.totalorder %s76, 1
        %s1091 = scalar_select %p1090, %s76, 1
        %s1092 = smul.addr %s1091, 7
        %s1093 = smul.addr %s1092, 8
        %s1094 = scalar_lea.vmem %s19, %s1093
        %p1095 = scmp.lt.s32.totalorder %s76, 1
        %s1096 = scalar_select %p1095, %s76, 1
        %s1097 = smul.addr %s1096, 8
        %s1098 = scalar_lea.vmem %s61, %s1097
        %v1100 = vld [vmem:[%s1055] sm:$0xff]
        %v1101 = vld [vmem:[%s1059] sm:$0xff]
        %v1102 = vld [vmem:[%s1063] sm:$0x7]
        %v1103 = vld [vmem:[%s1067] sm:$0xff]
        %v1104 = vld [vmem:[%s1072] sm:$0xff]
        %v1105 = vld [vmem:[%s1072 + $0x8] sm:$0xff]
        %v1106 = vld [vmem:[%s1072 + $0x10] sm:$0xff]
        %v1107 = vld [vmem:[%s1072 + $0x18] sm:$0xff]
        %v1108 = vld [vmem:[%s1072 + $0x20] sm:$0xff]
        %v1109 = vld [vmem:[%s1072 + $0x28] sm:$0xff]
        %v1110 = vld [vmem:[%s1072 + $0x30] sm:$0xff]
        %v1111 = vld [vmem:[%s1077] sm:$0xff]
        %v1112 = vld [vmem:[%s1077 + $0x8] sm:$0xff]
        %v1113 = vld [vmem:[%s1077 + $0x10] sm:$0xff]
        %v1114 = vld [vmem:[%s1077 + $0x18] sm:$0xff]
        %v1115 = vld [vmem:[%s1077 + $0x20] sm:$0xff]
        %v1116 = vld [vmem:[%s1077 + $0x28] sm:$0xff]
        %v1117 = vld [vmem:[%s1077 + $0x30] sm:$0xff]
        %v1118 = vld [vmem:[%s1080] sm:$0x1]
        %v1119 = vld [vmem:[%s1085] sm:$0xf]
        %v1120 = vld [vmem:[%s1085 + $0x4] sm:$0xf]
        %v1121 = vld [vmem:[%s1085 + $0x8] sm:$0xf]
        %v1122 = vld [vmem:[%s1085 + $0xc] sm:$0xf]
        %v1123 = vld [vmem:[%s1085 + $0x10] sm:$0xf]
        %v1124 = vld [vmem:[%s1085 + $0x14] sm:$0xf]
        %v1125 = vld [vmem:[%s1085 + $0x18] sm:$0xf]
        %v1126 = vld [vmem:[%s1089] sm:$0xff]
        %v1127 = vld [vmem:[%s1094] sm:$0xff]
        %v1128 = vld [vmem:[%s1094 + $0x8] sm:$0xff]
        %v1129 = vld [vmem:[%s1094 + $0x10] sm:$0xff]
        %v1130 = vld [vmem:[%s1094 + $0x18] sm:$0xff]
        %v1131 = vld [vmem:[%s1094 + $0x20] sm:$0xff]
        %v1132 = vld [vmem:[%s1094 + $0x28] sm:$0xff]
        %v1133 = vld [vmem:[%s1094 + $0x30] sm:$0xff]
        %v1134 = vlaneseq
        %v1135 = vand.u32 %v1134, 127
        %1136 = vset.pattern.permute.xlu0 0
        %1137 = vperm.xlu0 %1136, %v1104
        %v1138 = vpop.permute.xlu0 %1137
        %1139 = vset.pattern.permute.xlu0 0
        %1140 = vperm.xlu0 %1139, %v1105
        %v1141 = vpop.permute.xlu0 %1140
        %1142 = vset.pattern.permute.xlu0 0
        %1143 = vperm.xlu0 %1142, %v1106
        %v1144 = vpop.permute.xlu0 %1143
        %1145 = vset.pattern.permute.xlu0 0
        %1146 = vperm.xlu0 %1145, %v1107
        %v1147 = vpop.permute.xlu0 %1146
        %1148 = vset.pattern.permute.xlu0 0
        %1149 = vperm.xlu0 %1148, %v1108
        %v1150 = vpop.permute.xlu0 %1149
        %1151 = vset.pattern.permute.xlu0 0
        %1152 = vperm.xlu0 %1151, %v1109
        %v1153 = vpop.permute.xlu0 %1152
        %1154 = vset.pattern.permute.xlu0 0
        %1155 = vperm.xlu0 %1154, %v1110
        %v1156 = vpop.permute.xlu0 %1155
        %vm1157 = vcmp.eq.s32.totalorder %v1135, %v1138
        %vm1158 = vcmp.eq.s32.totalorder %v1135, %v1141
        %vm1159 = vcmp.eq.s32.totalorder %v1135, %v1144
        %vm1160 = vcmp.eq.s32.totalorder %v1135, %v1147
        %vm1161 = vcmp.eq.s32.totalorder %v1135, %v1150
        %vm1162 = vcmp.eq.s32.totalorder %v1135, %v1153
        %vm1163 = vcmp.eq.s32.totalorder %v1135, %v1156
        %v1164 = vsel %vm1157, 1.0, 0.0
        %v1165 = vsel %vm1158, 1.0, 0.0
        %v1166 = vsel %vm1159, 1.0, 0.0
        %v1167 = vsel %vm1160, 1.0, 0.0
        %v1168 = vsel %vm1161, 1.0, 0.0
        %v1169 = vsel %vm1162, 1.0, 0.0
        %v1170 = vsel %vm1163, 1.0, 0.0
        %v1171 = vpack.c.bf16 %v1165, %v1164
        %v1172 = vpack.c.bf16 %v1167, %v1166
        %v1173 = vpack.c.bf16 %v1169, %v1168
        %v1174 = vpack.c.bf16 %v1170, %v1170
        %1175 = vset.pattern.permute.xlu0 0
        %1176 = vperm.xlu0 %1175, %v1111
        %v1177 = vpop.permute.xlu0 %1176
        %1178 = vset.pattern.permute.xlu0 0
        %1179 = vperm.xlu0 %1178, %v1112
        %v1180 = vpop.permute.xlu0 %1179
        %1181 = vset.pattern.permute.xlu0 0
        %1182 = vperm.xlu0 %1181, %v1113
        %v1183 = vpop.permute.xlu0 %1182
        %1184 = vset.pattern.permute.xlu0 0
        %1185 = vperm.xlu0 %1184, %v1114
        %v1186 = vpop.permute.xlu0 %1185
        %1187 = vset.pattern.permute.xlu0 0
        %1188 = vperm.xlu0 %1187, %v1115
        %v1189 = vpop.permute.xlu0 %1188
        %1190 = vset.pattern.permute.xlu0 0
        %1191 = vperm.xlu0 %1190, %v1116
        %v1192 = vpop.permute.xlu0 %1191
        %1193 = vset.pattern.permute.xlu0 0
        %1194 = vperm.xlu0 %1193, %v1117
        %v1195 = vpop.permute.xlu0 %1194
        %vm1196 = vcmp.eq.s32.totalorder %v1135, %v1177
        %vm1197 = vcmp.eq.s32.totalorder %v1135, %v1180
        %vm1198 = vcmp.eq.s32.totalorder %v1135, %v1183
        %vm1199 = vcmp.eq.s32.totalorder %v1135, %v1186
        %vm1200 = vcmp.eq.s32.totalorder %v1135, %v1189
        %vm1201 = vcmp.eq.s32.totalorder %v1135, %v1192
        %vm1202 = vcmp.eq.s32.totalorder %v1135, %v1195
        %v1203 = vsel %vm1196, 1.0, 0.0
        %v1204 = vsel %vm1197, 1.0, 0.0
        %v1205 = vsel %vm1198, 1.0, 0.0
        %v1206 = vsel %vm1199, 1.0, 0.0
        %v1207 = vsel %vm1200, 1.0, 0.0
        %v1208 = vsel %vm1201, 1.0, 0.0
        %v1209 = vsel %vm1202, 1.0, 0.0
        %v1210 = vpack.c.bf16 %v1204, %v1203
        %v1211 = vpack.c.bf16 %v1206, %v1205
        %v1212 = vpack.c.bf16 %v1208, %v1207
        %v1213 = vpack.c.bf16 %v1209, %v1209
        %v1214 = vlaneseq
        %v1215 = vshrl.u32 %v1214, 7
        %v1216 = vperm.slane %v1118, 0
        %vm1217 = vcmp.eq.s32.totalorder %v1215, %v1216
        %v1218 = vsel %vm1217, 1.0, 0.0
        %v1219 = vpack.c.bf16 %v1218, %v1218
        %v1220 = vperm.slane %v1102, 0
        %1222 = vset.pattern.permute.xlu0 0
        %1223 = vperm.xlu0 %1222, %v1101
        %v1224 = vpop.permute.xlu0 %1223
        %v1226 = vsub.f32 %v1220, %v1224
        %v1227 = vmul.f32 %v1226, %v1226
        %v1228 = vadd.f32 %v1227, 0.0
        %v1229 = vperm.slane %v1102, 1
        %1230 = vset.pattern.permute.xlu0 1
        %1231 = vperm.xlu0 %1230, %v1101
        %v1232 = vpop.permute.xlu0 %1231
        %v1234 = vsub.f32 %v1229, %v1232
        %v1235 = vmul.f32 %v1234, %v1234
        %v1236 = vadd.f32 %v1228, %v1235
        %v1237 = vperm.slane %v1102, 2
        %1238 = vset.pattern.permute.xlu0 2
        %1239 = vperm.xlu0 %1238, %v1101
        %v1240 = vpop.permute.xlu0 %1239
        %v1242 = vsub.f32 %v1237, %v1240
        %v1243 = vmul.f32 %v1242, %v1242
        %v1244 = vadd.f32 %v1236, %v1243
        %v1245 = vrsqrt.pop %v1244
        %v1246 = vmul.f32 %v1245, %v1244
        %v1247 = vmul.f32 %v1246, %v1245
        %v1248 = vmul.f32 0.5, %v1247
        %v1249 = vsub.f32 1.5, %v1248
        %v1250 = vmul.f32 %v1245, %v1249
        %v1251 = vmul.f32 %v1244, %v1250
        %vm1252 = vcmp.eq.f32.partialorder %v1244, inf
        %v1253 = vsel %vm1252, %v1244, %v1251
        %vm1254 = vcmp.eq.f32.partialorder %v1244, 0.0
        %v1255 = vand.u32 %v1244, 2147483648
        %v1256 = vsel %vm1254, %v1255, %v1253
        %vm1257 = vcmask 64512
        %v1258 = vsel %vm1257, %v1256, 0.0
        %1259 = vadd.xlane.f32.xlu0 %v1258
        %v1260 = vpop.xlane.xlu0 %1259
        %v1261 = vadd.f32 %v1260, 1.0
        %v1262 = vrcp.pop %v1261
        %v1263 = vmul.f32 %v1261, %v1262
        %v1264 = vsub.f32 1.0, %v1263
        %v1265 = vmul.f32 %v1262, %v1264
        %v1266 = vadd.f32 %v1262, %v1265
        %vm1267 = vweird.f32 %v1261
        %vm1268 = vweird.f32 %v1262
        %vm1269 = vmor %vm1267, %vm1268
        %v1270 = vsel %vm1269, %v1262, %v1266
        %v1271 = vand.u32 2147483647, %v1261
        %vm1272 = vcmp.eq.f32.partialorder %v1271, 8.507059e+37
        %v1273 = vand.u32 %v1261, 2147483648
        %v1274 = vor.u32 1.1754944e-38, %v1273
        %v1275 = vsel %vm1272, %v1274, %v1270
        %v1276 = vmul.f32 %v1256, %v1275
        %1278 = vset.pattern.permute.xlu0 0
        %1279 = vperm.xlu0 %1278, %v1126
        %v1280 = vpop.permute.xlu0 %1279
        %v1282 = vmul.f32 %v1276, %v1280
        %v1283 = vld [vmem:[%s47] sm:$0xff]
        %v1284 = vld [vmem:[%s47 + $0x8] sm:$0xff]
        %v1285 = vld [vmem:[%s47 + $0x10] sm:$0xff]
        %v1286 = vld [vmem:[%s47 + $0x18] sm:$0xff]
        %v1287 = vld [vmem:[%s49] sm:$0x1]
        %v1288 = vld [vmem:[%s51] sm:$0xff]
        %v1289 = vld [vmem:[%s51 + $0x8] sm:$0xff]
        %v1290 = vld [vmem:[%s51 + $0x10] sm:$0xff]
        %v1291 = vld [vmem:[%s51 + $0x18] sm:$0xff]
        %v1292 = vld [vmem:[%s53] sm:$0x1]
        %v1293 = vld [vmem:[%s55] sm:$0x1]
        %v1294 = vld [vmem:[%s57] sm:$0x1]
        loop: start=0, step=1, limit=2
        $region137: #{tpu_custom_call.1} parent=135 // loop_pre_header
          _
        $region138: #{tpu_custom_call.1} parent=135 // loop_header
          %s1296 = sphi 0, %s1300
          %p1297 = scmp.ge.s32.totalorder %s1296, 2
          %v1301 = vphi %v1100, %v2948
        $region139: #{tpu_custom_call.1} parent=135 // loop_header_branch
          %1299 = sbr.rel (%p1297) target = $region143
        $region140: #{tpu_custom_call.1} parent=135 // loop_body
          %s1302 = smul.u32 %s1296, 4
          %s1303 = smul.addr %s1302, 4
          %s1304 = scalar_lea.vmem %s21, %s1303
          %v1305 = vld [vmem:[%s1304] sm:$0xf]
          %v1306 = vld [vmem:[%s1304 + $0x4] sm:$0xf]
          %v1307 = vld [vmem:[%s1304 + $0x8] sm:$0xf]
          %v1308 = vld [vmem:[%s1304 + $0xc] sm:$0xf]
          %s1309 = smul.addr %s1302, 4
          %s1310 = scalar_lea.vmem %s23, %s1309
          %v1311 = vld [vmem:[%s1310] sm:$0xf]
          %v1312 = vld [vmem:[%s1310 + $0x4] sm:$0xf]
          %v1313 = vld [vmem:[%s1310 + $0x8] sm:$0xf]
          %v1314 = vld [vmem:[%s1310 + $0xc] sm:$0xf]
          %s1315 = scalar_lea.vmem %s25, %s1296
          %v1316 = vld [vmem:[%s1315] sm:$0x1]
          %s1317 = smul.addr %s1302, 4
          %s1318 = scalar_lea.vmem %s27, %s1317
          %v1319 = vld [vmem:[%s1318] sm:$0xf]
          %v1320 = vld [vmem:[%s1318 + $0x4] sm:$0xf]
          %v1321 = vld [vmem:[%s1318 + $0x8] sm:$0xf]
          %v1322 = vld [vmem:[%s1318 + $0xc] sm:$0xf]
          %s1323 = scalar_lea.vmem %s29, %s1296
          %v1324 = vld [vmem:[%s1323] sm:$0x1]
          %s1325 = scalar_lea.vmem %s31, %s1296
          %v1326 = vld [vmem:[%s1325] sm:$0x1]
          %s1327 = scalar_lea.vmem %s33, %s1296
          %v1328 = vld [vmem:[%s1327] sm:$0x1]
          %s1329 = smul.u32 %s1296, 8
          %s1330 = smul.addr %s1329, 4
          %s1331 = scalar_lea.vmem %s35, %s1330
          %v1332 = vld [vmem:[%s1331] sm:$0xf]
          %v1333 = vld [vmem:[%s1331 + $0x4] sm:$0xf]
          %v1334 = vld [vmem:[%s1331 + $0x8] sm:$0xf]
          %v1335 = vld [vmem:[%s1331 + $0xc] sm:$0xf]
          %v1336 = vld [vmem:[%s1331 + $0x10] sm:$0xf]
          %v1337 = vld [vmem:[%s1331 + $0x14] sm:$0xf]
          %v1338 = vld [vmem:[%s1331 + $0x18] sm:$0xf]
          %v1339 = vld [vmem:[%s1331 + $0x1c] sm:$0xf]
          %s1340 = scalar_lea.vmem %s37, %s1296
          %v1341 = vld [vmem:[%s1340] sm:$0x1]
          %s1342 = smul.addr %s1302, 4
          %s1343 = scalar_lea.vmem %s39, %s1342
          %v1344 = vld [vmem:[%s1343] sm:$0xf]
          %v1345 = vld [vmem:[%s1343 + $0x4] sm:$0xf]
          %v1346 = vld [vmem:[%s1343 + $0x8] sm:$0xf]
          %v1347 = vld [vmem:[%s1343 + $0xc] sm:$0xf]
          %s1348 = scalar_lea.vmem %s41, %s1296
          %v1349 = vld [vmem:[%s1348] sm:$0x1]
          %s1350 = scalar_lea.vmem %s43, %s1296
          %v1351 = vld [vmem:[%s1350] sm:$0x1]
          %s1352 = scalar_lea.vmem %s45, %s1296
          %v1353 = vld [vmem:[%s1352] sm:$0x1]
          %v1354 = vpack.c.bf16 %v1301, %v1301
          %v1359 = vunpack.c.l.b16 %v1305
          %v1360 = vunpack.c.l.b16 %v1306
          %v1361 = vunpack.c.l.b16 %v1307
          %v1362 = vunpack.c.l.b16 %v1308
          %v1363 = vpack.c.b16 %v1360, %v1359
          %v1364 = vpack.c.b16 %v1362, %v1361
          %vm1367 = vcmask 261120
          %v1369 = vsel %vm1367, %v1354, 0
          %1371 = vmatpush.bf16.msra.mxu0 0
          %1372 = vmatpush.bf16.msra.mxu0 0
          %1373 = vmatpush.bf16.msra.mxu0 0
          %1374 = vmatpush.bf16.msra.mxu0 0
          %1375 = vmatpush.bf16.msra.mxu0 0
          %1376 = vmatpush.bf16.msra.mxu0 0
          %1377 = vmatpush.bf16.msra.mxu0 %v1364
          %1378 = vmatpush.bf16.msra.mxu0 %v1363
          %1379 = vmatmul.bf16.gmra.mxu0 %v1369
          %v1380 = vpop.f32.mrf.mxu0
          %v1381 = vadd.f32 0.0, %v1380
          %v1382 = vpop.f32.mrf.mxu0
          %1383 = vdwg.mxu0
          %v1384 = vpack.c.bf16 %v1381, %v1381
          %1386 = vrot.lane.b32.xlu0 %v1384, 96
          %v1387 = vpop.permute.xlu0 %1386
          %v1389 = vsel %vm1257, %v1210, 0
          %v1392 = vsel %vm1257, %v1211, 0
          %v1395 = vsel %vm1257, %v1212, 0
          %v1398 = vsel %vm1257, %v1213, 0
          %vm1400 = vcmask 1043456
          %v1402 = vsel %vm1400, %v1387, 0
          %1404 = vmatpush.bf16.msra.mxu0 0
          %1405 = vmatpush.bf16.msra.mxu0 0
          %1406 = vmatpush.bf16.msra.mxu0 0
          %1407 = vmatpush.bf16.msra.mxu0 0
          %1408 = vmatpush.bf16.msra.mxu0 0
          %1409 = vmatpush.bf16.msra.mxu0 0
          %1410 = vmatpush.bf16.msra.mxu0 0
          %1411 = vmatpush.bf16.msra.mxu0 %v1402
          %1412 = vmatmul.bf16.gmra.mxu0 %v1389
          %v1413 = vpop.f32.mrf.mxu0
          %v1414 = vadd.f32 0.0, %v1413
          %v1415 = vpop.f32.mrf.mxu0
          %v1416 = vadd.f32 0.0, %v1415
          %1417 = vmatmul.bf16.gmra.mxu0 %v1392
          %v1418 = vpop.f32.mrf.mxu0
          %v1419 = vadd.f32 0.0, %v1418
          %v1420 = vpop.f32.mrf.mxu0
          %v1421 = vadd.f32 0.0, %v1420
          %1422 = vmatmul.bf16.gmra.mxu0 %v1395
          %v1423 = vpop.f32.mrf.mxu0
          %v1424 = vadd.f32 0.0, %v1423
          %v1425 = vpop.f32.mrf.mxu0
          %v1426 = vadd.f32 0.0, %v1425
          %1427 = vmatmul.bf16.gmra.mxu0 %v1398
          %v1428 = vpop.f32.mrf.mxu0
          %v1429 = vadd.f32 0.0, %v1428
          %v1430 = vpop.f32.mrf.mxu0
          %1431 = vdwg.mxu0
          %v1433 = vsel %vm1257, %v1171, 0
          %v1436 = vsel %vm1257, %v1172, 0
          %v1439 = vsel %vm1257, %v1173, 0
          %v1442 = vsel %vm1257, %v1174, 0
          %v1445 = vsel %vm1400, %v1384, 0
          %1447 = vmatpush.bf16.msra.mxu0 0
          %1448 = vmatpush.bf16.msra.mxu0 0
          %1449 = vmatpush.bf16.msra.mxu0 0
          %1450 = vmatpush.bf16.msra.mxu0 0
          %1451 = vmatpush.bf16.msra.mxu0 0
          %1452 = vmatpush.bf16.msra.mxu0 0
          %1453 = vmatpush.bf16.msra.mxu0 0
          %1454 = vmatpush.bf16.msra.mxu0 %v1445
          %1455 = vmatmul.bf16.gmra.mxu0 %v1433
          %v1456 = vpop.f32.mrf.mxu0
          %v1457 = vadd.f32 %v1414, %v1456
          %v1458 = vpop.f32.mrf.mxu0
          %v1459 = vadd.f32 %v1416, %v1458
          %1460 = vmatmul.bf16.gmra.mxu0 %v1436
          %v1461 = vpop.f32.mrf.mxu0
          %v1462 = vadd.f32 %v1419, %v1461
          %v1463 = vpop.f32.mrf.mxu0
          %v1464 = vadd.f32 %v1421, %v1463
          %1465 = vmatmul.bf16.gmra.mxu0 %v1439
          %v1466 = vpop.f32.mrf.mxu0
          %v1467 = vadd.f32 %v1424, %v1466
          %v1468 = vpop.f32.mrf.mxu0
          %v1469 = vadd.f32 %v1426, %v1468
          %1470 = vmatmul.bf16.gmra.mxu0 %v1442
          %v1471 = vpop.f32.mrf.mxu0
          %v1472 = vadd.f32 %v1429, %v1471
          %v1473 = vpop.f32.mrf.mxu0
          %1474 = vdwg.mxu0
          %1476 = vset.pattern.permute.xlu0 0
          %1477 = vperm.xlu0 %1476, %v1127
          %v1478 = vpop.permute.xlu0 %1477
          %1481 = vset.pattern.permute.xlu0 0
          %1482 = vperm.xlu0 %1481, %v1128
          %v1483 = vpop.permute.xlu0 %1482
          %1486 = vset.pattern.permute.xlu0 0
          %1487 = vperm.xlu0 %1486, %v1129
          %v1488 = vpop.permute.xlu0 %1487
          %1491 = vset.pattern.permute.xlu0 0
          %1492 = vperm.xlu0 %1491, %v1130
          %v1493 = vpop.permute.xlu0 %1492
          %1496 = vset.pattern.permute.xlu0 0
          %1497 = vperm.xlu0 %1496, %v1131
          %v1498 = vpop.permute.xlu0 %1497
          %1501 = vset.pattern.permute.xlu0 0
          %1502 = vperm.xlu0 %1501, %v1132
          %v1503 = vpop.permute.xlu0 %1502
          %1506 = vset.pattern.permute.xlu0 0
          %1507 = vperm.xlu0 %1506, %v1133
          %v1508 = vpop.permute.xlu0 %1507
          %v1510 = vmul.f32 %v1478, %v1457
          %v1511 = vmul.f32 %v1483, %v1459
          %v1512 = vmul.f32 %v1488, %v1462
          %v1513 = vmul.f32 %v1493, %v1464
          %v1514 = vmul.f32 %v1498, %v1467
          %v1515 = vmul.f32 %v1503, %v1469
          %v1516 = vmul.f32 %v1508, %v1472
          %v1524 = vunpack.c.l.b16 %v1119
          %v1525 = vunpack.c.l.b16 %v1120
          %v1526 = vunpack.c.l.b16 %v1121
          %v1527 = vunpack.c.l.b16 %v1122
          %v1528 = vunpack.c.l.b16 %v1123
          %v1529 = vunpack.c.l.b16 %v1124
          %v1530 = vunpack.c.l.b16 %v1125
          %v1531 = vpack.c.b16 %v1525, %v1524
          %v1532 = vpack.c.b16 %v1527, %v1526
          %v1533 = vpack.c.b16 %v1529, %v1528
          %v1534 = vpack.c.b16 %v1530, %v1530
          %v1539 = vunpack.c.l.b16 %v1311
          %v1540 = vunpack.c.l.b16 %v1312
          %v1541 = vunpack.c.l.b16 %v1313
          %v1542 = vunpack.c.l.b16 %v1314
          %v1543 = vpack.c.b16 %v1540, %v1539
          %v1544 = vpack.c.b16 %v1542, %v1541
          %v1548 = vsel %vm1367, %v1531, 0
          %v1551 = vsel %vm1367, %v1532, 0
          %v1554 = vsel %vm1367, %v1533, 0
          %v1557 = vsel %vm1367, %v1534, 0
          %1559 = vmatpush.bf16.msra.mxu0 0
          %1560 = vmatpush.bf16.msra.mxu0 0
          %1561 = vmatpush.bf16.msra.mxu0 0
          %1562 = vmatpush.bf16.msra.mxu0 0
          %1563 = vmatpush.bf16.msra.mxu0 0
          %1564 = vmatpush.bf16.msra.mxu0 0
          %1565 = vmatpush.bf16.msra.mxu0 %v1544
          %1566 = vmatpush.bf16.msra.mxu0 %v1543
          %1567 = vmatmul.bf16.gmra.mxu0 %v1548
          %v1568 = vpop.f32.mrf.mxu0
          %v1569 = vadd.f32 0.0, %v1568
          %v1570 = vpop.f32.mrf.mxu0
          %v1571 = vadd.f32 0.0, %v1570
          %1572 = vmatmul.bf16.gmra.mxu0 %v1551
          %v1573 = vpop.f32.mrf.mxu0
          %v1574 = vadd.f32 0.0, %v1573
          %v1575 = vpop.f32.mrf.mxu0
          %v1576 = vadd.f32 0.0, %v1575
          %1577 = vmatmul.bf16.gmra.mxu0 %v1554
          %v1578 = vpop.f32.mrf.mxu0
          %v1579 = vadd.f32 0.0, %v1578
          %v1580 = vpop.f32.mrf.mxu0
          %v1581 = vadd.f32 0.0, %v1580
          %1582 = vmatmul.bf16.gmra.mxu0 %v1557
          %v1583 = vpop.f32.mrf.mxu0
          %v1584 = vadd.f32 0.0, %v1583
          %v1585 = vpop.f32.mrf.mxu0
          %1586 = vdwg.mxu0
          %v1587 = vadd.f32 %v1510, %v1569
          %v1588 = vadd.f32 %v1511, %v1571
          %v1589 = vadd.f32 %v1512, %v1574
          %v1590 = vadd.f32 %v1513, %v1576
          %v1591 = vadd.f32 %v1514, %v1579
          %v1592 = vadd.f32 %v1515, %v1581
          %v1593 = vadd.f32 %v1516, %v1584
          %v1595 = vperm.slane %v1316, 0
          %v1597 = vadd.f32 %v1587, %v1595
          %v1598 = vadd.f32 %v1588, %v1595
          %v1599 = vadd.f32 %v1589, %v1595
          %v1600 = vadd.f32 %v1590, %v1595
          %v1601 = vadd.f32 %v1591, %v1595
          %v1602 = vadd.f32 %v1592, %v1595
          %v1603 = vadd.f32 %v1593, %v1595
          %v1604 = vxor.u32 %v1597, 2147483648
          %v1605 = vxor.u32 %v1598, 2147483648
          %v1606 = vxor.u32 %v1599, 2147483648
          %v1607 = vxor.u32 %v1600, 2147483648
          %v1608 = vxor.u32 %v1601, 2147483648
          %v1609 = vxor.u32 %v1602, 2147483648
          %v1610 = vxor.u32 %v1603, 2147483648
          %v1611 = vmul.f32 %v1604, 1.442695
          %v1612 = vpow.pop %v1611
          %v1613 = vmul.f32 %v1605, 1.442695
          %v1614 = vpow.pop %v1613
          %v1615 = vmul.f32 %v1606, 1.442695
          %v1616 = vpow.pop %v1615
          %v1617 = vmul.f32 %v1607, 1.442695
          %v1618 = vpow.pop %v1617
          %v1619 = vmul.f32 %v1608, 1.442695
          %v1620 = vpow.pop %v1619
          %v1621 = vmul.f32 %v1609, 1.442695
          %v1622 = vpow.pop %v1621
          %v1623 = vmul.f32 %v1610, 1.442695
          %v1624 = vpow.pop %v1623
          %v1625 = vadd.f32 %v1612, 1.0
          %v1626 = vadd.f32 %v1614, 1.0
          %v1627 = vadd.f32 %v1616, 1.0
          %v1628 = vadd.f32 %v1618, 1.0
          %v1629 = vadd.f32 %v1620, 1.0
          %v1630 = vadd.f32 %v1622, 1.0
          %v1631 = vadd.f32 %v1624, 1.0
          %v1632 = vrcp.pop %v1625
          %v1633 = vmul.f32 %v1625, %v1632
          %v1634 = vsub.f32 1.0, %v1633
          %v1635 = vmul.f32 %v1632, %v1634
          %v1636 = vadd.f32 %v1632, %v1635
          %vm1637 = vweird.f32 %v1625
          %vm1638 = vweird.f32 %v1632
          %vm1639 = vmor %vm1637, %vm1638
          %v1640 = vsel %vm1639, %v1632, %v1636
          %v1641 = vand.u32 2147483647, %v1625
          %vm1642 = vcmp.eq.f32.partialorder %v1641, 8.507059e+37
          %v1643 = vand.u32 %v1625, 2147483648
          %v1644 = vor.u32 1.1754944e-38, %v1643
          %v1645 = vsel %vm1642, %v1644, %v1640
          %v1646 = vmul.f32 1.0, %v1645
          %v1647 = vrcp.pop %v1626
          %v1648 = vmul.f32 %v1626, %v1647
          %v1649 = vsub.f32 1.0, %v1648
          %v1650 = vmul.f32 %v1647, %v1649
          %v1651 = vadd.f32 %v1647, %v1650
          %vm1652 = vweird.f32 %v1626
          %vm1653 = vweird.f32 %v1647
          %vm1654 = vmor %vm1652, %vm1653
          %v1655 = vsel %vm1654, %v1647, %v1651
          %v1656 = vand.u32 2147483647, %v1626
          %vm1657 = vcmp.eq.f32.partialorder %v1656, 8.507059e+37
          %v1658 = vand.u32 %v1626, 2147483648
          %v1659 = vor.u32 1.1754944e-38, %v1658
          %v1660 = vsel %vm1657, %v1659, %v1655
          %v1661 = vmul.f32 1.0, %v1660
          %v1662 = vrcp.pop %v1627
          %v1663 = vmul.f32 %v1627, %v1662
          %v1664 = vsub.f32 1.0, %v1663
          %v1665 = vmul.f32 %v1662, %v1664
          %v1666 = vadd.f32 %v1662, %v1665
          %vm1667 = vweird.f32 %v1627
          %vm1668 = vweird.f32 %v1662
          %vm1669 = vmor %vm1667, %vm1668
          %v1670 = vsel %vm1669, %v1662, %v1666
          %v1671 = vand.u32 2147483647, %v1627
          %vm1672 = vcmp.eq.f32.partialorder %v1671, 8.507059e+37
          %v1673 = vand.u32 %v1627, 2147483648
          %v1674 = vor.u32 1.1754944e-38, %v1673
          %v1675 = vsel %vm1672, %v1674, %v1670
          %v1676 = vmul.f32 1.0, %v1675
          %v1677 = vrcp.pop %v1628
          %v1678 = vmul.f32 %v1628, %v1677
          %v1679 = vsub.f32 1.0, %v1678
          %v1680 = vmul.f32 %v1677, %v1679
          %v1681 = vadd.f32 %v1677, %v1680
          %vm1682 = vweird.f32 %v1628
          %vm1683 = vweird.f32 %v1677
          %vm1684 = vmor %vm1682, %vm1683
          %v1685 = vsel %vm1684, %v1677, %v1681
          %v1686 = vand.u32 2147483647, %v1628
          %vm1687 = vcmp.eq.f32.partialorder %v1686, 8.507059e+37
          %v1688 = vand.u32 %v1628, 2147483648
          %v1689 = vor.u32 1.1754944e-38, %v1688
          %v1690 = vsel %vm1687, %v1689, %v1685
          %v1691 = vmul.f32 1.0, %v1690
          %v1692 = vrcp.pop %v1629
          %v1693 = vmul.f32 %v1629, %v1692
          %v1694 = vsub.f32 1.0, %v1693
          %v1695 = vmul.f32 %v1692, %v1694
          %v1696 = vadd.f32 %v1692, %v1695
          %vm1697 = vweird.f32 %v1629
          %vm1698 = vweird.f32 %v1692
          %vm1699 = vmor %vm1697, %vm1698
          %v1700 = vsel %vm1699, %v1692, %v1696
          %v1701 = vand.u32 2147483647, %v1629
          %vm1702 = vcmp.eq.f32.partialorder %v1701, 8.507059e+37
          %v1703 = vand.u32 %v1629, 2147483648
          %v1704 = vor.u32 1.1754944e-38, %v1703
          %v1705 = vsel %vm1702, %v1704, %v1700
          %v1706 = vmul.f32 1.0, %v1705
          %v1707 = vrcp.pop %v1630
          %v1708 = vmul.f32 %v1630, %v1707
          %v1709 = vsub.f32 1.0, %v1708
          %v1710 = vmul.f32 %v1707, %v1709
          %v1711 = vadd.f32 %v1707, %v1710
          %vm1712 = vweird.f32 %v1630
          %vm1713 = vweird.f32 %v1707
          %vm1714 = vmor %vm1712, %vm1713
          %v1715 = vsel %vm1714, %v1707, %v1711
          %v1716 = vand.u32 2147483647, %v1630
          %vm1717 = vcmp.eq.f32.partialorder %v1716, 8.507059e+37
          %v1718 = vand.u32 %v1630, 2147483648
          %v1719 = vor.u32 1.1754944e-38, %v1718
          %v1720 = vsel %vm1717, %v1719, %v1715
          %v1721 = vmul.f32 1.0, %v1720
          %v1722 = vrcp.pop %v1631
          %v1723 = vmul.f32 %v1631, %v1722
          %v1724 = vsub.f32 1.0, %v1723
          %v1725 = vmul.f32 %v1722, %v1724
          %v1726 = vadd.f32 %v1722, %v1725
          %vm1727 = vweird.f32 %v1631
          %vm1728 = vweird.f32 %v1722
          %vm1729 = vmor %vm1727, %vm1728
          %v1730 = vsel %vm1729, %v1722, %v1726
          %v1731 = vand.u32 2147483647, %v1631
          %vm1732 = vcmp.eq.f32.partialorder %v1731, 8.507059e+37
          %v1733 = vand.u32 %v1631, 2147483648
          %v1734 = vor.u32 1.1754944e-38, %v1733
          %v1735 = vsel %vm1732, %v1734, %v1730
          %v1736 = vmul.f32 1.0, %v1735
          %v1737 = vmul.f32 %v1597, %v1646
          %v1738 = vmul.f32 %v1598, %v1661
          %v1739 = vmul.f32 %v1599, %v1676
          %v1740 = vmul.f32 %v1600, %v1691
          %v1741 = vmul.f32 %v1601, %v1706
          %v1742 = vmul.f32 %v1602, %v1721
          %v1743 = vmul.f32 %v1603, %v1736
          %v1744 = vpack.c.bf16 %v1738, %v1737
          %v1745 = vpack.c.bf16 %v1740, %v1739
          %v1746 = vpack.c.bf16 %v1742, %v1741
          %v1747 = vpack.c.bf16 %v1743, %v1743
          %v1749 = vperm.slane %v1324, 0
          %v1755 = vunpack.c.l.b16 %v1319
          %v1756 = vunpack.c.l.b16 %v1320
          %v1757 = vunpack.c.l.b16 %v1321
          %v1758 = vunpack.c.l.b16 %v1322
          %v1759 = vpack.c.b16 %v1756, %v1755
          %v1760 = vpack.c.b16 %v1758, %v1757
          %v1764 = vsel %vm1367, %v1744, 0
          %v1767 = vsel %vm1367, %v1745, 0
          %v1770 = vsel %vm1367, %v1746, 0
          %v1773 = vsel %vm1367, %v1747, 0
          %1775 = vmatpush.bf16.msra.mxu0 0
          %1776 = vmatpush.bf16.msra.mxu0 0
          %1777 = vmatpush.bf16.msra.mxu0 0
          %1778 = vmatpush.bf16.msra.mxu0 0
          %1779 = vmatpush.bf16.msra.mxu0 0
          %1780 = vmatpush.bf16.msra.mxu0 0
          %1781 = vmatpush.bf16.msra.mxu0 %v1760
          %1782 = vmatpush.bf16.msra.mxu0 %v1759
          %1783 = vmatmul.bf16.gmra.mxu0 %v1764
          %v1784 = vpop.f32.mrf.mxu0
          %v1785 = vadd.f32 %v1749, %v1784
          %v1786 = vpop.f32.mrf.mxu0
          %v1787 = vadd.f32 %v1749, %v1786
          %1788 = vmatmul.bf16.gmra.mxu0 %v1767
          %v1789 = vpop.f32.mrf.mxu0
          %v1790 = vadd.f32 %v1749, %v1789
          %v1791 = vpop.f32.mrf.mxu0
          %v1792 = vadd.f32 %v1749, %v1791
          %1793 = vmatmul.bf16.gmra.mxu0 %v1770
          %v1794 = vpop.f32.mrf.mxu0
          %v1795 = vadd.f32 %v1749, %v1794
          %v1796 = vpop.f32.mrf.mxu0
          %v1797 = vadd.f32 %v1749, %v1796
          %1798 = vmatmul.bf16.gmra.mxu0 %v1773
          %v1799 = vpop.f32.mrf.mxu0
          %v1800 = vadd.f32 %v1749, %v1799
          %v1801 = vpop.f32.mrf.mxu0
          %1802 = vdwg.mxu0
          %v1803 = vxor.u32 %v1785, 2147483648
          %v1804 = vxor.u32 %v1787, 2147483648
          %v1805 = vxor.u32 %v1790, 2147483648
          %v1806 = vxor.u32 %v1792, 2147483648
          %v1807 = vxor.u32 %v1795, 2147483648
          %v1808 = vxor.u32 %v1797, 2147483648
          %v1809 = vxor.u32 %v1800, 2147483648
          %v1810 = vmul.f32 %v1803, 1.442695
          %v1811 = vpow.pop %v1810
          %v1812 = vmul.f32 %v1804, 1.442695
          %v1813 = vpow.pop %v1812
          %v1814 = vmul.f32 %v1805, 1.442695
          %v1815 = vpow.pop %v1814
          %v1816 = vmul.f32 %v1806, 1.442695
          %v1817 = vpow.pop %v1816
          %v1818 = vmul.f32 %v1807, 1.442695
          %v1819 = vpow.pop %v1818
          %v1820 = vmul.f32 %v1808, 1.442695
          %v1821 = vpow.pop %v1820
          %v1822 = vmul.f32 %v1809, 1.442695
          %v1823 = vpow.pop %v1822
          %v1824 = vadd.f32 %v1811, 1.0
          %v1825 = vadd.f32 %v1813, 1.0
          %v1826 = vadd.f32 %v1815, 1.0
          %v1827 = vadd.f32 %v1817, 1.0
          %v1828 = vadd.f32 %v1819, 1.0
          %v1829 = vadd.f32 %v1821, 1.0
          %v1830 = vadd.f32 %v1823, 1.0
          %v1831 = vrcp.pop %v1824
          %v1832 = vmul.f32 %v1824, %v1831
          %v1833 = vsub.f32 1.0, %v1832
          %v1834 = vmul.f32 %v1831, %v1833
          %v1835 = vadd.f32 %v1831, %v1834
          %vm1836 = vweird.f32 %v1824
          %vm1837 = vweird.f32 %v1831
          %vm1838 = vmor %vm1836, %vm1837
          %v1839 = vsel %vm1838, %v1831, %v1835
          %v1840 = vand.u32 2147483647, %v1824
          %vm1841 = vcmp.eq.f32.partialorder %v1840, 8.507059e+37
          %v1842 = vand.u32 %v1824, 2147483648
          %v1843 = vor.u32 1.1754944e-38, %v1842
          %v1844 = vsel %vm1841, %v1843, %v1839
          %v1845 = vmul.f32 1.0, %v1844
          %v1846 = vrcp.pop %v1825
          %v1847 = vmul.f32 %v1825, %v1846
          %v1848 = vsub.f32 1.0, %v1847
          %v1849 = vmul.f32 %v1846, %v1848
          %v1850 = vadd.f32 %v1846, %v1849
          %vm1851 = vweird.f32 %v1825
          %vm1852 = vweird.f32 %v1846
          %vm1853 = vmor %vm1851, %vm1852
          %v1854 = vsel %vm1853, %v1846, %v1850
          %v1855 = vand.u32 2147483647, %v1825
          %vm1856 = vcmp.eq.f32.partialorder %v1855, 8.507059e+37
          %v1857 = vand.u32 %v1825, 2147483648
          %v1858 = vor.u32 1.1754944e-38, %v1857
          %v1859 = vsel %vm1856, %v1858, %v1854
          %v1860 = vmul.f32 1.0, %v1859
          %v1861 = vrcp.pop %v1826
          %v1862 = vmul.f32 %v1826, %v1861
          %v1863 = vsub.f32 1.0, %v1862
          %v1864 = vmul.f32 %v1861, %v1863
          %v1865 = vadd.f32 %v1861, %v1864
          %vm1866 = vweird.f32 %v1826
          %vm1867 = vweird.f32 %v1861
          %vm1868 = vmor %vm1866, %vm1867
          %v1869 = vsel %vm1868, %v1861, %v1865
          %v1870 = vand.u32 2147483647, %v1826
          %vm1871 = vcmp.eq.f32.partialorder %v1870, 8.507059e+37
          %v1872 = vand.u32 %v1826, 2147483648
          %v1873 = vor.u32 1.1754944e-38, %v1872
          %v1874 = vsel %vm1871, %v1873, %v1869
          %v1875 = vmul.f32 1.0, %v1874
          %v1876 = vrcp.pop %v1827
          %v1877 = vmul.f32 %v1827, %v1876
          %v1878 = vsub.f32 1.0, %v1877
          %v1879 = vmul.f32 %v1876, %v1878
          %v1880 = vadd.f32 %v1876, %v1879
          %vm1881 = vweird.f32 %v1827
          %vm1882 = vweird.f32 %v1876
          %vm1883 = vmor %vm1881, %vm1882
          %v1884 = vsel %vm1883, %v1876, %v1880
          %v1885 = vand.u32 2147483647, %v1827
          %vm1886 = vcmp.eq.f32.partialorder %v1885, 8.507059e+37
          %v1887 = vand.u32 %v1827, 2147483648
          %v1888 = vor.u32 1.1754944e-38, %v1887
          %v1889 = vsel %vm1886, %v1888, %v1884
          %v1890 = vmul.f32 1.0, %v1889
          %v1891 = vrcp.pop %v1828
          %v1892 = vmul.f32 %v1828, %v1891
          %v1893 = vsub.f32 1.0, %v1892
          %v1894 = vmul.f32 %v1891, %v1893
          %v1895 = vadd.f32 %v1891, %v1894
          %vm1896 = vweird.f32 %v1828
          %vm1897 = vweird.f32 %v1891
          %vm1898 = vmor %vm1896, %vm1897
          %v1899 = vsel %vm1898, %v1891, %v1895
          %v1900 = vand.u32 2147483647, %v1828
          %vm1901 = vcmp.eq.f32.partialorder %v1900, 8.507059e+37
          %v1902 = vand.u32 %v1828, 2147483648
          %v1903 = vor.u32 1.1754944e-38, %v1902
          %v1904 = vsel %vm1901, %v1903, %v1899
          %v1905 = vmul.f32 1.0, %v1904
          %v1906 = vrcp.pop %v1829
          %v1907 = vmul.f32 %v1829, %v1906
          %v1908 = vsub.f32 1.0, %v1907
          %v1909 = vmul.f32 %v1906, %v1908
          %v1910 = vadd.f32 %v1906, %v1909
          %vm1911 = vweird.f32 %v1829
          %vm1912 = vweird.f32 %v1906
          %vm1913 = vmor %vm1911, %vm1912
          %v1914 = vsel %vm1913, %v1906, %v1910
          %v1915 = vand.u32 2147483647, %v1829
          %vm1916 = vcmp.eq.f32.partialorder %v1915, 8.507059e+37
          %v1917 = vand.u32 %v1829, 2147483648
          %v1918 = vor.u32 1.1754944e-38, %v1917
          %v1919 = vsel %vm1916, %v1918, %v1914
          %v1920 = vmul.f32 1.0, %v1919
          %v1921 = vrcp.pop %v1830
          %v1922 = vmul.f32 %v1830, %v1921
          %v1923 = vsub.f32 1.0, %v1922
          %v1924 = vmul.f32 %v1921, %v1923
          %v1925 = vadd.f32 %v1921, %v1924
          %vm1926 = vweird.f32 %v1830
          %vm1927 = vweird.f32 %v1921
          %vm1928 = vmor %vm1926, %vm1927
          %v1929 = vsel %vm1928, %v1921, %v1925
          %v1930 = vand.u32 2147483647, %v1830
          %vm1931 = vcmp.eq.f32.partialorder %v1930, 8.507059e+37
          %v1932 = vand.u32 %v1830, 2147483648
          %v1933 = vor.u32 1.1754944e-38, %v1932
          %v1934 = vsel %vm1931, %v1933, %v1929
          %v1935 = vmul.f32 1.0, %v1934
          %v1936 = vmul.f32 %v1785, %v1845
          %v1937 = vmul.f32 %v1787, %v1860
          %v1938 = vmul.f32 %v1790, %v1875
          %v1939 = vmul.f32 %v1792, %v1890
          %v1940 = vmul.f32 %v1795, %v1905
          %v1941 = vmul.f32 %v1797, %v1920
          %v1942 = vmul.f32 %v1800, %v1935
          %v1944 = vperm.slane %v1326, 0
          %v1946 = vmul.f32 %v1936, %v1944
          %v1947 = vmul.f32 %v1937, %v1944
          %v1948 = vmul.f32 %v1938, %v1944
          %v1949 = vmul.f32 %v1939, %v1944
          %v1950 = vmul.f32 %v1940, %v1944
          %v1951 = vmul.f32 %v1941, %v1944
          %v1952 = vmul.f32 %v1942, %v1944
          %v1953 = vsel %vm1367, %v1946, 0.0
          %1954 = vadd.xlane.f32.xlu0 %v1953
          %v1955 = vpop.xlane.xlu0 %1954
          %v1956 = vsel %vm1367, %v1947, 0.0
          %1957 = vadd.xlane.f32.xlu0 %v1956
          %v1958 = vpop.xlane.xlu0 %1957
          %v1959 = vsel %vm1367, %v1948, 0.0
          %1960 = vadd.xlane.f32.xlu0 %v1959
          %v1961 = vpop.xlane.xlu0 %1960
          %v1962 = vsel %vm1367, %v1949, 0.0
          %1963 = vadd.xlane.f32.xlu0 %v1962
          %v1964 = vpop.xlane.xlu0 %1963
          %v1965 = vsel %vm1367, %v1950, 0.0
          %1966 = vadd.xlane.f32.xlu0 %v1965
          %v1967 = vpop.xlane.xlu0 %1966
          %v1968 = vsel %vm1367, %v1951, 0.0
          %1969 = vadd.xlane.f32.xlu0 %v1968
          %v1970 = vpop.xlane.xlu0 %1969
          %v1971 = vsel %vm1367, %v1952, 0.0
          %1972 = vadd.xlane.f32.xlu0 %v1971
          %v1973 = vpop.xlane.xlu0 %1972
          %v1975 = vperm.slane %v1328, 0
          %v1977 = vadd.f32 %v1955, %v1975
          %v1978 = vadd.f32 %v1958, %v1975
          %v1979 = vadd.f32 %v1961, %v1975
          %v1980 = vadd.f32 %v1964, %v1975
          %v1981 = vadd.f32 %v1967, %v1975
          %v1982 = vadd.f32 %v1970, %v1975
          %v1983 = vadd.f32 %v1973, %v1975
          %v1984 = vxor.u32 %v1977, 2147483648
          %v1985 = vxor.u32 %v1978, 2147483648
          %v1986 = vxor.u32 %v1979, 2147483648
          %v1987 = vxor.u32 %v1980, 2147483648
          %v1988 = vxor.u32 %v1981, 2147483648
          %v1989 = vxor.u32 %v1982, 2147483648
          %v1990 = vxor.u32 %v1983, 2147483648
          %v1991 = vmul.f32 %v1984, 1.442695
          %v1992 = vpow.pop %v1991
          %v1993 = vmul.f32 %v1985, 1.442695
          %v1994 = vpow.pop %v1993
          %v1995 = vmul.f32 %v1986, 1.442695
          %v1996 = vpow.pop %v1995
          %v1997 = vmul.f32 %v1987, 1.442695
          %v1998 = vpow.pop %v1997
          %v1999 = vmul.f32 %v1988, 1.442695
          %v2000 = vpow.pop %v1999
          %v2001 = vmul.f32 %v1989, 1.442695
          %v2002 = vpow.pop %v2001
          %v2003 = vmul.f32 %v1990, 1.442695
          %v2004 = vpow.pop %v2003
          %v2005 = vadd.f32 %v1992, 1.0
          %v2006 = vadd.f32 %v1994, 1.0
          %v2007 = vadd.f32 %v1996, 1.0
          %v2008 = vadd.f32 %v1998, 1.0
          %v2009 = vadd.f32 %v2000, 1.0
          %v2010 = vadd.f32 %v2002, 1.0
          %v2011 = vadd.f32 %v2004, 1.0
          %v2012 = vrcp.pop %v2005
          %v2013 = vmul.f32 %v2005, %v2012
          %v2014 = vsub.f32 1.0, %v2013
          %v2015 = vmul.f32 %v2012, %v2014
          %v2016 = vadd.f32 %v2012, %v2015
          %vm2017 = vweird.f32 %v2005
          %vm2018 = vweird.f32 %v2012
          %vm2019 = vmor %vm2017, %vm2018
          %v2020 = vsel %vm2019, %v2012, %v2016
          %v2021 = vand.u32 2147483647, %v2005
          %vm2022 = vcmp.eq.f32.partialorder %v2021, 8.507059e+37
          %v2023 = vand.u32 %v2005, 2147483648
          %v2024 = vor.u32 1.1754944e-38, %v2023
          %v2025 = vsel %vm2022, %v2024, %v2020
          %v2026 = vmul.f32 1.0, %v2025
          %v2027 = vrcp.pop %v2006
          %v2028 = vmul.f32 %v2006, %v2027
          %v2029 = vsub.f32 1.0, %v2028
          %v2030 = vmul.f32 %v2027, %v2029
          %v2031 = vadd.f32 %v2027, %v2030
          %vm2032 = vweird.f32 %v2006
          %vm2033 = vweird.f32 %v2027
          %vm2034 = vmor %vm2032, %vm2033
          %v2035 = vsel %vm2034, %v2027, %v2031
          %v2036 = vand.u32 2147483647, %v2006
          %vm2037 = vcmp.eq.f32.partialorder %v2036, 8.507059e+37
          %v2038 = vand.u32 %v2006, 2147483648
          %v2039 = vor.u32 1.1754944e-38, %v2038
          %v2040 = vsel %vm2037, %v2039, %v2035
          %v2041 = vmul.f32 1.0, %v2040
          %v2042 = vrcp.pop %v2007
          %v2043 = vmul.f32 %v2007, %v2042
          %v2044 = vsub.f32 1.0, %v2043
          %v2045 = vmul.f32 %v2042, %v2044
          %v2046 = vadd.f32 %v2042, %v2045
          %vm2047 = vweird.f32 %v2007
          %vm2048 = vweird.f32 %v2042
          %vm2049 = vmor %vm2047, %vm2048
          %v2050 = vsel %vm2049, %v2042, %v2046
          %v2051 = vand.u32 2147483647, %v2007
          %vm2052 = vcmp.eq.f32.partialorder %v2051, 8.507059e+37
          %v2053 = vand.u32 %v2007, 2147483648
          %v2054 = vor.u32 1.1754944e-38, %v2053
          %v2055 = vsel %vm2052, %v2054, %v2050
          %v2056 = vmul.f32 1.0, %v2055
          %v2057 = vrcp.pop %v2008
          %v2058 = vmul.f32 %v2008, %v2057
          %v2059 = vsub.f32 1.0, %v2058
          %v2060 = vmul.f32 %v2057, %v2059
          %v2061 = vadd.f32 %v2057, %v2060
          %vm2062 = vweird.f32 %v2008
          %vm2063 = vweird.f32 %v2057
          %vm2064 = vmor %vm2062, %vm2063
          %v2065 = vsel %vm2064, %v2057, %v2061
          %v2066 = vand.u32 2147483647, %v2008
          %vm2067 = vcmp.eq.f32.partialorder %v2066, 8.507059e+37
          %v2068 = vand.u32 %v2008, 2147483648
          %v2069 = vor.u32 1.1754944e-38, %v2068
          %v2070 = vsel %vm2067, %v2069, %v2065
          %v2071 = vmul.f32 1.0, %v2070
          %v2072 = vrcp.pop %v2009
          %v2073 = vmul.f32 %v2009, %v2072
          %v2074 = vsub.f32 1.0, %v2073
          %v2075 = vmul.f32 %v2072, %v2074
          %v2076 = vadd.f32 %v2072, %v2075
          %vm2077 = vweird.f32 %v2009
          %vm2078 = vweird.f32 %v2072
          %vm2079 = vmor %vm2077, %vm2078
          %v2080 = vsel %vm2079, %v2072, %v2076
          %v2081 = vand.u32 2147483647, %v2009
          %vm2082 = vcmp.eq.f32.partialorder %v2081, 8.507059e+37
          %v2083 = vand.u32 %v2009, 2147483648
          %v2084 = vor.u32 1.1754944e-38, %v2083
          %v2085 = vsel %vm2082, %v2084, %v2080
          %v2086 = vmul.f32 1.0, %v2085
          %v2087 = vrcp.pop %v2010
          %v2088 = vmul.f32 %v2010, %v2087
          %v2089 = vsub.f32 1.0, %v2088
          %v2090 = vmul.f32 %v2087, %v2089
          %v2091 = vadd.f32 %v2087, %v2090
          %vm2092 = vweird.f32 %v2010
          %vm2093 = vweird.f32 %v2087
          %vm2094 = vmor %vm2092, %vm2093
          %v2095 = vsel %vm2094, %v2087, %v2091
          %v2096 = vand.u32 2147483647, %v2010
          %vm2097 = vcmp.eq.f32.partialorder %v2096, 8.507059e+37
          %v2098 = vand.u32 %v2010, 2147483648
          %v2099 = vor.u32 1.1754944e-38, %v2098
          %v2100 = vsel %vm2097, %v2099, %v2095
          %v2101 = vmul.f32 1.0, %v2100
          %v2102 = vrcp.pop %v2011
          %v2103 = vmul.f32 %v2011, %v2102
          %v2104 = vsub.f32 1.0, %v2103
          %v2105 = vmul.f32 %v2102, %v2104
          %v2106 = vadd.f32 %v2102, %v2105
          %vm2107 = vweird.f32 %v2011
          %vm2108 = vweird.f32 %v2102
          %vm2109 = vmor %vm2107, %vm2108
          %v2110 = vsel %vm2109, %v2102, %v2106
          %v2111 = vand.u32 2147483647, %v2011
          %vm2112 = vcmp.eq.f32.partialorder %v2111, 8.507059e+37
          %v2113 = vand.u32 %v2011, 2147483648
          %v2114 = vor.u32 1.1754944e-38, %v2113
          %v2115 = vsel %vm2112, %v2114, %v2110
          %v2116 = vmul.f32 1.0, %v2115
          %2118 = vset.pattern.permute.xlu0 0
          %2119 = vperm.xlu0 %2118, %v2026
          %v2120 = vpop.permute.xlu0 %2119
          %2123 = vset.pattern.permute.xlu0 0
          %2124 = vperm.xlu0 %2123, %v2041
          %v2125 = vpop.permute.xlu0 %2124
          %2128 = vset.pattern.permute.xlu0 0
          %2129 = vperm.xlu0 %2128, %v2056
          %v2130 = vpop.permute.xlu0 %2129
          %2133 = vset.pattern.permute.xlu0 0
          %2134 = vperm.xlu0 %2133, %v2071
          %v2135 = vpop.permute.xlu0 %2134
          %2138 = vset.pattern.permute.xlu0 0
          %2139 = vperm.xlu0 %2138, %v2086
          %v2140 = vpop.permute.xlu0 %2139
          %2143 = vset.pattern.permute.xlu0 0
          %2144 = vperm.xlu0 %2143, %v2101
          %v2145 = vpop.permute.xlu0 %2144
          %2148 = vset.pattern.permute.xlu0 0
          %2149 = vperm.xlu0 %2148, %v2116
          %v2150 = vpop.permute.xlu0 %2149
          %v2152 = vmul.f32 %v1936, %v2120
          %v2153 = vmul.f32 %v1937, %v2125
          %v2154 = vmul.f32 %v1938, %v2130
          %v2155 = vmul.f32 %v1939, %v2135
          %v2156 = vmul.f32 %v1940, %v2140
          %v2157 = vmul.f32 %v1941, %v2145
          %v2158 = vmul.f32 %v1942, %v2150
          %v2159 = vmul.f32 %v2152, %v1478
          %v2160 = vmul.f32 %v2153, %v1483
          %v2161 = vmul.f32 %v2154, %v1488
          %v2162 = vmul.f32 %v2155, %v1493
          %v2163 = vmul.f32 %v2156, %v1498
          %v2164 = vmul.f32 %v2157, %v1503
          %v2165 = vmul.f32 %v2158, %v1508
          %v2166 = vpack.c.bf16 %v2160, %v2159
          %v2167 = vpack.c.bf16 %v2162, %v2161
          %v2168 = vpack.c.bf16 %v2164, %v2163
          %v2169 = vpack.c.bf16 %v2165, %v2165
          %vm2170 = vcmask 457728
          %v2172 = vsel %vm2170, %v1219, 0
          %v2175 = vsel %vm1400, %v2169, 0
          %2177 = vmatpush.bf16.msra.mxu0 0
          %2178 = vmatpush.bf16.msra.mxu0 0
          %2179 = vmatpush.bf16.msra.mxu0 0
          %2180 = vmatpush.bf16.msra.mxu0 0
          %2181 = vmatpush.bf16.msra.mxu0 %v2175
          %2182 = vmatpush.bf16.msra.mxu0 %v2168
          %2183 = vmatpush.bf16.msra.mxu0 %v2167
          %2184 = vmatpush.bf16.msra.mxu0 %v2166
          %2185 = vmatmul.bf16.gmra.mxu0 %v2172
          %v2186 = vpop.f32.mrf.mxu0
          %v2187 = vadd.f32 0.0, %v2186
          %v2188 = vpop.f32.mrf.mxu0
          %2189 = vdwg.mxu0
          %2191 = vrot.lane.b32.xlu0 %v2187, 32
          %v2192 = vpop.permute.xlu0 %2191
          %v2194 = vsel %vm1367, %v1301, %v2192
          %v2195 = vpack.c.bf16 %v2194, %v2194
          %v2197 = vperm.slane %v1341, 0
          %v2207 = vunpack.c.l.b16 %v1332
          %v2208 = vunpack.c.l.b16 %v1333
          %v2209 = vunpack.c.l.b16 %v1334
          %v2210 = vunpack.c.l.b16 %v1335
          %v2211 = vunpack.c.l.b16 %v1336
          %v2212 = vunpack.c.l.b16 %v1337
          %v2213 = vunpack.c.l.b16 %v1338
          %v2214 = vunpack.c.l.b16 %v1339
          %v2215 = vpack.c.b16 %v2208, %v2207
          %v2216 = vpack.c.b16 %v2210, %v2209
          %v2217 = vpack.c.b16 %v2212, %v2211
          %v2218 = vpack.c.b16 %v2214, %v2213
          %vm2223 = vcmask 523264
          %v2225 = vsel %vm2223, %v2195, 0
          %2227 = vmatpush.bf16.msra.mxu0 0
          %2228 = vmatpush.bf16.msra.mxu0 0
          %2229 = vmatpush.bf16.msra.mxu0 0
          %2230 = vmatpush.bf16.msra.mxu0 0
          %2231 = vmatpush.bf16.msra.mxu0 %v2218
          %2232 = vmatpush.bf16.msra.mxu0 %v2217
          %2233 = vmatpush.bf16.msra.mxu0 %v2216
          %2234 = vmatpush.bf16.msra.mxu0 %v2215
          %2235 = vmatmul.bf16.gmra.mxu0 %v2225
          %v2236 = vpop.f32.mrf.mxu0
          %v2237 = vadd.f32 %v2197, %v2236
          %v2238 = vpop.f32.mrf.mxu0
          %2239 = vdwg.mxu0
          %v2240 = vxor.u32 %v2237, 2147483648
          %v2241 = vmul.f32 %v2240, 1.442695
          %v2242 = vpow.pop %v2241
          %v2243 = vadd.f32 %v2242, 1.0
          %v2244 = vrcp.pop %v2243
          %v2245 = vmul.f32 %v2243, %v2244
          %v2246 = vsub.f32 1.0, %v2245
          %v2247 = vmul.f32 %v2244, %v2246
          %v2248 = vadd.f32 %v2244, %v2247
          %vm2249 = vweird.f32 %v2243
          %vm2250 = vweird.f32 %v2244
          %vm2251 = vmor %vm2249, %vm2250
          %v2252 = vsel %vm2251, %v2244, %v2248
          %v2253 = vand.u32 2147483647, %v2243
          %vm2254 = vcmp.eq.f32.partialorder %v2253, 8.507059e+37
          %v2255 = vand.u32 %v2243, 2147483648
          %v2256 = vor.u32 1.1754944e-38, %v2255
          %v2257 = vsel %vm2254, %v2256, %v2252
          %v2258 = vmul.f32 1.0, %v2257
          %v2259 = vmul.f32 %v2237, %v2258
          %v2260 = vpack.c.bf16 %v2259, %v2259
          %v2262 = vperm.slane %v1349, 0
          %v2268 = vunpack.c.l.b16 %v1344
          %v2269 = vunpack.c.l.b16 %v1345
          %v2270 = vunpack.c.l.b16 %v1346
          %v2271 = vunpack.c.l.b16 %v1347
          %v2272 = vpack.c.b16 %v2269, %v2268
          %v2273 = vpack.c.b16 %v2271, %v2270
          %v2277 = vsel %vm1367, %v2260, 0
          %2279 = vmatpush.bf16.msra.mxu0 0
          %2280 = vmatpush.bf16.msra.mxu0 0
          %2281 = vmatpush.bf16.msra.mxu0 0
          %2282 = vmatpush.bf16.msra.mxu0 0
          %2283 = vmatpush.bf16.msra.mxu0 0
          %2284 = vmatpush.bf16.msra.mxu0 0
          %2285 = vmatpush.bf16.msra.mxu0 %v2273
          %2286 = vmatpush.bf16.msra.mxu0 %v2272
          %2287 = vmatmul.bf16.gmra.mxu0 %v2277
          %v2288 = vpop.f32.mrf.mxu0
          %v2289 = vadd.f32 %v2262, %v2288
          %v2290 = vpop.f32.mrf.mxu0
          %2291 = vdwg.mxu0
          %v2292 = vadd.f32 %v1301, %v2289
          %v2293 = vmul.f32 %v2292, %v1280
          %v2294 = vmul.f32 %v1301, %v1280
          %v2296 = vperm.slane %v1287, 0
          %v2299 = vsel %vm1367, %v2294, 0
          %2301 = vmatpush.msra.mxu0 0.0
          %2302 = vmatpush.msra.mxu0 0.0
          %2303 = vmatpush.msra.mxu0 0.0
          %2304 = vmatpush.msra.mxu0 0.0
          %2305 = vmatpush.msra.mxu0 0.0
          %2306 = vmatpush.msra.mxu0 0.0
          %2307 = vmatpush.msra.mxu0 0.0
          %2308 = vmatpush.msra.mxu0 0.0
          %2309 = vmatpush.msra.mxu0 0.0
          %2310 = vmatpush.msra.mxu0 0.0
          %2311 = vmatpush.msra.mxu0 0.0
          %2312 = vmatpush.msra.mxu0 0.0
          %v2313 = vand.u32 %v1286, 4294901760
          %2314 = vmatpush.msra.mxu0 %v2313
          %v2315 = vand.u32 %v1285, 4294901760
          %2316 = vmatpush.msra.mxu0 %v2315
          %v2317 = vand.u32 %v1284, 4294901760
          %2318 = vmatpush.msra.mxu0 %v2317
          %v2319 = vand.u32 %v1283, 4294901760
          %2320 = vmatpush.msra.mxu0 %v2319
          %v2321 = vand.u32 %v2299, 4294901760
          %v2322 = vsub.f32 %v2299, %v2321
          %v2323 = vand.u32 %v2322, 4294901760
          %v2324 = vsub.f32 %v2322, %v2323
          %v2325 = vand.u32 %v2324, 4294901760
          %2326 = vmatmul.f32.gmra.mxu0 %v2325
          %v2327 = vpop.f32.mrf.mxu0
          %v2328 = vadd.f32 %v2296, %v2327
          %2329 = vdwg.mxu0
          %2330 = vmatpush.msra.mxu0 0.0
          %2331 = vmatpush.msra.mxu0 0.0
          %2332 = vmatpush.msra.mxu0 0.0
          %2333 = vmatpush.msra.mxu0 0.0
          %2334 = vmatpush.msra.mxu0 0.0
          %2335 = vmatpush.msra.mxu0 0.0
          %2336 = vmatpush.msra.mxu0 0.0
          %2337 = vmatpush.msra.mxu0 0.0
          %2338 = vmatpush.msra.mxu0 0.0
          %2339 = vmatpush.msra.mxu0 0.0
          %2340 = vmatpush.msra.mxu0 0.0
          %2341 = vmatpush.msra.mxu0 0.0
          %v2342 = vand.u32 %v1286, 4294901760
          %v2343 = vsub.f32 %v1286, %v2342
          %v2344 = vand.u32 %v2343, 4294901760
          %v2345 = vsub.f32 %v2343, %v2344
          %v2346 = vand.u32 %v2345, 4294901760
          %2347 = vmatpush.msra.mxu0 %v2346
          %v2348 = vand.u32 %v1285, 4294901760
          %v2349 = vsub.f32 %v1285, %v2348
          %v2350 = vand.u32 %v2349, 4294901760
          %v2351 = vsub.f32 %v2349, %v2350
          %v2352 = vand.u32 %v2351, 4294901760
          %2353 = vmatpush.msra.mxu0 %v2352
          %v2354 = vand.u32 %v1284, 4294901760
          %v2355 = vsub.f32 %v1284, %v2354
          %v2356 = vand.u32 %v2355, 4294901760
          %v2357 = vsub.f32 %v2355, %v2356
          %v2358 = vand.u32 %v2357, 4294901760
          %2359 = vmatpush.msra.mxu0 %v2358
          %v2360 = vand.u32 %v1283, 4294901760
          %v2361 = vsub.f32 %v1283, %v2360
          %v2362 = vand.u32 %v2361, 4294901760
          %v2363 = vsub.f32 %v2361, %v2362
          %v2364 = vand.u32 %v2363, 4294901760
          %2365 = vmatpush.msra.mxu0 %v2364
          %v2366 = vand.u32 %v2299, 4294901760
          %2367 = vmatmul.f32.gmra.mxu0 %v2366
          %v2368 = vpop.f32.mrf.mxu0
          %v2369 = vadd.f32 %v2328, %v2368
          %2370 = vdwg.mxu0
          %2371 = vmatpush.msra.mxu0 0.0
          %2372 = vmatpush.msra.mxu0 0.0
          %2373 = vmatpush.msra.mxu0 0.0
          %2374 = vmatpush.msra.mxu0 0.0
          %2375 = vmatpush.msra.mxu0 0.0
          %2376 = vmatpush.msra.mxu0 0.0
          %2377 = vmatpush.msra.mxu0 0.0
          %2378 = vmatpush.msra.mxu0 0.0
          %2379 = vmatpush.msra.mxu0 0.0
          %2380 = vmatpush.msra.mxu0 0.0
          %2381 = vmatpush.msra.mxu0 0.0
          %2382 = vmatpush.msra.mxu0 0.0
          %v2383 = vand.u32 %v1286, 4294901760
          %v2384 = vsub.f32 %v1286, %v2383
          %2385 = vmatpush.msra.mxu0 %v2384
          %v2386 = vand.u32 %v1285, 4294901760
          %v2387 = vsub.f32 %v1285, %v2386
          %2388 = vmatpush.msra.mxu0 %v2387
          %v2389 = vand.u32 %v1284, 4294901760
          %v2390 = vsub.f32 %v1284, %v2389
          %2391 = vmatpush.msra.mxu0 %v2390
          %v2392 = vand.u32 %v1283, 4294901760
          %v2393 = vsub.f32 %v1283, %v2392
          %2394 = vmatpush.msra.mxu0 %v2393
          %v2395 = vand.u32 %v2299, 4294901760
          %v2396 = vsub.f32 %v2299, %v2395
          %2397 = vmatmul.f32.gmra.mxu0 %v2396
          %v2398 = vpop.f32.mrf.mxu0
          %v2399 = vadd.f32 %v2369, %v2398
          %2400 = vdwg.mxu0
          %2401 = vmatpush.msra.mxu0 0.0
          %2402 = vmatpush.msra.mxu0 0.0
          %2403 = vmatpush.msra.mxu0 0.0
          %2404 = vmatpush.msra.mxu0 0.0
          %2405 = vmatpush.msra.mxu0 0.0
          %2406 = vmatpush.msra.mxu0 0.0
          %2407 = vmatpush.msra.mxu0 0.0
          %2408 = vmatpush.msra.mxu0 0.0
          %2409 = vmatpush.msra.mxu0 0.0
          %2410 = vmatpush.msra.mxu0 0.0
          %2411 = vmatpush.msra.mxu0 0.0
          %2412 = vmatpush.msra.mxu0 0.0
          %v2413 = vand.u32 %v1286, 4294901760
          %2414 = vmatpush.msra.mxu0 %v2413
          %v2415 = vand.u32 %v1285, 4294901760
          %2416 = vmatpush.msra.mxu0 %v2415
          %v2417 = vand.u32 %v1284, 4294901760
          %2418 = vmatpush.msra.mxu0 %v2417
          %v2419 = vand.u32 %v1283, 4294901760
          %2420 = vmatpush.msra.mxu0 %v2419
          %v2421 = vand.u32 %v2299, 4294901760
          %v2422 = vsub.f32 %v2299, %v2421
          %v2423 = vand.u32 %v2422, 4294901760
          %2424 = vmatmul.f32.gmra.mxu0 %v2423
          %v2425 = vpop.f32.mrf.mxu0
          %v2426 = vadd.f32 %v2399, %v2425
          %2427 = vdwg.mxu0
          %2428 = vmatpush.msra.mxu0 0.0
          %2429 = vmatpush.msra.mxu0 0.0
          %2430 = vmatpush.msra.mxu0 0.0
          %2431 = vmatpush.msra.mxu0 0.0
          %2432 = vmatpush.msra.mxu0 0.0
          %2433 = vmatpush.msra.mxu0 0.0
          %2434 = vmatpush.msra.mxu0 0.0
          %2435 = vmatpush.msra.mxu0 0.0
          %2436 = vmatpush.msra.mxu0 0.0
          %2437 = vmatpush.msra.mxu0 0.0
          %2438 = vmatpush.msra.mxu0 0.0
          %2439 = vmatpush.msra.mxu0 0.0
          %v2440 = vand.u32 %v1286, 4294901760
          %v2441 = vsub.f32 %v1286, %v2440
          %v2442 = vand.u32 %v2441, 4294901760
          %2443 = vmatpush.msra.mxu0 %v2442
          %v2444 = vand.u32 %v1285, 4294901760
          %v2445 = vsub.f32 %v1285, %v2444
          %v2446 = vand.u32 %v2445, 4294901760
          %2447 = vmatpush.msra.mxu0 %v2446
          %v2448 = vand.u32 %v1284, 4294901760
          %v2449 = vsub.f32 %v1284, %v2448
          %v2450 = vand.u32 %v2449, 4294901760
          %2451 = vmatpush.msra.mxu0 %v2450
          %v2452 = vand.u32 %v1283, 4294901760
          %v2453 = vsub.f32 %v1283, %v2452
          %v2454 = vand.u32 %v2453, 4294901760
          %2455 = vmatpush.msra.mxu0 %v2454
          %v2456 = vand.u32 %v2299, 4294901760
          %2457 = vmatmul.f32.gmra.mxu0 %v2456
          %v2458 = vpop.f32.mrf.mxu0
          %v2459 = vadd.f32 %v2426, %v2458
          %2460 = vdwg.mxu0
          %2461 = vmatpush.msra.mxu0 0.0
          %2462 = vmatpush.msra.mxu0 0.0
          %2463 = vmatpush.msra.mxu0 0.0
          %2464 = vmatpush.msra.mxu0 0.0
          %2465 = vmatpush.msra.mxu0 0.0
          %2466 = vmatpush.msra.mxu0 0.0
          %2467 = vmatpush.msra.mxu0 0.0
          %2468 = vmatpush.msra.mxu0 0.0
          %2469 = vmatpush.msra.mxu0 0.0
          %2470 = vmatpush.msra.mxu0 0.0
          %2471 = vmatpush.msra.mxu0 0.0
          %2472 = vmatpush.msra.mxu0 0.0
          %v2473 = vand.u32 %v1286, 4294901760
          %2474 = vmatpush.msra.mxu0 %v2473
          %v2475 = vand.u32 %v1285, 4294901760
          %2476 = vmatpush.msra.mxu0 %v2475
          %v2477 = vand.u32 %v1284, 4294901760
          %2478 = vmatpush.msra.mxu0 %v2477
          %v2479 = vand.u32 %v1283, 4294901760
          %2480 = vmatpush.msra.mxu0 %v2479
          %v2481 = vand.u32 %v2299, 4294901760
          %2482 = vmatmul.f32.gmra.mxu0 %v2481
          %v2483 = vpop.f32.mrf.mxu0
          %v2484 = vadd.f32 %v2459, %v2483
          %2485 = vdwg.mxu0
          %v2486 = vxor.u32 %v2484, 2147483648
          %v2487 = vmul.f32 %v2486, 1.442695
          %v2488 = vpow.pop %v2487
          %v2489 = vadd.f32 %v2488, 1.0
          %v2490 = vrcp.pop %v2489
          %v2491 = vmul.f32 %v2489, %v2490
          %v2492 = vsub.f32 1.0, %v2491
          %v2493 = vmul.f32 %v2490, %v2492
          %v2494 = vadd.f32 %v2490, %v2493
          %vm2495 = vweird.f32 %v2489
          %vm2496 = vweird.f32 %v2490
          %vm2497 = vmor %vm2495, %vm2496
          %v2498 = vsel %vm2497, %v2490, %v2494
          %v2499 = vand.u32 2147483647, %v2489
          %vm2500 = vcmp.eq.f32.partialorder %v2499, 8.507059e+37
          %v2501 = vand.u32 %v2489, 2147483648
          %v2502 = vor.u32 1.1754944e-38, %v2501
          %v2503 = vsel %vm2500, %v2502, %v2498
          %v2504 = vmul.f32 1.0, %v2503
          %v2505 = vmul.f32 %v2484, %v2504
          %v2507 = vperm.slane %v1292, 0
          %v2510 = vsel %vm1367, %v2505, 0
          %2512 = vmatpush.msra.mxu0 0.0
          %2513 = vmatpush.msra.mxu0 0.0
          %2514 = vmatpush.msra.mxu0 0.0
          %2515 = vmatpush.msra.mxu0 0.0
          %2516 = vmatpush.msra.mxu0 0.0
          %2517 = vmatpush.msra.mxu0 0.0
          %2518 = vmatpush.msra.mxu0 0.0
          %2519 = vmatpush.msra.mxu0 0.0
          %2520 = vmatpush.msra.mxu0 0.0
          %2521 = vmatpush.msra.mxu0 0.0
          %2522 = vmatpush.msra.mxu0 0.0
          %2523 = vmatpush.msra.mxu0 0.0
          %v2524 = vand.u32 %v1291, 4294901760
          %2525 = vmatpush.msra.mxu0 %v2524
          %v2526 = vand.u32 %v1290, 4294901760
          %2527 = vmatpush.msra.mxu0 %v2526
          %v2528 = vand.u32 %v1289, 4294901760
          %2529 = vmatpush.msra.mxu0 %v2528
          %v2530 = vand.u32 %v1288, 4294901760
          %2531 = vmatpush.msra.mxu0 %v2530
          %v2532 = vand.u32 %v2510, 4294901760
          %v2533 = vsub.f32 %v2510, %v2532
          %v2534 = vand.u32 %v2533, 4294901760
          %v2535 = vsub.f32 %v2533, %v2534
          %v2536 = vand.u32 %v2535, 4294901760
          %2537 = vmatmul.f32.gmra.mxu0 %v2536
          %v2538 = vpop.f32.mrf.mxu0
          %v2539 = vadd.f32 %v2507, %v2538
          %2540 = vdwg.mxu0
          %2541 = vmatpush.msra.mxu0 0.0
          %2542 = vmatpush.msra.mxu0 0.0
          %2543 = vmatpush.msra.mxu0 0.0
          %2544 = vmatpush.msra.mxu0 0.0
          %2545 = vmatpush.msra.mxu0 0.0
          %2546 = vmatpush.msra.mxu0 0.0
          %2547 = vmatpush.msra.mxu0 0.0
          %2548 = vmatpush.msra.mxu0 0.0
          %2549 = vmatpush.msra.mxu0 0.0
          %2550 = vmatpush.msra.mxu0 0.0
          %2551 = vmatpush.msra.mxu0 0.0
          %2552 = vmatpush.msra.mxu0 0.0
          %v2553 = vand.u32 %v1291, 4294901760
          %v2554 = vsub.f32 %v1291, %v2553
          %v2555 = vand.u32 %v2554, 4294901760
          %v2556 = vsub.f32 %v2554, %v2555
          %v2557 = vand.u32 %v2556, 4294901760
          %2558 = vmatpush.msra.mxu0 %v2557
          %v2559 = vand.u32 %v1290, 4294901760
          %v2560 = vsub.f32 %v1290, %v2559
          %v2561 = vand.u32 %v2560, 4294901760
          %v2562 = vsub.f32 %v2560, %v2561
          %v2563 = vand.u32 %v2562, 4294901760
          %2564 = vmatpush.msra.mxu0 %v2563
          %v2565 = vand.u32 %v1289, 4294901760
          %v2566 = vsub.f32 %v1289, %v2565
          %v2567 = vand.u32 %v2566, 4294901760
          %v2568 = vsub.f32 %v2566, %v2567
          %v2569 = vand.u32 %v2568, 4294901760
          %2570 = vmatpush.msra.mxu0 %v2569
          %v2571 = vand.u32 %v1288, 4294901760
          %v2572 = vsub.f32 %v1288, %v2571
          %v2573 = vand.u32 %v2572, 4294901760
          %v2574 = vsub.f32 %v2572, %v2573
          %v2575 = vand.u32 %v2574, 4294901760
          %2576 = vmatpush.msra.mxu0 %v2575
          %v2577 = vand.u32 %v2510, 4294901760
          %2578 = vmatmul.f32.gmra.mxu0 %v2577
          %v2579 = vpop.f32.mrf.mxu0
          %v2580 = vadd.f32 %v2539, %v2579
          %2581 = vdwg.mxu0
          %2582 = vmatpush.msra.mxu0 0.0
          %2583 = vmatpush.msra.mxu0 0.0
          %2584 = vmatpush.msra.mxu0 0.0
          %2585 = vmatpush.msra.mxu0 0.0
          %2586 = vmatpush.msra.mxu0 0.0
          %2587 = vmatpush.msra.mxu0 0.0
          %2588 = vmatpush.msra.mxu0 0.0
          %2589 = vmatpush.msra.mxu0 0.0
          %2590 = vmatpush.msra.mxu0 0.0
          %2591 = vmatpush.msra.mxu0 0.0
          %2592 = vmatpush.msra.mxu0 0.0
          %2593 = vmatpush.msra.mxu0 0.0
          %v2594 = vand.u32 %v1291, 4294901760
          %v2595 = vsub.f32 %v1291, %v2594
          %2596 = vmatpush.msra.mxu0 %v2595
          %v2597 = vand.u32 %v1290, 4294901760
          %v2598 = vsub.f32 %v1290, %v2597
          %2599 = vmatpush.msra.mxu0 %v2598
          %v2600 = vand.u32 %v1289, 4294901760
          %v2601 = vsub.f32 %v1289, %v2600
          %2602 = vmatpush.msra.mxu0 %v2601
          %v2603 = vand.u32 %v1288, 4294901760
          %v2604 = vsub.f32 %v1288, %v2603
          %2605 = vmatpush.msra.mxu0 %v2604
          %v2606 = vand.u32 %v2510, 4294901760
          %v2607 = vsub.f32 %v2510, %v2606
          %2608 = vmatmul.f32.gmra.mxu0 %v2607
          %v2609 = vpop.f32.mrf.mxu0
          %v2610 = vadd.f32 %v2580, %v2609
          %2611 = vdwg.mxu0
          %2612 = vmatpush.msra.mxu0 0.0
          %2613 = vmatpush.msra.mxu0 0.0
          %2614 = vmatpush.msra.mxu0 0.0
          %2615 = vmatpush.msra.mxu0 0.0
          %2616 = vmatpush.msra.mxu0 0.0
          %2617 = vmatpush.msra.mxu0 0.0
          %2618 = vmatpush.msra.mxu0 0.0
          %2619 = vmatpush.msra.mxu0 0.0
          %2620 = vmatpush.msra.mxu0 0.0
          %2621 = vmatpush.msra.mxu0 0.0
          %2622 = vmatpush.msra.mxu0 0.0
          %2623 = vmatpush.msra.mxu0 0.0
          %v2624 = vand.u32 %v1291, 4294901760
          %2625 = vmatpush.msra.mxu0 %v2624
          %v2626 = vand.u32 %v1290, 4294901760
          %2627 = vmatpush.msra.mxu0 %v2626
          %v2628 = vand.u32 %v1289, 4294901760
          %2629 = vmatpush.msra.mxu0 %v2628
          %v2630 = vand.u32 %v1288, 4294901760
          %2631 = vmatpush.msra.mxu0 %v2630
          %v2632 = vand.u32 %v2510, 4294901760
          %v2633 = vsub.f32 %v2510, %v2632
          %v2634 = vand.u32 %v2633, 4294901760
          %2635 = vmatmul.f32.gmra.mxu0 %v2634
          %v2636 = vpop.f32.mrf.mxu0
          %v2637 = vadd.f32 %v2610, %v2636
          %2638 = vdwg.mxu0
          %2639 = vmatpush.msra.mxu0 0.0
          %2640 = vmatpush.msra.mxu0 0.0
          %2641 = vmatpush.msra.mxu0 0.0
          %2642 = vmatpush.msra.mxu0 0.0
          %2643 = vmatpush.msra.mxu0 0.0
          %2644 = vmatpush.msra.mxu0 0.0
          %2645 = vmatpush.msra.mxu0 0.0
          %2646 = vmatpush.msra.mxu0 0.0
          %2647 = vmatpush.msra.mxu0 0.0
          %2648 = vmatpush.msra.mxu0 0.0
          %2649 = vmatpush.msra.mxu0 0.0
          %2650 = vmatpush.msra.mxu0 0.0
          %v2651 = vand.u32 %v1291, 4294901760
          %v2652 = vsub.f32 %v1291, %v2651
          %v2653 = vand.u32 %v2652, 4294901760
          %2654 = vmatpush.msra.mxu0 %v2653
          %v2655 = vand.u32 %v1290, 4294901760
          %v2656 = vsub.f32 %v1290, %v2655
          %v2657 = vand.u32 %v2656, 4294901760
          %2658 = vmatpush.msra.mxu0 %v2657
          %v2659 = vand.u32 %v1289, 4294901760
          %v2660 = vsub.f32 %v1289, %v2659
          %v2661 = vand.u32 %v2660, 4294901760
          %2662 = vmatpush.msra.mxu0 %v2661
          %v2663 = vand.u32 %v1288, 4294901760
          %v2664 = vsub.f32 %v1288, %v2663
          %v2665 = vand.u32 %v2664, 4294901760
          %2666 = vmatpush.msra.mxu0 %v2665
          %v2667 = vand.u32 %v2510, 4294901760
          %2668 = vmatmul.f32.gmra.mxu0 %v2667
          %v2669 = vpop.f32.mrf.mxu0
          %v2670 = vadd.f32 %v2637, %v2669
          %2671 = vdwg.mxu0
          %2672 = vmatpush.msra.mxu0 0.0
          %2673 = vmatpush.msra.mxu0 0.0
          %2674 = vmatpush.msra.mxu0 0.0
          %2675 = vmatpush.msra.mxu0 0.0
          %2676 = vmatpush.msra.mxu0 0.0
          %2677 = vmatpush.msra.mxu0 0.0
          %2678 = vmatpush.msra.mxu0 0.0
          %2679 = vmatpush.msra.mxu0 0.0
          %2680 = vmatpush.msra.mxu0 0.0
          %2681 = vmatpush.msra.mxu0 0.0
          %2682 = vmatpush.msra.mxu0 0.0
          %2683 = vmatpush.msra.mxu0 0.0
          %v2684 = vand.u32 %v1291, 4294901760
          %2685 = vmatpush.msra.mxu0 %v2684
          %v2686 = vand.u32 %v1290, 4294901760
          %2687 = vmatpush.msra.mxu0 %v2686
          %v2688 = vand.u32 %v1289, 4294901760
          %2689 = vmatpush.msra.mxu0 %v2688
          %v2690 = vand.u32 %v1288, 4294901760
          %2691 = vmatpush.msra.mxu0 %v2690
          %v2692 = vand.u32 %v2510, 4294901760
          %2693 = vmatmul.f32.gmra.mxu0 %v2692
          %v2694 = vpop.f32.mrf.mxu0
          %v2695 = vadd.f32 %v2670, %v2694
          %2696 = vdwg.mxu0
          %v2697 = vmul.f32 %v2695, %v1280
          %v2699 = vsel %vm1257, %v1282, 0
          %2701 = vmatpush.msra.mxu0 0.0
          %2702 = vmatpush.msra.mxu0 0.0
          %2703 = vmatpush.msra.mxu0 0.0
          %2704 = vmatpush.msra.mxu0 0.0
          %2705 = vmatpush.msra.mxu0 0.0
          %2706 = vmatpush.msra.mxu0 0.0
          %2707 = vmatpush.msra.mxu0 0.0
          %2708 = vmatpush.msra.mxu0 0.0
          %2709 = vmatpush.msra.mxu0 0.0
          %2710 = vmatpush.msra.mxu0 0.0
          %2711 = vmatpush.msra.mxu0 0.0
          %2712 = vmatpush.msra.mxu0 0.0
          %2713 = vmatpush.msra.mxu0 0.0
          %2714 = vmatpush.msra.mxu0 0.0
          %2715 = vmatpush.msra.mxu0 0.0
          %v2716 = vand.u32 %v2697, 4294901760
          %2717 = vmatpush.msra.mxu0 %v2716
          %v2718 = vand.u32 %v2699, 4294901760
          %v2719 = vsub.f32 %v2699, %v2718
          %v2720 = vand.u32 %v2719, 4294901760
          %v2721 = vsub.f32 %v2719, %v2720
          %v2722 = vand.u32 %v2721, 4294901760
          %2723 = vmatmul.f32.gmra.mxu0 %v2722
          %v2724 = vpop.f32.mrf.mxu0
          %v2725 = vadd.f32 0.0, %v2724
          %2726 = vdwg.mxu0
          %2727 = vmatpush.msra.mxu0 0.0
          %2728 = vmatpush.msra.mxu0 0.0
          %2729 = vmatpush.msra.mxu0 0.0
          %2730 = vmatpush.msra.mxu0 0.0
          %2731 = vmatpush.msra.mxu0 0.0
          %2732 = vmatpush.msra.mxu0 0.0
          %2733 = vmatpush.msra.mxu0 0.0
          %2734 = vmatpush.msra.mxu0 0.0
          %2735 = vmatpush.msra.mxu0 0.0
          %2736 = vmatpush.msra.mxu0 0.0
          %2737 = vmatpush.msra.mxu0 0.0
          %2738 = vmatpush.msra.mxu0 0.0
          %2739 = vmatpush.msra.mxu0 0.0
          %2740 = vmatpush.msra.mxu0 0.0
          %2741 = vmatpush.msra.mxu0 0.0
          %v2742 = vand.u32 %v2697, 4294901760
          %v2743 = vsub.f32 %v2697, %v2742
          %v2744 = vand.u32 %v2743, 4294901760
          %v2745 = vsub.f32 %v2743, %v2744
          %v2746 = vand.u32 %v2745, 4294901760
          %2747 = vmatpush.msra.mxu0 %v2746
          %v2748 = vand.u32 %v2699, 4294901760
          %2749 = vmatmul.f32.gmra.mxu0 %v2748
          %v2750 = vpop.f32.mrf.mxu0
          %v2751 = vadd.f32 %v2725, %v2750
          %2752 = vdwg.mxu0
          %2753 = vmatpush.msra.mxu0 0.0
          %2754 = vmatpush.msra.mxu0 0.0
          %2755 = vmatpush.msra.mxu0 0.0
          %2756 = vmatpush.msra.mxu0 0.0
          %2757 = vmatpush.msra.mxu0 0.0
          %2758 = vmatpush.msra.mxu0 0.0
          %2759 = vmatpush.msra.mxu0 0.0
          %2760 = vmatpush.msra.mxu0 0.0
          %2761 = vmatpush.msra.mxu0 0.0
          %2762 = vmatpush.msra.mxu0 0.0
          %2763 = vmatpush.msra.mxu0 0.0
          %2764 = vmatpush.msra.mxu0 0.0
          %2765 = vmatpush.msra.mxu0 0.0
          %2766 = vmatpush.msra.mxu0 0.0
          %2767 = vmatpush.msra.mxu0 0.0
          %v2768 = vand.u32 %v2697, 4294901760
          %v2769 = vsub.f32 %v2697, %v2768
          %2770 = vmatpush.msra.mxu0 %v2769
          %v2771 = vand.u32 %v2699, 4294901760
          %v2772 = vsub.f32 %v2699, %v2771
          %2773 = vmatmul.f32.gmra.mxu0 %v2772
          %v2774 = vpop.f32.mrf.mxu0
          %v2775 = vadd.f32 %v2751, %v2774
          %2776 = vdwg.mxu0
          %2777 = vmatpush.msra.mxu0 0.0
          %2778 = vmatpush.msra.mxu0 0.0
          %2779 = vmatpush.msra.mxu0 0.0
          %2780 = vmatpush.msra.mxu0 0.0
          %2781 = vmatpush.msra.mxu0 0.0
          %2782 = vmatpush.msra.mxu0 0.0
          %2783 = vmatpush.msra.mxu0 0.0
          %2784 = vmatpush.msra.mxu0 0.0
          %2785 = vmatpush.msra.mxu0 0.0
          %2786 = vmatpush.msra.mxu0 0.0
          %2787 = vmatpush.msra.mxu0 0.0
          %2788 = vmatpush.msra.mxu0 0.0
          %2789 = vmatpush.msra.mxu0 0.0
          %2790 = vmatpush.msra.mxu0 0.0
          %2791 = vmatpush.msra.mxu0 0.0
          %v2792 = vand.u32 %v2697, 4294901760
          %2793 = vmatpush.msra.mxu0 %v2792
          %v2794 = vand.u32 %v2699, 4294901760
          %v2795 = vsub.f32 %v2699, %v2794
          %v2796 = vand.u32 %v2795, 4294901760
          %2797 = vmatmul.f32.gmra.mxu0 %v2796
          %v2798 = vpop.f32.mrf.mxu0
          %v2799 = vadd.f32 %v2775, %v2798
          %2800 = vdwg.mxu0
          %2801 = vmatpush.msra.mxu0 0.0
          %2802 = vmatpush.msra.mxu0 0.0
          %2803 = vmatpush.msra.mxu0 0.0
          %2804 = vmatpush.msra.mxu0 0.0
          %2805 = vmatpush.msra.mxu0 0.0
          %2806 = vmatpush.msra.mxu0 0.0
          %2807 = vmatpush.msra.mxu0 0.0
          %2808 = vmatpush.msra.mxu0 0.0
          %2809 = vmatpush.msra.mxu0 0.0
          %2810 = vmatpush.msra.mxu0 0.0
          %2811 = vmatpush.msra.mxu0 0.0
          %2812 = vmatpush.msra.mxu0 0.0
          %2813 = vmatpush.msra.mxu0 0.0
          %2814 = vmatpush.msra.mxu0 0.0
          %2815 = vmatpush.msra.mxu0 0.0
          %v2816 = vand.u32 %v2697, 4294901760
          %v2817 = vsub.f32 %v2697, %v2816
          %v2818 = vand.u32 %v2817, 4294901760
          %2819 = vmatpush.msra.mxu0 %v2818
          %v2820 = vand.u32 %v2699, 4294901760
          %2821 = vmatmul.f32.gmra.mxu0 %v2820
          %v2822 = vpop.f32.mrf.mxu0
          %v2823 = vadd.f32 %v2799, %v2822
          %2824 = vdwg.mxu0
          %2825 = vmatpush.msra.mxu0 0.0
          %2826 = vmatpush.msra.mxu0 0.0
          %2827 = vmatpush.msra.mxu0 0.0
          %2828 = vmatpush.msra.mxu0 0.0
          %2829 = vmatpush.msra.mxu0 0.0
          %2830 = vmatpush.msra.mxu0 0.0
          %2831 = vmatpush.msra.mxu0 0.0
          %2832 = vmatpush.msra.mxu0 0.0
          %2833 = vmatpush.msra.mxu0 0.0
          %2834 = vmatpush.msra.mxu0 0.0
          %2835 = vmatpush.msra.mxu0 0.0
          %2836 = vmatpush.msra.mxu0 0.0
          %2837 = vmatpush.msra.mxu0 0.0
          %2838 = vmatpush.msra.mxu0 0.0
          %2839 = vmatpush.msra.mxu0 0.0
          %v2840 = vand.u32 %v2697, 4294901760
          %2841 = vmatpush.msra.mxu0 %v2840
          %v2842 = vand.u32 %v2699, 4294901760
          %2843 = vmatmul.f32.gmra.mxu0 %v2842
          %v2844 = vpop.f32.mrf.mxu0
          %v2845 = vadd.f32 %v2823, %v2844
          %2846 = vdwg.mxu0
          %v2847 = vsel %vm1367, %v2845, 0.0
          %2848 = vadd.xlane.f32.xlu0 %v2847
          %v2849 = vpop.xlane.xlu0 %2848
          %v2850 = vrcp.pop 32.0
          %v2851 = vmul.f32 32.0, %v2850
          %v2852 = vsub.f32 1.0, %v2851
          %v2853 = vmul.f32 %v2850, %v2852
          %v2854 = vadd.f32 %v2850, %v2853
          %vm2855 = vweird.f32 %v2850
          %v2856 = vsel %vm2855, %v2850, %v2854
          %v2857 = vmul.f32 %v2849, %v2856
          %v2858 = vsub.f32 %v2845, %v2857
          %v2859 = vmul.f32 %v2858, %v2858
          %v2860 = vsel %vm1367, %v2859, 0.0
          %2861 = vadd.xlane.f32.xlu0 %v2860
          %v2862 = vpop.xlane.xlu0 %2861
          %v2863 = vmul.f32 %v2862, %v2856
          %v2864 = vadd.f32 %v2863, 1e-05
          %v2865 = vrsqrt.pop %v2864
          %v2866 = vmul.f32 %v2865, %v2864
          %v2867 = vmul.f32 %v2866, %v2865
          %v2868 = vmul.f32 0.5, %v2867
          %v2869 = vsub.f32 1.5, %v2868
          %v2870 = vmul.f32 %v2865, %v2869
          %v2871 = vmul.f32 %v2864, %v2870
          %vm2872 = vcmp.eq.f32.partialorder %v2864, inf
          %v2873 = vsel %vm2872, %v2864, %v2871
          %vm2874 = vcmp.eq.f32.partialorder %v2864, 0.0
          %v2875 = vand.u32 %v2864, 2147483648
          %v2876 = vsel %vm2874, %v2875, %v2873
          %v2877 = vrcp.pop %v2876
          %v2878 = vmul.f32 %v2876, %v2877
          %v2879 = vsub.f32 1.0, %v2878
          %v2880 = vmul.f32 %v2877, %v2879
          %v2881 = vadd.f32 %v2877, %v2880
          %vm2882 = vweird.f32 %v2876
          %vm2883 = vweird.f32 %v2877
          %vm2884 = vmor %vm2882, %vm2883
          %v2885 = vsel %vm2884, %v2877, %v2881
          %v2886 = vand.u32 2147483647, %v2876
          %vm2887 = vcmp.eq.f32.partialorder %v2886, 8.507059e+37
          %v2888 = vand.u32 %v2876, 2147483648
          %v2889 = vor.u32 1.1754944e-38, %v2888
          %v2890 = vsel %vm2887, %v2889, %v2885
          %v2891 = vmul.f32 %v2858, %v2890
          %v2893 = vperm.slane %v1293, 0
          %v2895 = vmul.f32 %v2891, %v2893
          %v2897 = vperm.slane %v1294, 0
          %v2899 = vadd.f32 %v2895, %v2897
          %v2900 = vadd.f32 %v2294, %v2899
          %v2901 = vadd.f32 %v2293, %v2900
          %v2902 = vsel %vm1367, %v2901, 0.0
          %2903 = vadd.xlane.f32.xlu0 %v2902
          %v2904 = vpop.xlane.xlu0 %2903
          %v2905 = vmul.f32 %v2904, %v2856
          %v2906 = vsub.f32 %v2901, %v2905
          %v2907 = vmul.f32 %v2906, %v2906
          %v2908 = vsel %vm1367, %v2907, 0.0
          %2909 = vadd.xlane.f32.xlu0 %v2908
          %v2910 = vpop.xlane.xlu0 %2909
          %v2911 = vmul.f32 %v2910, %v2856
          %v2912 = vadd.f32 %v2911, 1e-05
          %v2913 = vrsqrt.pop %v2912
          %v2914 = vmul.f32 %v2913, %v2912
          %v2915 = vmul.f32 %v2914, %v2913
          %v2916 = vmul.f32 0.5, %v2915
          %v2917 = vsub.f32 1.5, %v2916
          %v2918 = vmul.f32 %v2913, %v2917
          %v2919 = vmul.f32 %v2912, %v2918
          %vm2920 = vcmp.eq.f32.partialorder %v2912, inf
          %v2921 = vsel %vm2920, %v2912, %v2919
          %vm2922 = vcmp.eq.f32.partialorder %v2912, 0.0
          %v2923 = vand.u32 %v2912, 2147483648
          %v2924 = vsel %vm2922, %v2923, %v2921
          %v2925 = vrcp.pop %v2924
          %v2926 = vmul.f32 %v2924, %v2925
          %v2927 = vsub.f32 1.0, %v2926
          %v2928 = vmul.f32 %v2925, %v2927
          %v2929 = vadd.f32 %v2925, %v2928
          %vm2930 = vweird.f32 %v2924
          %vm2931 = vweird.f32 %v2925
          %vm2932 = vmor %vm2930, %vm2931
          %v2933 = vsel %vm2932, %v2925, %v2929
          %v2934 = vand.u32 2147483647, %v2924
          %vm2935 = vcmp.eq.f32.partialorder %v2934, 8.507059e+37
          %v2936 = vand.u32 %v2924, 2147483648
          %v2937 = vor.u32 1.1754944e-38, %v2936
          %v2938 = vsel %vm2935, %v2937, %v2933
          %v2939 = vmul.f32 %v2906, %v2938
          %v2941 = vperm.slane %v1351, 0
          %v2943 = vmul.f32 %v2939, %v2941
          %v2945 = vperm.slane %v1353, 0
          %v2947 = vadd.f32 %v2943, %v2945
          %v2948 = vmul.f32 %v2947, %v1280
        $region141: #{tpu_custom_call.1} parent=135 // loop_footer
          %s1300 = sadd.s32 1, %s1296
        $region142: #{tpu_custom_call.1} parent=135 // loop_footer_branch
          %1295 = sbr.rel target = $region138
        $region143: #{tpu_custom_call.1} parent=135 // loop_exit
          _
        %vm2949 = vcmask 261120
        %2950 = vst.msk [vmem:[%s1045] sm:$0xff] %vm2949, %v1301
        %v2951 = vadd.f32 %v1244, 1e-08
        %v2952 = vrsqrt.pop %v2951
        %v2953 = vmul.f32 %v2952, %v2951
        %v2954 = vmul.f32 %v2953, %v2952
        %v2955 = vmul.f32 0.5, %v2954
        %v2956 = vsub.f32 1.5, %v2955
        %v2957 = vmul.f32 %v2952, %v2956
        %v2958 = vmul.f32 %v2951, %v2957
        %vm2959 = vcmp.eq.f32.partialorder %v2951, inf
        %v2960 = vsel %vm2959, %v2951, %v2958
        %vm2961 = vcmp.eq.f32.partialorder %v2951, 0.0
        %v2962 = vand.u32 %v2951, 2147483648
        %v2963 = vsel %vm2961, %v2962, %v2960
        %v2964 = vadd.f32 %v2963, 1.0
        %v2965 = vmul.f32 %v2964, %v2951
        %v2966 = vrcp.pop %v2965
        %v2967 = vmul.f32 %v2965, %v2966
        %v2968 = vsub.f32 1.0, %v2967
        %v2969 = vmul.f32 %v2966, %v2968
        %v2970 = vadd.f32 %v2966, %v2969
        %vm2971 = vweird.f32 %v2965
        %vm2972 = vweird.f32 %v2966
        %vm2973 = vmor %vm2971, %vm2972
        %v2974 = vsel %vm2973, %v2966, %v2970
        %v2975 = vand.u32 2147483647, %v2965
        %vm2976 = vcmp.eq.f32.partialorder %v2975, 8.507059e+37
        %v2977 = vand.u32 %v2965, 2147483648
        %v2978 = vor.u32 1.1754944e-38, %v2977
        %v2979 = vsel %vm2976, %v2978, %v2974
        %v2980 = vmul.f32 %v1103, %v2979
        %v2981 = vmul.f32 %v2980, %v1226
        %v2982 = vsel %vm1257, %v2981, 0.0
        %2983 = vadd.xlane.f32.xlu0 %v2982
        %v2984 = vpop.xlane.xlu0 %2983
        %v2985 = vsub.f32 %v1101, %v2984
        %v2986 = vmul.f32 %v2985, %v1126
        %vm2987 = vcmask 7168
        %2988 = vst.msk [vmem:[%s1098] sm:$0xff] %vm2987, %v2986
        %v2989 = vmul.f32 %v2980, %v1234
        %v2990 = vsel %vm1257, %v2989, 0.0
        %2991 = vadd.xlane.f32.xlu0 %v2990
        %v2992 = vpop.xlane.xlu0 %2991
        %v2993 = vsub.f32 %v1101, %v2992
        %2994 = vrot.lane.b32.xlu0 %v1126, 1
        %v2995 = vpop.permute.xlu0 %2994
        %v2997 = vmul.f32 %v2993, %v2995
        %vm2998 = vcmask 15368
        %2999 = vst.msk [vmem:[%s1098] sm:$0xff] %vm2998, %v2997
        %v3000 = vmul.f32 %v2980, %v1242
        %v3001 = vsel %vm1257, %v3000, 0.0
        %3002 = vadd.xlane.f32.xlu0 %v3001
        %v3003 = vpop.xlane.xlu0 %3002
        %v3004 = vsub.f32 %v1101, %v3003
        %3005 = vrot.lane.b32.xlu0 %v1126, 2
        %v3006 = vpop.permute.xlu0 %3005
        %v3008 = vmul.f32 %v3004, %v3006
        %vm3009 = vcmask 23568
        %3010 = vst.msk [vmem:[%s1098] sm:$0xff] %vm3009, %v3008
        %s3011 = sand.u32 %s743, 1
        %s3012 = scalar_lea.sflag [#allocation3], %s3011
        %s3013 = sand.u32 %s743, 1
        %s3014 = smul.addr %s3013, 8
        %s3015 = scalar_lea.vmem [#allocation2], %s3014
        %p3016 = scmp.lt.s32.totalorder %s76, 1
        %s3017 = scalar_select %p3016, %s76, 1
        %s3018 = smul.addr %s3017, 8
        %s3019 = scalar_lea.vmem %s61, %s3018
        // Predicated region
        $region144: #{tpu_custom_call.1} parent=135 // pred_check
          %p3020 = pneg %p753
        $region145: #{tpu_custom_call.1} parent=135 // pred_check_branch
          %3022 = sbr.rel (%p3020) target = $region147
        $region146: #{tpu_custom_call.1} parent=135 // pred_region
          %3024 = vsyncadd %s3012, 0
          %s3025 = smul.addr %s76, 8
          %s3026 = scalar_lea.hbm %s59, %s3025
          %s3028 = sshll.u32 %s3015, 4
          %s3029 = int_to_ptr.vmem [resolvable:$true] %s3028
          %s3030 = sshll.u32 %s3026, 4
          %s3031 = int_to_ptr.hbm [resolvable:$true] %s3030
          %3033 = dma.vmem_to_hbm [thread:$0]  %s3029, 128, %s3031, %s3012
        $region147: #{tpu_custom_call.1} parent=135 // pred_fallthru
          _
        // Predicated region
        $region148: #{tpu_custom_call.1} parent=135 // pred_check
          %p3034 = pneg %p779
        $region149: #{tpu_custom_call.1} parent=135 // pred_check_branch
          %3036 = sbr.rel (%p3034) target = $region151
        $region150: #{tpu_custom_call.1} parent=135 // pred_region
          _
        $region151: #{tpu_custom_call.1} parent=135 // pred_fallthru
          _
      $region136: #{tpu_custom_call.1} parent=5 // pred_fallthru
        _
      %p3037 = scmp.le.s32.totalorder 2, %s71
      // Predicated region
      $region152: #{tpu_custom_call.1} parent=5 // pred_check
        %p3038 = pneg %p3037
      $region153: #{tpu_custom_call.1} parent=5 // pred_check_branch
        %3040 = sbr.rel (%p3038) target = $region155
      $region154: #{tpu_custom_call.1} parent=5 // pred_region
        %s3041 = ssub.s32 %s71, 2
        // Predicated region
        $region156: #{tpu_custom_call.1} parent=154 // pred_check
          %p3042 = pneg %p759
        $region157: #{tpu_custom_call.1} parent=154 // pred_check_branch
          %3044 = sbr.rel (%p3042) target = $region159
        $region158: #{tpu_custom_call.1} parent=154 // pred_region
          %s3045 = sand.u32 %s744, 1
          %s3046 = scalar_lea.sflag [#allocation3], %s3045
          %s3047 = sand.u32 %s744, 1
          %s3048 = smul.addr %s3047, 8
          %s3049 = scalar_lea.vmem [#allocation2], %s3048
          %3051 = dma.done %s3046, 128
        $region159: #{tpu_custom_call.1} parent=154 // pred_fallthru
          _
        // Predicated region
        $region160: #{tpu_custom_call.1} parent=154 // pred_check
          %p3052 = pneg %p785
        $region161: #{tpu_custom_call.1} parent=154 // pred_check_branch
          %3054 = sbr.rel (%p3052) target = $region163
        $region162: #{tpu_custom_call.1} parent=154 // pred_region
          %p3055 = scmp.lt.s32.totalorder %s77, 1
          %s3056 = scalar_select %p3055, %s77, 1
          %s3057 = smul.addr %s3056, 8
          %s3058 = scalar_lea.vmem %s61, %s3057
        $region163: #{tpu_custom_call.1} parent=154 // pred_fallthru
          _
      $region155: #{tpu_custom_call.1} parent=5 // pred_fallthru
        _
    $region6: #{tpu_custom_call.1} parent=1 // loop_footer
      %s75 = sadd.s32 1, %s71
    $region7: #{tpu_custom_call.1} parent=1 // loop_footer_branch
      %70 = sbr.rel target = $region3
    $region8: #{tpu_custom_call.1} parent=1 // loop_exit
      _
    %3059 = vsyncpa [#allocation3], 1
    %s3060 = scalar_lea.sflag [#allocation3], 1
    %3061 = vsyncpa %s3060, 1

</llo_original>
